<compile_context>
chip_gen: v5e
topology: v5e:2x2
jax: 0.10.0
libtpu: 0.0.40
codegen_flags: <defaults>
</compile_context>

<pallas_src>
import functools

import jax
import jax.numpy as jnp
from jax.experimental import pallas as pl
from jax.experimental.pallas import tpu as pltpu


def _linear_attention_kernel(x_ref, wq_ref, wk_ref, wv_ref, wout_ref,
                             bout_ref, gamma_ref, beta_ref, bd_scale_ref,
                             o_ref, *, heads, dim_head, eps):
    """One block = Bt batch samples in channels-major (C, N) layout.

    x_ref:        (Bt, C, N)  f32  activations read directly from NCHW
    wq/wk/wv_ref: (hid, C)    bf16 to_qkv 1x1-conv weight, split per projection
    wout_ref:     (C, hid)    bf16 to_out 1x1-conv weight
    bout_ref:     (C, 1)      f32  to_out bias
    gamma_ref:    (C, 1)      f32  GroupNorm(1, C) weight
    beta_ref:     (C, 1)      f32  GroupNorm(1, C) bias
    bd_scale_ref: (hid, hid)  f32  block-diagonal head mask * q scale
    o_ref:        (Bt, C, N)  output (x dtype), lane-dense store
    """
    f32 = jnp.float32
    bf16 = jnp.bfloat16
    hid = heads * dim_head
    bt = x_ref.shape[0]
    n = x_ref.shape[2]

    wq = wq_ref[...]
    wk = wk_ref[...]
    wv = wv_ref[...]
    wout = wout_ref[...]
    bout = bout_ref[...]
    gamma = gamma_ref[...]
    beta = beta_ref[...]
    bd_scale = bd_scale_ref[...]

    def one_sample(b, carry):
        x_b = x_ref[b].astype(bf16)                                # (C, N)

        # to_qkv 1x1 conv: three standard (hid, C) @ (C, N) MXU matmuls.
        q = jnp.dot(wq, x_b, preferred_element_type=f32)           # (hid, N)
        k = jnp.dot(wk, x_b, preferred_element_type=f32)           # (hid, N)
        v = jnp.dot(wv, x_b, preferred_element_type=f32)           # (hid, N)

        # ---- q softmax over dim_head (per head, per position) ----
        # Exact per-head max (q_den >= 1, no underflow/NaN edge case).
        q4 = q.reshape(heads, dim_head, n)
        q4 = q4 - jnp.max(q4, axis=1, keepdims=True)
        q_exp4 = jnp.exp(q4)                                       # (h, dh, N)
        q_den4 = jnp.sum(q_exp4, axis=1, keepdims=True)            # (h, 1, N)
        q_exp = q_exp4.reshape(hid, n)

        # ---- k softmax over positions (per head-channel) ----
        k = k - jnp.max(k, axis=-1, keepdims=True)
        k_exp = jnp.exp(k)
        k_soft = k_exp * pl.reciprocal(
            jnp.sum(k_exp, axis=-1, keepdims=True), approx=True)   # (hid, N)

        # ---- attention core ----
        # ctx^T[e, d] = sum_n v[e, n] * k_soft[d, n]; keep only the per-head
        # diagonal 32x32 blocks, post-softmax q scale folded into the mask.
        ctx_t = jax.lax.dot_general(
            v.astype(bf16), k_soft.astype(bf16),
            (((1,), (1,)), ((), ())),
            preferred_element_type=f32)                             # (hid, hid)
        ctx_t = (ctx_t * bd_scale).astype(bf16)

        # out_un[e, n] = sum_d ctx^T[e, d] * q_exp[d, n]  (standard matmul),
        # then deferred per-head softmax normalisation.
        out_un = jnp.dot(ctx_t, q_exp.astype(bf16),
                         preferred_element_type=f32)                # (hid, N)
        inv_den = pl.reciprocal(q_den4, approx=True)                # (h, 1, N)
        attn = (out_un.reshape(heads, dim_head, n) * inv_den).reshape(hid, n)

        # ---- to_out: 1x1 conv + bias ----
        y = jnp.dot(wout, attn.astype(bf16),
                    preferred_element_type=f32) + bout              # (C, N)

        # ---- GroupNorm(1, C): two-pass statistics over the whole sample ----
        cnt = y.shape[0] * y.shape[1]
        mean = jnp.sum(y) / cnt
        yc = y - mean
        var = jnp.sum(yc * yc) / cnt
        inv_std = jax.lax.rsqrt(var + eps)
        o_ref[b] = (yc * (gamma * inv_std) + beta).astype(o_ref.dtype)
        return carry

    jax.lax.fori_loop(0, bt, one_sample, 0, unroll=True)


def _per_sample_live_bytes(C, N, hid):
    f4, b2 = 4, 2
    t = C * N * (b2 + 3 * f4)          # x_b (bf16), y, centred, normalised
    t += 8 * hid * N * f4              # q/k/v, exps, k_soft, out_un, attn
    t += 3 * hid * N * b2              # bf16 matmul-operand casts
    t += 2 * hid * hid * (f4 + b2)     # ctx_t (f32 + bf16)
    return t


def _weight_bytes(C, hid):
    return 4 * hid * C * 2 + 3 * C * 4 + hid * hid * 4


def _choose_bt_and_vmem(B, C, N, hid, max_bt):
    try:
        capacity = int(pltpu.get_tpu_info().vmem_capacity_bytes)
    except Exception:                       # defensive fallback
        capacity = 64 * 1024 * 1024         # v7x per-core VMEM (most restrictive)
    usable = int(capacity * 0.85)           # headroom for compiler scratch/buffers

    weights = _weight_bytes(C, hid)
    live = 2 * _per_sample_live_bytes(C, N, hid)   # unrolled-loop overlap headroom

    def estimate(bt):
        io = 2 * 2 * bt * C * N * 4         # double-buffered f32 x + out blocks
        return io + weights + live

    divisors = [d for d in range(1, min(B, max_bt) + 1) if B % d == 0]
    fitting = [d for d in divisors if estimate(d) <= usable] or [1]
    # Prefer keeping >= 4 grid steps (DMA pipelining + 2-TC sharding on v7x)
    # when B is large enough; otherwise maximise the per-step batch since the
    # per-grid-step overhead dominates at small B.
    with_steps = [d for d in fitting if B // d >= 4]
    bt = max(with_steps) if with_steps else max(fitting)

    vmem_limit = int(estimate(bt) * 1.5) + (4 << 20)
    vmem_limit = min(max(vmem_limit, 16 << 20), usable)
    return bt, vmem_limit


def linear_attention(x_nchw, params, *, heads=4, dim_head=32, eps=1e-5,
                     max_batch_block=8):
    B, C, H, W = x_nchw.shape
    N = H * W
    hid = heads * dim_head
    scale = dim_head ** (-0.5)

    # NCHW -> (B, C, N) is a free, contiguous reshape (no HBM layout pass).
    x_3d = x_nchw.reshape(B, C, N)

    wqkv = params["w_qkv"].reshape(3 * hid, C)
    wq = wqkv[:hid].astype(jnp.bfloat16)
    wk = wqkv[hid:2 * hid].astype(jnp.bfloat16)
    wv = wqkv[2 * hid:].astype(jnp.bfloat16)
    wout = params["w_out"].reshape(C, hid).astype(jnp.bfloat16)
    bout = params["b_out"].reshape(C, 1).astype(jnp.float32)
    gamma = params["gn_weight"].reshape(C, 1).astype(jnp.float32)
    beta = params["gn_bias"].reshape(C, 1).astype(jnp.float32)

    # Block-diagonal per-head mask with the post-softmax q scale folded in.
    head_id = jnp.arange(hid) // dim_head
    bd_scale = (head_id[:, None] == head_id[None, :]).astype(jnp.float32) * scale

    Bt, vmem_limit = _choose_bt_and_vmem(B, C, N, hid, max_batch_block)
    num_steps = B // Bt

    kernel = functools.partial(_linear_attention_kernel, heads=heads,
                               dim_head=dim_head, eps=eps)

    flops = int(2 * B * N * hid * (4 * C + 2 * hid))
    transcendentals = int(3 * B * N * hid)
    bytes_accessed = int(2 * B * C * N * 4 + _weight_bytes(C, hid))

    const2 = lambda i: (0, 0)
    out_3d = pl.pallas_call(
        kernel,
        out_shape=jax.ShapeDtypeStruct((B, C, N), x_nchw.dtype),
        grid_spec=pl.GridSpec(
            grid=(num_steps,),
            in_specs=[
                pl.BlockSpec((Bt, C, N), lambda i: (i, 0, 0)),
                pl.BlockSpec((hid, C), const2),
                pl.BlockSpec((hid, C), const2),
                pl.BlockSpec((hid, C), const2),
                pl.BlockSpec((C, hid), const2),
                pl.BlockSpec((C, 1), const2),
                pl.BlockSpec((C, 1), const2),
                pl.BlockSpec((C, 1), const2),
                pl.BlockSpec((hid, hid), const2),
            ],
            out_specs=pl.BlockSpec((Bt, C, N), lambda i: (i, 0, 0)),
        ),
        compiler_params=pltpu.CompilerParams(
            dimension_semantics=("parallel",),
            vmem_limit_bytes=vmem_limit),
        cost_estimate=pl.CostEstimate(
            flops=flops, transcendentals=transcendentals,
            bytes_accessed=bytes_accessed),
    )(x_3d, wq, wk, wv, wout, bout, gamma, beta, bd_scale)

    # (B, C, N) -> NCHW is a free reshape.
    return out_3d.reshape(B, C, H, W)


def linear_attention_ref(x, params, *, heads=4, dim_head=32, eps=1e-5):
    """Pure-JAX f32 reference mirroring the PyTorch forward."""
    B, C, H, W = x.shape
    hidden = heads * dim_head
    scale = dim_head ** (-0.5)

    wqkv = params["w_qkv"].reshape(3 * hidden, C)
    qkv = jnp.einsum("bchw,oc->bohw", x, wqkv)
    q, k, v = jnp.split(qkv, 3, axis=1)
    q, k, v = (t.reshape(B, heads, dim_head, H * W) for t in (q, k, v))

    q = jax.nn.softmax(q, axis=-2) * scale
    k = jax.nn.softmax(k, axis=-1)
    context = jnp.einsum("bhdn,bhen->bhde", k, v)
    out = jnp.einsum("bhde,bhdn->bhen", context, q)
    out = out.reshape(B, hidden, H, W)

    wout = params["w_out"].reshape(C, hidden)
    y = jnp.einsum("bihw,oi->bohw", out, wout) + params["b_out"].reshape(1, C, 1, 1)

    mean = jnp.mean(y, axis=(1, 2, 3), keepdims=True)
    var = jnp.mean((y - mean) ** 2, axis=(1, 2, 3), keepdims=True)
    yn = (y - mean) / jnp.sqrt(var + eps)
    return yn * params["gn_weight"].reshape(1, C, 1, 1) + \
        params["gn_bias"].reshape(1, C, 1, 1)


if __name__ == "__main__":
    B, DIM, H, W = 2, 64, 16, 16
    HEADS, DIM_HEAD = 4, 32
    HIDDEN = HEADS * DIM_HEAD

    key = jax.random.PRNGKey(0)
    kx, kq, ko, kb = jax.random.split(key, 4)

    x = jax.random.normal(kx, (B, DIM, H, W), dtype=jnp.float32)
    params = {
        # nn.Conv2d(dim, hidden*3, 1, bias=False) -> (3*hidden, dim, 1, 1)
        "w_qkv": jax.random.normal(kq, (3 * HIDDEN, DIM, 1, 1), jnp.float32) * 0.05,
        # nn.Conv2d(hidden, dim, 1) -> (dim, hidden, 1, 1) + bias (dim,)
        "w_out": jax.random.normal(ko, (DIM, HIDDEN, 1, 1), jnp.float32) * 0.05,
        "b_out": jax.random.normal(kb, (DIM,), jnp.float32) * 0.05,
        # nn.GroupNorm(1, dim) default init: weight=1, bias=0
        "gn_weight": jnp.ones((DIM,), jnp.float32),
        "gn_bias": jnp.zeros((DIM,), jnp.float32),
    }

    out = linear_attention(x, params, heads=HEADS, dim_head=DIM_HEAD)
    out = jax.block_until_ready(out)

    ref = linear_attention_ref(x, params, heads=HEADS, dim_head=DIM_HEAD)
    assert out.shape == (B, DIM, H, W)
    # Tolerance covers bf16 MXU inputs + approx (2^-12) reciprocals vs the
    # pure-f32 reference; GroupNorm output is O(1).
    assert jnp.allclose(out, ref, rtol=5e-2, atol=5e-2), \
        f"max abs err {jnp.max(jnp.abs(out - ref))}"

    print("KERNEL_OK")
</pallas_src>

<mosaic_0001>
module attributes {stable_mosaic.version = 11 : i64} {
  func.func @_linear_attention_kernel(%arg0: i32, %arg1: memref<2x64x256xf32, #tpu.memory_space<vmem>>, %arg2: memref<128x64xbf16, #tpu.memory_space<vmem>>, %arg3: memref<128x64xbf16, #tpu.memory_space<vmem>>, %arg4: memref<128x64xbf16, #tpu.memory_space<vmem>>, %arg5: memref<64x128xbf16, #tpu.memory_space<vmem>>, %arg6: memref<64x1xf32, #tpu.memory_space<vmem>>, %arg7: memref<64x1xf32, #tpu.memory_space<vmem>>, %arg8: memref<64x1xf32, #tpu.memory_space<vmem>>, %arg9: memref<128x128xf32, #tpu.memory_space<vmem>>, %arg10: memref<2x64x256xf32, #tpu.memory_space<vmem>>) attributes {dimension_semantics = [#tpu.dimension_semantics<parallel>], iteration_bounds = array<i64: 1>, scalar_prefetch = 0 : i64, scratch_operands = 0 : i64, tpu.core_type = #tpu.core_type<tc>, window_params = [{transform_indices = @transform_0, window_bounds = array<i64: 2, 64, 256>}, {pipeline_mode = #tpu.pipeline_mode<synchronous>, transform_indices = @transform_1, window_bounds = array<i64: 128, 64>}, {pipeline_mode = #tpu.pipeline_mode<synchronous>, transform_indices = @transform_2, window_bounds = array<i64: 128, 64>}, {pipeline_mode = #tpu.pipeline_mode<synchronous>, transform_indices = @transform_3, window_bounds = array<i64: 128, 64>}, {pipeline_mode = #tpu.pipeline_mode<synchronous>, transform_indices = @transform_4, window_bounds = array<i64: 64, 128>}, {pipeline_mode = #tpu.pipeline_mode<synchronous>, transform_indices = @transform_5, window_bounds = array<i64: 64, 1>}, {pipeline_mode = #tpu.pipeline_mode<synchronous>, transform_indices = @transform_6, window_bounds = array<i64: 64, 1>}, {pipeline_mode = #tpu.pipeline_mode<synchronous>, transform_indices = @transform_7, window_bounds = array<i64: 64, 1>}, {pipeline_mode = #tpu.pipeline_mode<synchronous>, transform_indices = @transform_8, window_bounds = array<i64: 128, 128>}, {transform_indices = @transform_9, window_bounds = array<i64: 2, 64, 256>}]} {
    %c0 = arith.constant 0 : index
    %c0_0 = arith.constant 0 : index
    %0 = vector.load %arg2[%c0, %c0_0] : memref<128x64xbf16, #tpu.memory_space<vmem>>, vector<128x64xbf16>
    %c0_1 = arith.constant 0 : index
    %c0_2 = arith.constant 0 : index
    %1 = vector.load %arg3[%c0_1, %c0_2] : memref<128x64xbf16, #tpu.memory_space<vmem>>, vector<128x64xbf16>
    %c0_3 = arith.constant 0 : index
    %c0_4 = arith.constant 0 : index
    %2 = vector.load %arg4[%c0_3, %c0_4] : memref<128x64xbf16, #tpu.memory_space<vmem>>, vector<128x64xbf16>
    %c0_5 = arith.constant 0 : index
    %c0_6 = arith.constant 0 : index
    %3 = vector.load %arg5[%c0_5, %c0_6] : memref<64x128xbf16, #tpu.memory_space<vmem>>, vector<64x128xbf16>
    %c0_7 = arith.constant 0 : index
    %c0_8 = arith.constant 0 : index
    %4 = vector.load %arg6[%c0_7, %c0_8] : memref<64x1xf32, #tpu.memory_space<vmem>>, vector<64x1xf32>
    %c0_9 = arith.constant 0 : index
    %c0_10 = arith.constant 0 : index
    %5 = vector.load %arg7[%c0_9, %c0_10] : memref<64x1xf32, #tpu.memory_space<vmem>>, vector<64x1xf32>
    %c0_11 = arith.constant 0 : index
    %c0_12 = arith.constant 0 : index
    %6 = vector.load %arg8[%c0_11, %c0_12] : memref<64x1xf32, #tpu.memory_space<vmem>>, vector<64x1xf32>
    %c0_13 = arith.constant 0 : index
    %c0_14 = arith.constant 0 : index
    %7 = vector.load %arg9[%c0_13, %c0_14] : memref<128x128xf32, #tpu.memory_space<vmem>>, vector<128x128xf32>
    %c0_i32 = arith.constant 0 : i32
    %8 = arith.index_cast %c0_i32 : i32 to index
    %c0_15 = arith.constant 0 : index
    %c0_16 = arith.constant 0 : index
    %9 = vector.load %arg1[%8, %c0_15, %c0_16] : memref<2x64x256xf32, #tpu.memory_space<vmem>>, vector<1x64x256xf32>
    %10 = vector.shape_cast %9 : vector<1x64x256xf32> to vector<64x256xf32>
    %11 = arith.truncf %10 : vector<64x256xf32> to vector<64x256xbf16>
    %cst = arith.constant dense<0.000000e+00> : vector<128x256xf32>
    %12 = tpu.matmul %0, %11, %cst {dimension_numbers = #tpu.dot_dimension_numbers<[1], [0], [0], [1], [0, 0, 1, 1], [], []>} : vector<128x64xbf16>, vector<64x256xbf16>, vector<128x256xf32> -> vector<128x256xf32>
    %cst_17 = arith.constant dense<0.000000e+00> : vector<128x256xf32>
    %13 = tpu.matmul %1, %11, %cst_17 {dimension_numbers = #tpu.dot_dimension_numbers<[1], [0], [0], [1], [0, 0, 1, 1], [], []>} : vector<128x64xbf16>, vector<64x256xbf16>, vector<128x256xf32> -> vector<128x256xf32>
    %cst_18 = arith.constant dense<0.000000e+00> : vector<128x256xf32>
    %14 = tpu.matmul %2, %11, %cst_18 {dimension_numbers = #tpu.dot_dimension_numbers<[1], [0], [0], [1], [0, 0, 1, 1], [], []>} : vector<128x64xbf16>, vector<64x256xbf16>, vector<128x256xf32> -> vector<128x256xf32>
    %15 = vector.shape_cast %12 : vector<128x256xf32> to vector<4x32x256xf32>
    %cst_19 = arith.constant dense<0xFF800000> : vector<4x256xf32>
    %16 = vector.multi_reduction <maximumf>, %15, %cst_19 [1] : vector<4x32x256xf32> to vector<4x256xf32>
    %17 = vector.shape_cast %16 : vector<4x256xf32> to vector<4x1x256xf32>
    %18 = vector.broadcast %17 : vector<4x1x256xf32> to vector<4x32x256xf32>
    %19 = arith.subf %15, %18 : vector<4x32x256xf32>
    %20 = math.exp %19 : vector<4x32x256xf32>
    %cst_20 = arith.constant dense<0.000000e+00> : vector<4x256xf32>
    %21 = vector.multi_reduction <add>, %20, %cst_20 [1] : vector<4x32x256xf32> to vector<4x256xf32>
    %22 = vector.shape_cast %21 : vector<4x256xf32> to vector<4x1x256xf32>
    %23 = vector.shape_cast %20 : vector<4x32x256xf32> to vector<128x256xf32>
    %cst_21 = arith.constant dense<0xFF800000> : vector<128xf32>
    %24 = vector.multi_reduction <maximumf>, %13, %cst_21 [1] : vector<128x256xf32> to vector<128xf32>
    %25 = vector.shape_cast %24 : vector<128xf32> to vector<128x1xf32>
    %26 = vector.broadcast %25 : vector<128x1xf32> to vector<128x256xf32>
    %27 = arith.subf %13, %26 : vector<128x256xf32>
    %28 = math.exp %27 : vector<128x256xf32>
    %cst_22 = arith.constant dense<0.000000e+00> : vector<128xf32>
    %29 = vector.multi_reduction <add>, %28, %cst_22 [1] : vector<128x256xf32> to vector<128xf32>
    %30 = vector.shape_cast %29 : vector<128xf32> to vector<128x1xf32>
    %31 = tpu.reciprocal %30 {approx = true} : vector<128x1xf32> -> vector<128x1xf32>
    %32 = vector.broadcast %31 : vector<128x1xf32> to vector<128x256xf32>
    %33 = arith.mulf %28, %32 : vector<128x256xf32>
    %34 = arith.truncf %14 : vector<128x256xf32> to vector<128x256xbf16>
    %35 = arith.truncf %33 : vector<128x256xf32> to vector<128x256xbf16>
    %cst_23 = arith.constant dense<0.000000e+00> : vector<128x128xf32>
    %36 = tpu.matmul %34, %35, %cst_23 {dimension_numbers = #tpu.dot_dimension_numbers<[1], [1], [0], [0], [0, 0, 1, 0], [], []>} : vector<128x256xbf16>, vector<128x256xbf16>, vector<128x128xf32> -> vector<128x128xf32>
    %37 = arith.mulf %36, %7 : vector<128x128xf32>
    %38 = arith.truncf %37 : vector<128x128xf32> to vector<128x128xbf16>
    %39 = arith.truncf %23 : vector<128x256xf32> to vector<128x256xbf16>
    %cst_24 = arith.constant dense<0.000000e+00> : vector<128x256xf32>
    %40 = tpu.matmul %38, %39, %cst_24 {dimension_numbers = #tpu.dot_dimension_numbers<[1], [0], [0], [1], [0, 0, 1, 1], [], []>} : vector<128x128xbf16>, vector<128x256xbf16>, vector<128x256xf32> -> vector<128x256xf32>
    %41 = tpu.reciprocal %22 {approx = true} : vector<4x1x256xf32> -> vector<4x1x256xf32>
    %42 = vector.shape_cast %40 : vector<128x256xf32> to vector<4x32x256xf32>
    %43 = vector.broadcast %41 : vector<4x1x256xf32> to vector<4x32x256xf32>
    %44 = arith.mulf %42, %43 : vector<4x32x256xf32>
    %45 = vector.shape_cast %44 : vector<4x32x256xf32> to vector<128x256xf32>
    %46 = arith.truncf %45 : vector<128x256xf32> to vector<128x256xbf16>
    %cst_25 = arith.constant dense<0.000000e+00> : vector<64x256xf32>
    %47 = tpu.matmul %3, %46, %cst_25 {dimension_numbers = #tpu.dot_dimension_numbers<[1], [0], [0], [1], [0, 0, 1, 1], [], []>} : vector<64x128xbf16>, vector<128x256xbf16>, vector<64x256xf32> -> vector<64x256xf32>
    %48 = vector.broadcast %4 : vector<64x1xf32> to vector<64x256xf32>
    %49 = arith.addf %47, %48 : vector<64x256xf32>
    %50 = vector.shape_cast %49 : vector<64x256xf32> to vector<1x64x256xf32>
    %cst_26 = arith.constant dense<0.000000e+00> : vector<1xf32>
    %51 = vector.multi_reduction <add>, %50, %cst_26 [1, 2] : vector<1x64x256xf32> to vector<1xf32>
    %52 = vector.shape_cast %51 : vector<1xf32> to vector<1x1x1xf32>
    %53 = vector.extract %52[0, 0, 0] : f32 from vector<1x1x1xf32>
    %cst_27 = arith.constant 1.638400e+04 : f32
    %54 = arith.divf %53, %cst_27 : f32
    %55 = vector.broadcast %54 : f32 to vector<64x256xf32>
    %56 = arith.subf %49, %55 : vector<64x256xf32>
    %57 = arith.mulf %56, %56 : vector<64x256xf32>
    %58 = vector.shape_cast %57 : vector<64x256xf32> to vector<1x64x256xf32>
    %cst_28 = arith.constant dense<0.000000e+00> : vector<1xf32>
    %59 = vector.multi_reduction <add>, %58, %cst_28 [1, 2] : vector<1x64x256xf32> to vector<1xf32>
    %60 = vector.shape_cast %59 : vector<1xf32> to vector<1x1x1xf32>
    %61 = vector.extract %60[0, 0, 0] : f32 from vector<1x1x1xf32>
    %cst_29 = arith.constant 1.638400e+04 : f32
    %62 = arith.divf %61, %cst_29 : f32
    %cst_30 = arith.constant 9.99999974E-6 : f32
    %63 = arith.addf %62, %cst_30 : f32
    %64 = math.rsqrt %63 : f32
    %65 = vector.broadcast %64 : f32 to vector<64x1xf32>
    %66 = arith.mulf %5, %65 : vector<64x1xf32>
    %67 = vector.broadcast %66 : vector<64x1xf32> to vector<64x256xf32>
    %68 = arith.mulf %56, %67 : vector<64x256xf32>
    %69 = vector.broadcast %6 : vector<64x1xf32> to vector<64x256xf32>
    %70 = arith.addf %68, %69 : vector<64x256xf32>
    %71 = arith.index_cast %c0_i32 : i32 to index
    %c0_31 = arith.constant 0 : index
    %c0_32 = arith.constant 0 : index
    %72 = vector.load %arg10[%71, %c0_31, %c0_32] : memref<2x64x256xf32, #tpu.memory_space<vmem>>, vector<1x64x256xf32>
    %73 = vector.shape_cast %72 : vector<1x64x256xf32> to vector<64x256xf32>
    %74 = vector.shape_cast %70 : vector<64x256xf32> to vector<1x64x256xf32>
    tpu.vector_store %arg10[%71, %c0_31, %c0_32], %74 {strides = array<i32>} : memref<2x64x256xf32, #tpu.memory_space<vmem>>, vector<1x64x256xf32>,
    %c1_i32 = arith.constant 1 : i32
    %75 = arith.index_cast %c1_i32 : i32 to index
    %c0_33 = arith.constant 0 : index
    %c0_34 = arith.constant 0 : index
    %76 = vector.load %arg1[%75, %c0_33, %c0_34] : memref<2x64x256xf32, #tpu.memory_space<vmem>>, vector<1x64x256xf32>
    %77 = vector.shape_cast %76 : vector<1x64x256xf32> to vector<64x256xf32>
    %78 = arith.truncf %77 : vector<64x256xf32> to vector<64x256xbf16>
    %cst_35 = arith.constant dense<0.000000e+00> : vector<128x256xf32>
    %79 = tpu.matmul %0, %78, %cst_35 {dimension_numbers = #tpu.dot_dimension_numbers<[1], [0], [0], [1], [0, 0, 1, 1], [], []>} : vector<128x64xbf16>, vector<64x256xbf16>, vector<128x256xf32> -> vector<128x256xf32>
    %cst_36 = arith.constant dense<0.000000e+00> : vector<128x256xf32>
    %80 = tpu.matmul %1, %78, %cst_36 {dimension_numbers = #tpu.dot_dimension_numbers<[1], [0], [0], [1], [0, 0, 1, 1], [], []>} : vector<128x64xbf16>, vector<64x256xbf16>, vector<128x256xf32> -> vector<128x256xf32>
    %cst_37 = arith.constant dense<0.000000e+00> : vector<128x256xf32>
    %81 = tpu.matmul %2, %78, %cst_37 {dimension_numbers = #tpu.dot_dimension_numbers<[1], [0], [0], [1], [0, 0, 1, 1], [], []>} : vector<128x64xbf16>, vector<64x256xbf16>, vector<128x256xf32> -> vector<128x256xf32>
    %82 = vector.shape_cast %79 : vector<128x256xf32> to vector<4x32x256xf32>
    %cst_38 = arith.constant dense<0xFF800000> : vector<4x256xf32>
    %83 = vector.multi_reduction <maximumf>, %82, %cst_38 [1] : vector<4x32x256xf32> to vector<4x256xf32>
    %84 = vector.shape_cast %83 : vector<4x256xf32> to vector<4x1x256xf32>
    %85 = vector.broadcast %84 : vector<4x1x256xf32> to vector<4x32x256xf32>
    %86 = arith.subf %82, %85 : vector<4x32x256xf32>
    %87 = math.exp %86 : vector<4x32x256xf32>
    %cst_39 = arith.constant dense<0.000000e+00> : vector<4x256xf32>
    %88 = vector.multi_reduction <add>, %87, %cst_39 [1] : vector<4x32x256xf32> to vector<4x256xf32>
    %89 = vector.shape_cast %88 : vector<4x256xf32> to vector<4x1x256xf32>
    %90 = vector.shape_cast %87 : vector<4x32x256xf32> to vector<128x256xf32>
    %cst_40 = arith.constant dense<0xFF800000> : vector<128xf32>
    %91 = vector.multi_reduction <maximumf>, %80, %cst_40 [1] : vector<128x256xf32> to vector<128xf32>
    %92 = vector.shape_cast %91 : vector<128xf32> to vector<128x1xf32>
    %93 = vector.broadcast %92 : vector<128x1xf32> to vector<128x256xf32>
    %94 = arith.subf %80, %93 : vector<128x256xf32>
    %95 = math.exp %94 : vector<128x256xf32>
    %cst_41 = arith.constant dense<0.000000e+00> : vector<128xf32>
    %96 = vector.multi_reduction <add>, %95, %cst_41 [1] : vector<128x256xf32> to vector<128xf32>
    %97 = vector.shape_cast %96 : vector<128xf32> to vector<128x1xf32>
    %98 = tpu.reciprocal %97 {approx = true} : vector<128x1xf32> -> vector<128x1xf32>
    %99 = vector.broadcast %98 : vector<128x1xf32> to vector<128x256xf32>
    %100 = arith.mulf %95, %99 : vector<128x256xf32>
    %101 = arith.truncf %81 : vector<128x256xf32> to vector<128x256xbf16>
    %102 = arith.truncf %100 : vector<128x256xf32> to vector<128x256xbf16>
    %cst_42 = arith.constant dense<0.000000e+00> : vector<128x128xf32>
    %103 = tpu.matmul %101, %102, %cst_42 {dimension_numbers = #tpu.dot_dimension_numbers<[1], [1], [0], [0], [0, 0, 1, 0], [], []>} : vector<128x256xbf16>, vector<128x256xbf16>, vector<128x128xf32> -> vector<128x128xf32>
    %104 = arith.mulf %103, %7 : vector<128x128xf32>
    %105 = arith.truncf %104 : vector<128x128xf32> to vector<128x128xbf16>
    %106 = arith.truncf %90 : vector<128x256xf32> to vector<128x256xbf16>
    %cst_43 = arith.constant dense<0.000000e+00> : vector<128x256xf32>
    %107 = tpu.matmul %105, %106, %cst_43 {dimension_numbers = #tpu.dot_dimension_numbers<[1], [0], [0], [1], [0, 0, 1, 1], [], []>} : vector<128x128xbf16>, vector<128x256xbf16>, vector<128x256xf32> -> vector<128x256xf32>
    %108 = tpu.reciprocal %89 {approx = true} : vector<4x1x256xf32> -> vector<4x1x256xf32>
    %109 = vector.shape_cast %107 : vector<128x256xf32> to vector<4x32x256xf32>
    %110 = vector.broadcast %108 : vector<4x1x256xf32> to vector<4x32x256xf32>
    %111 = arith.mulf %109, %110 : vector<4x32x256xf32>
    %112 = vector.shape_cast %111 : vector<4x32x256xf32> to vector<128x256xf32>
    %113 = arith.truncf %112 : vector<128x256xf32> to vector<128x256xbf16>
    %cst_44 = arith.constant dense<0.000000e+00> : vector<64x256xf32>
    %114 = tpu.matmul %3, %113, %cst_44 {dimension_numbers = #tpu.dot_dimension_numbers<[1], [0], [0], [1], [0, 0, 1, 1], [], []>} : vector<64x128xbf16>, vector<128x256xbf16>, vector<64x256xf32> -> vector<64x256xf32>
    %115 = vector.broadcast %4 : vector<64x1xf32> to vector<64x256xf32>
    %116 = arith.addf %114, %115 : vector<64x256xf32>
    %117 = vector.shape_cast %116 : vector<64x256xf32> to vector<1x64x256xf32>
    %cst_45 = arith.constant dense<0.000000e+00> : vector<1xf32>
    %118 = vector.multi_reduction <add>, %117, %cst_45 [1, 2] : vector<1x64x256xf32> to vector<1xf32>
    %119 = vector.shape_cast %118 : vector<1xf32> to vector<1x1x1xf32>
    %120 = vector.extract %119[0, 0, 0] : f32 from vector<1x1x1xf32>
    %cst_46 = arith.constant 1.638400e+04 : f32
    %121 = arith.divf %120, %cst_46 : f32
    %122 = vector.broadcast %121 : f32 to vector<64x256xf32>
    %123 = arith.subf %116, %122 : vector<64x256xf32>
    %124 = arith.mulf %123, %123 : vector<64x256xf32>
    %125 = vector.shape_cast %124 : vector<64x256xf32> to vector<1x64x256xf32>
    %cst_47 = arith.constant dense<0.000000e+00> : vector<1xf32>
    %126 = vector.multi_reduction <add>, %125, %cst_47 [1, 2] : vector<1x64x256xf32> to vector<1xf32>
    %127 = vector.shape_cast %126 : vector<1xf32> to vector<1x1x1xf32>
    %128 = vector.extract %127[0, 0, 0] : f32 from vector<1x1x1xf32>
    %cst_48 = arith.constant 1.638400e+04 : f32
    %129 = arith.divf %128, %cst_48 : f32
    %cst_49 = arith.constant 9.99999974E-6 : f32
    %130 = arith.addf %129, %cst_49 : f32
    %131 = math.rsqrt %130 : f32
    %132 = vector.broadcast %131 : f32 to vector<64x1xf32>
    %133 = arith.mulf %5, %132 : vector<64x1xf32>
    %134 = vector.broadcast %133 : vector<64x1xf32> to vector<64x256xf32>
    %135 = arith.mulf %123, %134 : vector<64x256xf32>
    %136 = vector.broadcast %6 : vector<64x1xf32> to vector<64x256xf32>
    %137 = arith.addf %135, %136 : vector<64x256xf32>
    %138 = arith.index_cast %c1_i32 : i32 to index
    %c0_50 = arith.constant 0 : index
    %c0_51 = arith.constant 0 : index
    %139 = vector.load %arg10[%138, %c0_50, %c0_51] : memref<2x64x256xf32, #tpu.memory_space<vmem>>, vector<1x64x256xf32>
    %140 = vector.shape_cast %139 : vector<1x64x256xf32> to vector<64x256xf32>
    %141 = vector.shape_cast %137 : vector<64x256xf32> to vector<1x64x256xf32>
    tpu.vector_store %arg10[%138, %c0_50, %c0_51], %141 {strides = array<i32>} : memref<2x64x256xf32, #tpu.memory_space<vmem>>, vector<1x64x256xf32>,
    %c2_i32 = arith.constant 2 : i32
    return
  }
  func.func @transform_0(%arg0: i32) -> (i32, i32, i32) {
    %c0_i32 = arith.constant 0 : i32
    %c0_i32_0 = arith.constant 0 : i32
    %c0_i32_1 = arith.constant 0 : i32
    return %arg0, %c0_i32, %c0_i32_0 : i32, i32, i32
  }
  func.func @transform_1(%arg0: i32) -> (i32, i32) {
    %c0_i32 = arith.constant 0 : i32
    %c0_i32_0 = arith.constant 0 : i32
    %c0_i32_1 = arith.constant 0 : i32
    return %c0_i32, %c0_i32_0 : i32, i32
  }
  func.func @transform_2(%arg0: i32) -> (i32, i32) {
    %c0_i32 = arith.constant 0 : i32
    %c0_i32_0 = arith.constant 0 : i32
    %c0_i32_1 = arith.constant 0 : i32
    return %c0_i32, %c0_i32_0 : i32, i32
  }
  func.func @transform_3(%arg0: i32) -> (i32, i32) {
    %c0_i32 = arith.constant 0 : i32
    %c0_i32_0 = arith.constant 0 : i32
    %c0_i32_1 = arith.constant 0 : i32
    return %c0_i32, %c0_i32_0 : i32, i32
  }
  func.func @transform_4(%arg0: i32) -> (i32, i32) {
    %c0_i32 = arith.constant 0 : i32
    %c0_i32_0 = arith.constant 0 : i32
    %c0_i32_1 = arith.constant 0 : i32
    return %c0_i32, %c0_i32_0 : i32, i32
  }
  func.func @transform_5(%arg0: i32) -> (i32, i32) {
    %c0_i32 = arith.constant 0 : i32
    %c0_i32_0 = arith.constant 0 : i32
    %c0_i32_1 = arith.constant 0 : i32
    return %c0_i32, %c0_i32_0 : i32, i32
  }
  func.func @transform_6(%arg0: i32) -> (i32, i32) {
    %c0_i32 = arith.constant 0 : i32
    %c0_i32_0 = arith.constant 0 : i32
    %c0_i32_1 = arith.constant 0 : i32
    return %c0_i32, %c0_i32_0 : i32, i32
  }
  func.func @transform_7(%arg0: i32) -> (i32, i32) {
    %c0_i32 = arith.constant 0 : i32
    %c0_i32_0 = arith.constant 0 : i32
    %c0_i32_1 = arith.constant 0 : i32
    return %c0_i32, %c0_i32_0 : i32, i32
  }
  func.func @transform_8(%arg0: i32) -> (i32, i32) {
    %c0_i32 = arith.constant 0 : i32
    %c0_i32_0 = arith.constant 0 : i32
    %c0_i32_1 = arith.constant 0 : i32
    return %c0_i32, %c0_i32_0 : i32, i32
  }
  func.func @transform_9(%arg0: i32) -> (i32, i32, i32) {
    %c0_i32 = arith.constant 0 : i32
    %c0_i32_0 = arith.constant 0 : i32
    %c0_i32_1 = arith.constant 0 : i32
    return %arg0, %c0_i32, %c0_i32_0 : i32, i32, i32
  }
}

</mosaic_0001>

<llo_original>
// kernel: tpu_custom_call.1
$region0: #{tpu_custom_call.1}
  #allocation0 [shape = 'u32[]', space=smem, size = 0x4, offset = 0x4, fixed_abs, tag = 'smem constant byte address 0x4 - core index']
  #allocation1 [shape = 'u32[72,128]{1,0:T(1,128)}', space=vmem, size = 0x9000, scoped, tag = 'internal scratch']
  %s0 = inlined_call_operand.vmem [shape: f32[2,64,256], index: 0, kind: input, shape index: {}]
  %s1 = inlined_call_operand.vmem [shape: bf16[128,64], index: 1, kind: input, shape index: {}]
  %s2 = inlined_call_operand.vmem [shape: bf16[128,64], index: 2, kind: input, shape index: {}]
  %s3 = inlined_call_operand.vmem [shape: bf16[128,64], index: 3, kind: input, shape index: {}]
  %s4 = inlined_call_operand.vmem [shape: bf16[64,128], index: 4, kind: input, shape index: {}]
  %s5 = inlined_call_operand.vmem [shape: f32[64,1], index: 5, kind: input, shape index: {}]
  %s6 = inlined_call_operand.vmem [shape: f32[64,1], index: 6, kind: input, shape index: {}]
  %s7 = inlined_call_operand.vmem [shape: f32[64,1], index: 7, kind: input, shape index: {}]
  %s8 = inlined_call_operand.vmem [shape: f32[128,128], index: 8, kind: input, shape index: {}]
  %s9 = inlined_call_operand.hbm [shape: f32[2,64,256], index: 9, kind: output, shape index: {}]
  %s10 = sld [smem:[#allocation0]]
  $region46: #{tpu_custom_call.1} parent=0
    _
  %s12 = ssub.s32 1, %s10
  %s13 = scalar_select 0, %s12, %s10
  $region1: #{tpu_custom_call.1} parent=0
    #allocation2 [shape = 'u8[131072]{0}', space=vmem, size = 0x20000, scoped, tag = 'output window, operand 0, single buffered']
    #allocation3 [shape = 's32[1]{0}', space=sflag, size = 0x4, scoped, tag = 'scoped memory for tpu_custom_call.1']
    %14 = vsyncpa [#allocation3], 0
    // Predicated region
    $region2: #{tpu_custom_call.1} parent=1 // pred_check
      _
    $region3: #{tpu_custom_call.1} parent=1 // pred_check_branch
      %16 = sbr.rel (0) target = $region5
    $region4: #{tpu_custom_call.1} parent=1 // pred_region
      _
    $region5: #{tpu_custom_call.1} parent=1 // pred_fallthru
      _
    // Predicated region
    $region6: #{tpu_custom_call.1} parent=1 // pred_check
      _
    $region7: #{tpu_custom_call.1} parent=1 // pred_check_branch
      %18 = sbr.rel (0) target = $region9
    $region8: #{tpu_custom_call.1} parent=1 // pred_region
      _
    $region9: #{tpu_custom_call.1} parent=1 // pred_fallthru
      _
    // Predicated region
    $region10: #{tpu_custom_call.1} parent=1 // pred_check
      _
    $region11: #{tpu_custom_call.1} parent=1 // pred_check_branch
      %20 = sbr.rel (0) target = $region13
    $region12: #{tpu_custom_call.1} parent=1 // pred_region
      _
    $region13: #{tpu_custom_call.1} parent=1 // pred_fallthru
      _
    // Predicated region
    $region14: #{tpu_custom_call.1} parent=1 // pred_check
      _
    $region15: #{tpu_custom_call.1} parent=1 // pred_check_branch
      %22 = sbr.rel (0) target = $region17
    $region16: #{tpu_custom_call.1} parent=1 // pred_region
      _
    $region17: #{tpu_custom_call.1} parent=1 // pred_fallthru
      _
    // Predicated region
    $region18: #{tpu_custom_call.1} parent=1 // pred_check
      _
    $region19: #{tpu_custom_call.1} parent=1 // pred_check_branch
      %24 = sbr.rel (0) target = $region21
    $region20: #{tpu_custom_call.1} parent=1 // pred_region
      _
    $region21: #{tpu_custom_call.1} parent=1 // pred_fallthru
      _
    // Predicated region
    $region22: #{tpu_custom_call.1} parent=1 // pred_check
      _
    $region23: #{tpu_custom_call.1} parent=1 // pred_check_branch
      %26 = sbr.rel (0) target = $region25
    $region24: #{tpu_custom_call.1} parent=1 // pred_region
      _
    $region25: #{tpu_custom_call.1} parent=1 // pred_fallthru
      _
    // Predicated region
    $region26: #{tpu_custom_call.1} parent=1 // pred_check
      _
    $region27: #{tpu_custom_call.1} parent=1 // pred_check_branch
      %28 = sbr.rel (0) target = $region29
    $region28: #{tpu_custom_call.1} parent=1 // pred_region
      _
    $region29: #{tpu_custom_call.1} parent=1 // pred_fallthru
      _
    // Predicated region
    $region30: #{tpu_custom_call.1} parent=1 // pred_check
      _
    $region31: #{tpu_custom_call.1} parent=1 // pred_check_branch
      %30 = sbr.rel (0) target = $region33
    $region32: #{tpu_custom_call.1} parent=1 // pred_region
      _
    $region33: #{tpu_custom_call.1} parent=1 // pred_fallthru
      _
    // Predicated region
    $region34: #{tpu_custom_call.1} parent=1 // pred_check
      _
    $region35: #{tpu_custom_call.1} parent=1 // pred_check_branch
      %32 = sbr.rel (0) target = $region37
    $region36: #{tpu_custom_call.1} parent=1 // pred_region
      _
    $region37: #{tpu_custom_call.1} parent=1 // pred_fallthru
      _
    %v34 = vld [vmem:[%s1] sm:$0xf]
    %v35 = vld [vmem:[%s1 + $0x4] sm:$0xf]
    %v36 = vld [vmem:[%s1 + $0x8] sm:$0xf]
    %v37 = vld [vmem:[%s1 + $0xc] sm:$0xf]
    %v38 = vld [vmem:[%s1 + $0x10] sm:$0xf]
    %v39 = vld [vmem:[%s1 + $0x14] sm:$0xf]
    %v40 = vld [vmem:[%s1 + $0x18] sm:$0xf]
    %v41 = vld [vmem:[%s1 + $0x1c] sm:$0xf]
    %v42 = vld [vmem:[%s1 + $0x20] sm:$0xf]
    %v43 = vld [vmem:[%s1 + $0x24] sm:$0xf]
    %v44 = vld [vmem:[%s1 + $0x28] sm:$0xf]
    %v45 = vld [vmem:[%s1 + $0x2c] sm:$0xf]
    %v46 = vld [vmem:[%s1 + $0x30] sm:$0xf]
    %v47 = vld [vmem:[%s1 + $0x34] sm:$0xf]
    %v48 = vld [vmem:[%s1 + $0x38] sm:$0xf]
    %v49 = vld [vmem:[%s1 + $0x3c] sm:$0xf]
    %v50 = vld [vmem:[%s2] sm:$0xf]
    %v51 = vld [vmem:[%s2 + $0x4] sm:$0xf]
    %v52 = vld [vmem:[%s2 + $0x8] sm:$0xf]
    %v53 = vld [vmem:[%s2 + $0xc] sm:$0xf]
    %v54 = vld [vmem:[%s2 + $0x10] sm:$0xf]
    %v55 = vld [vmem:[%s2 + $0x14] sm:$0xf]
    %v56 = vld [vmem:[%s2 + $0x18] sm:$0xf]
    %v57 = vld [vmem:[%s2 + $0x1c] sm:$0xf]
    %v58 = vld [vmem:[%s2 + $0x20] sm:$0xf]
    %v59 = vld [vmem:[%s2 + $0x24] sm:$0xf]
    %v60 = vld [vmem:[%s2 + $0x28] sm:$0xf]
    %v61 = vld [vmem:[%s2 + $0x2c] sm:$0xf]
    %v62 = vld [vmem:[%s2 + $0x30] sm:$0xf]
    %v63 = vld [vmem:[%s2 + $0x34] sm:$0xf]
    %v64 = vld [vmem:[%s2 + $0x38] sm:$0xf]
    %v65 = vld [vmem:[%s2 + $0x3c] sm:$0xf]
    %v66 = vld [vmem:[%s3] sm:$0xf]
    %v67 = vld [vmem:[%s3 + $0x4] sm:$0xf]
    %v68 = vld [vmem:[%s3 + $0x8] sm:$0xf]
    %v69 = vld [vmem:[%s3 + $0xc] sm:$0xf]
    %v70 = vld [vmem:[%s3 + $0x10] sm:$0xf]
    %v71 = vld [vmem:[%s3 + $0x14] sm:$0xf]
    %v72 = vld [vmem:[%s3 + $0x18] sm:$0xf]
    %v73 = vld [vmem:[%s3 + $0x1c] sm:$0xf]
    %v74 = vld [vmem:[%s3 + $0x20] sm:$0xf]
    %v75 = vld [vmem:[%s3 + $0x24] sm:$0xf]
    %v76 = vld [vmem:[%s3 + $0x28] sm:$0xf]
    %v77 = vld [vmem:[%s3 + $0x2c] sm:$0xf]
    %v78 = vld [vmem:[%s3 + $0x30] sm:$0xf]
    %v79 = vld [vmem:[%s3 + $0x34] sm:$0xf]
    %v80 = vld [vmem:[%s3 + $0x38] sm:$0xf]
    %v81 = vld [vmem:[%s3 + $0x3c] sm:$0xf]
    %v82 = vld [vmem:[%s4] sm:$0xf]
    %v83 = vld [vmem:[%s4 + $0x4] sm:$0xf]
    %v84 = vld [vmem:[%s4 + $0x8] sm:$0xf]
    %v85 = vld [vmem:[%s4 + $0xc] sm:$0xf]
    %v86 = vld [vmem:[%s4 + $0x10] sm:$0xf]
    %v87 = vld [vmem:[%s4 + $0x14] sm:$0xf]
    %v88 = vld [vmem:[%s4 + $0x18] sm:$0xf]
    %v89 = vld [vmem:[%s4 + $0x1c] sm:$0xf]
    %v90 = vld [vmem:[%s5] sm:$0xff]
    %v91 = vld [vmem:[%s5 + $0x8] sm:$0xff]
    %v92 = vld [vmem:[%s5 + $0x10] sm:$0xff]
    %v93 = vld [vmem:[%s5 + $0x18] sm:$0xff]
    %v94 = vld [vmem:[%s5 + $0x20] sm:$0xff]
    %v95 = vld [vmem:[%s5 + $0x28] sm:$0xff]
    %v96 = vld [vmem:[%s5 + $0x30] sm:$0xff]
    %v97 = vld [vmem:[%s5 + $0x38] sm:$0xff]
    %v98 = vld [vmem:[%s6] sm:$0xff]
    %v99 = vld [vmem:[%s6 + $0x8] sm:$0xff]
    %v100 = vld [vmem:[%s6 + $0x10] sm:$0xff]
    %v101 = vld [vmem:[%s6 + $0x18] sm:$0xff]
    %v102 = vld [vmem:[%s6 + $0x20] sm:$0xff]
    %v103 = vld [vmem:[%s6 + $0x28] sm:$0xff]
    %v104 = vld [vmem:[%s6 + $0x30] sm:$0xff]
    %v105 = vld [vmem:[%s6 + $0x38] sm:$0xff]
    %v106 = vld [vmem:[%s7] sm:$0xff]
    %v107 = vld [vmem:[%s7 + $0x8] sm:$0xff]
    %v108 = vld [vmem:[%s7 + $0x10] sm:$0xff]
    %v109 = vld [vmem:[%s7 + $0x18] sm:$0xff]
    %v110 = vld [vmem:[%s7 + $0x20] sm:$0xff]
    %v111 = vld [vmem:[%s7 + $0x28] sm:$0xff]
    %v112 = vld [vmem:[%s7 + $0x30] sm:$0xff]
    %v113 = vld [vmem:[%s7 + $0x38] sm:$0xff]
    %v114 = vld [vmem:[%s8] sm:$0xff]
    %v115 = vld [vmem:[%s8 + $0x8] sm:$0xff]
    %v116 = vld [vmem:[%s8 + $0x10] sm:$0xff]
    %v117 = vld [vmem:[%s8 + $0x18] sm:$0xff]
    %v118 = vld [vmem:[%s8 + $0x20] sm:$0xff]
    %v119 = vld [vmem:[%s8 + $0x28] sm:$0xff]
    %v120 = vld [vmem:[%s8 + $0x30] sm:$0xff]
    %v121 = vld [vmem:[%s8 + $0x38] sm:$0xff]
    %v122 = vld [vmem:[%s8 + $0x40] sm:$0xff]
    %v123 = vld [vmem:[%s8 + $0x48] sm:$0xff]
    %v124 = vld [vmem:[%s8 + $0x50] sm:$0xff]
    %v125 = vld [vmem:[%s8 + $0x58] sm:$0xff]
    %v126 = vld [vmem:[%s8 + $0x60] sm:$0xff]
    %v127 = vld [vmem:[%s8 + $0x68] sm:$0xff]
    %v128 = vld [vmem:[%s8 + $0x70] sm:$0xff]
    %v129 = vld [vmem:[%s8 + $0x78] sm:$0xff]
    %v130 = vld [vmem:[%s0] sm:$0xff]
    %v131 = vld [vmem:[%s0 + $0x8] sm:$0xff]
    %v132 = vld [vmem:[%s0 + $0x10] sm:$0xff]
    %v133 = vld [vmem:[%s0 + $0x18] sm:$0xff]
    %v134 = vld [vmem:[%s0 + $0x20] sm:$0xff]
    %v135 = vld [vmem:[%s0 + $0x28] sm:$0xff]
    %v136 = vld [vmem:[%s0 + $0x30] sm:$0xff]
    %v137 = vld [vmem:[%s0 + $0x38] sm:$0xff]
    %v138 = vld [vmem:[%s0 + $0x40] sm:$0xff]
    %v139 = vld [vmem:[%s0 + $0x48] sm:$0xff]
    %v140 = vld [vmem:[%s0 + $0x50] sm:$0xff]
    %v141 = vld [vmem:[%s0 + $0x58] sm:$0xff]
    %v142 = vld [vmem:[%s0 + $0x60] sm:$0xff]
    %v143 = vld [vmem:[%s0 + $0x68] sm:$0xff]
    %v144 = vld [vmem:[%s0 + $0x70] sm:$0xff]
    %v145 = vld [vmem:[%s0 + $0x78] sm:$0xff]
    %v146 = vpack.c.bf16 %v132, %v130
    %v147 = vpack.c.bf16 %v133, %v131
    %v148 = vpack.c.bf16 %v136, %v134
    %v149 = vpack.c.bf16 %v137, %v135
    %v150 = vpack.c.bf16 %v140, %v138
    %v151 = vpack.c.bf16 %v141, %v139
    %v152 = vpack.c.bf16 %v144, %v142
    %v153 = vpack.c.bf16 %v145, %v143
    %v170 = vunpack.c.l.b16 %v34
    %v171 = vunpack.c.l.b16 %v35
    %v172 = vunpack.c.l.b16 %v36
    %v173 = vunpack.c.l.b16 %v37
    %v174 = vunpack.c.l.b16 %v38
    %v175 = vunpack.c.l.b16 %v39
    %v176 = vunpack.c.l.b16 %v40
    %v177 = vunpack.c.l.b16 %v41
    %v178 = vunpack.c.l.b16 %v42
    %v179 = vunpack.c.l.b16 %v43
    %v180 = vunpack.c.l.b16 %v44
    %v181 = vunpack.c.l.b16 %v45
    %v182 = vunpack.c.l.b16 %v46
    %v183 = vunpack.c.l.b16 %v47
    %v184 = vunpack.c.l.b16 %v48
    %v185 = vunpack.c.l.b16 %v49
    %v186 = vpack.c.b16 %v171, %v170
    %v187 = vpack.c.b16 %v173, %v172
    %v188 = vpack.c.b16 %v175, %v174
    %v189 = vpack.c.b16 %v177, %v176
    %v190 = vpack.c.b16 %v179, %v178
    %v191 = vpack.c.b16 %v181, %v180
    %v192 = vpack.c.b16 %v183, %v182
    %v193 = vpack.c.b16 %v185, %v184
    %vm194 = vcmask 523264
    %v196 = vsel %vm194, %v186, 0
    %v199 = vsel %vm194, %v187, 0
    %v202 = vsel %vm194, %v188, 0
    %v205 = vsel %vm194, %v189, 0
    %v208 = vsel %vm194, %v190, 0
    %v211 = vsel %vm194, %v191, 0
    %v214 = vsel %vm194, %v192, 0
    %v217 = vsel %vm194, %v193, 0
    %219 = vmatpush.bf16.msra.mxu0 0
    %220 = vmatpush.bf16.msra.mxu0 0
    %221 = vmatpush.bf16.msra.mxu0 0
    %222 = vmatpush.bf16.msra.mxu0 0
    %223 = vmatpush.bf16.msra.mxu0 %v152
    %224 = vmatpush.bf16.msra.mxu0 %v150
    %225 = vmatpush.bf16.msra.mxu0 %v148
    %226 = vmatpush.bf16.msra.mxu0 %v146
    %227 = vmatmul.bf16.gmra.mxu0 %v196
    %v228 = vpop.f32.mrf.mxu0
    %v229 = vadd.f32 0.0, %v228
    %v230 = vpop.f32.mrf.mxu0
    %v231 = vadd.f32 0.0, %v230
    %232 = vmatmul.bf16.gmra.mxu0 %v199
    %v233 = vpop.f32.mrf.mxu0
    %v234 = vadd.f32 0.0, %v233
    %v235 = vpop.f32.mrf.mxu0
    %v236 = vadd.f32 0.0, %v235
    %237 = vmatmul.bf16.gmra.mxu0 %v202
    %v238 = vpop.f32.mrf.mxu0
    %v239 = vadd.f32 0.0, %v238
    %v240 = vpop.f32.mrf.mxu0
    %v241 = vadd.f32 0.0, %v240
    %242 = vmatmul.bf16.gmra.mxu0 %v205
    %v243 = vpop.f32.mrf.mxu0
    %v244 = vadd.f32 0.0, %v243
    %v245 = vpop.f32.mrf.mxu0
    %v246 = vadd.f32 0.0, %v245
    %247 = vmatmul.bf16.gmra.mxu0 %v208
    %v248 = vpop.f32.mrf.mxu0
    %v249 = vadd.f32 0.0, %v248
    %v250 = vpop.f32.mrf.mxu0
    %v251 = vadd.f32 0.0, %v250
    %252 = vmatmul.bf16.gmra.mxu0 %v211
    %v253 = vpop.f32.mrf.mxu0
    %v254 = vadd.f32 0.0, %v253
    %v255 = vpop.f32.mrf.mxu0
    %v256 = vadd.f32 0.0, %v255
    %257 = vmatmul.bf16.gmra.mxu0 %v214
    %v258 = vpop.f32.mrf.mxu0
    %v259 = vadd.f32 0.0, %v258
    %v260 = vpop.f32.mrf.mxu0
    %v261 = vadd.f32 0.0, %v260
    %262 = vmatmul.bf16.gmra.mxu0 %v217
    %v263 = vpop.f32.mrf.mxu0
    %v264 = vadd.f32 0.0, %v263
    %v265 = vpop.f32.mrf.mxu0
    %v266 = vadd.f32 0.0, %v265
    %267 = vdwg.mxu0
    %268 = vmatpush.bf16.msra.mxu0 0
    %269 = vmatpush.bf16.msra.mxu0 0
    %270 = vmatpush.bf16.msra.mxu0 0
    %271 = vmatpush.bf16.msra.mxu0 0
    %272 = vmatpush.bf16.msra.mxu0 %v153
    %273 = vmatpush.bf16.msra.mxu0 %v151
    %274 = vmatpush.bf16.msra.mxu0 %v149
    %275 = vmatpush.bf16.msra.mxu0 %v147
    %276 = vmatmul.bf16.gmra.mxu0 %v196
    %v277 = vpop.f32.mrf.mxu0
    %v278 = vadd.f32 0.0, %v277
    %v279 = vpop.f32.mrf.mxu0
    %v280 = vadd.f32 0.0, %v279
    %281 = vmatmul.bf16.gmra.mxu0 %v199
    %v282 = vpop.f32.mrf.mxu0
    %v283 = vadd.f32 0.0, %v282
    %v284 = vpop.f32.mrf.mxu0
    %v285 = vadd.f32 0.0, %v284
    %286 = vmatmul.bf16.gmra.mxu0 %v202
    %v287 = vpop.f32.mrf.mxu0
    %v288 = vadd.f32 0.0, %v287
    %v289 = vpop.f32.mrf.mxu0
    %v290 = vadd.f32 0.0, %v289
    %291 = vmatmul.bf16.gmra.mxu0 %v205
    %v292 = vpop.f32.mrf.mxu0
    %v293 = vadd.f32 0.0, %v292
    %v294 = vpop.f32.mrf.mxu0
    %v295 = vadd.f32 0.0, %v294
    %296 = vmatmul.bf16.gmra.mxu0 %v208
    %v297 = vpop.f32.mrf.mxu0
    %v298 = vadd.f32 0.0, %v297
    %v299 = vpop.f32.mrf.mxu0
    %v300 = vadd.f32 0.0, %v299
    %301 = vmatmul.bf16.gmra.mxu0 %v211
    %v302 = vpop.f32.mrf.mxu0
    %v303 = vadd.f32 0.0, %v302
    %v304 = vpop.f32.mrf.mxu0
    %v305 = vadd.f32 0.0, %v304
    %306 = vmatmul.bf16.gmra.mxu0 %v214
    %v307 = vpop.f32.mrf.mxu0
    %v308 = vadd.f32 0.0, %v307
    %v309 = vpop.f32.mrf.mxu0
    %v310 = vadd.f32 0.0, %v309
    %311 = vmatmul.bf16.gmra.mxu0 %v217
    %v312 = vpop.f32.mrf.mxu0
    %v313 = vadd.f32 0.0, %v312
    %v314 = vpop.f32.mrf.mxu0
    %v315 = vadd.f32 0.0, %v314
    %316 = vdwg.mxu0
    %v333 = vunpack.c.l.b16 %v50
    %v334 = vunpack.c.l.b16 %v51
    %v335 = vunpack.c.l.b16 %v52
    %v336 = vunpack.c.l.b16 %v53
    %v337 = vunpack.c.l.b16 %v54
    %v338 = vunpack.c.l.b16 %v55
    %v339 = vunpack.c.l.b16 %v56
    %v340 = vunpack.c.l.b16 %v57
    %v341 = vunpack.c.l.b16 %v58
    %v342 = vunpack.c.l.b16 %v59
    %v343 = vunpack.c.l.b16 %v60
    %v344 = vunpack.c.l.b16 %v61
    %v345 = vunpack.c.l.b16 %v62
    %v346 = vunpack.c.l.b16 %v63
    %v347 = vunpack.c.l.b16 %v64
    %v348 = vunpack.c.l.b16 %v65
    %v349 = vpack.c.b16 %v334, %v333
    %v350 = vpack.c.b16 %v336, %v335
    %v351 = vpack.c.b16 %v338, %v337
    %v352 = vpack.c.b16 %v340, %v339
    %v353 = vpack.c.b16 %v342, %v341
    %v354 = vpack.c.b16 %v344, %v343
    %v355 = vpack.c.b16 %v346, %v345
    %v356 = vpack.c.b16 %v348, %v347
    %v358 = vsel %vm194, %v349, 0
    %v361 = vsel %vm194, %v350, 0
    %v364 = vsel %vm194, %v351, 0
    %v367 = vsel %vm194, %v352, 0
    %v370 = vsel %vm194, %v353, 0
    %v373 = vsel %vm194, %v354, 0
    %v376 = vsel %vm194, %v355, 0
    %v379 = vsel %vm194, %v356, 0
    %381 = vmatpush.bf16.msra.mxu0 0
    %382 = vmatpush.bf16.msra.mxu0 0
    %383 = vmatpush.bf16.msra.mxu0 0
    %384 = vmatpush.bf16.msra.mxu0 0
    %385 = vmatpush.bf16.msra.mxu0 %v152
    %386 = vmatpush.bf16.msra.mxu0 %v150
    %387 = vmatpush.bf16.msra.mxu0 %v148
    %388 = vmatpush.bf16.msra.mxu0 %v146
    %389 = vmatmul.bf16.gmra.mxu0 %v358
    %v390 = vpop.f32.mrf.mxu0
    %v391 = vadd.f32 0.0, %v390
    %v392 = vpop.f32.mrf.mxu0
    %v393 = vadd.f32 0.0, %v392
    %394 = vmatmul.bf16.gmra.mxu0 %v361
    %v395 = vpop.f32.mrf.mxu0
    %v396 = vadd.f32 0.0, %v395
    %v397 = vpop.f32.mrf.mxu0
    %v398 = vadd.f32 0.0, %v397
    %399 = vmatmul.bf16.gmra.mxu0 %v364
    %v400 = vpop.f32.mrf.mxu0
    %v401 = vadd.f32 0.0, %v400
    %v402 = vpop.f32.mrf.mxu0
    %v403 = vadd.f32 0.0, %v402
    %404 = vmatmul.bf16.gmra.mxu0 %v367
    %v405 = vpop.f32.mrf.mxu0
    %v406 = vadd.f32 0.0, %v405
    %v407 = vpop.f32.mrf.mxu0
    %v408 = vadd.f32 0.0, %v407
    %409 = vmatmul.bf16.gmra.mxu0 %v370
    %v410 = vpop.f32.mrf.mxu0
    %v411 = vadd.f32 0.0, %v410
    %v412 = vpop.f32.mrf.mxu0
    %v413 = vadd.f32 0.0, %v412
    %414 = vmatmul.bf16.gmra.mxu0 %v373
    %v415 = vpop.f32.mrf.mxu0
    %v416 = vadd.f32 0.0, %v415
    %v417 = vpop.f32.mrf.mxu0
    %v418 = vadd.f32 0.0, %v417
    %419 = vmatmul.bf16.gmra.mxu0 %v376
    %v420 = vpop.f32.mrf.mxu0
    %v421 = vadd.f32 0.0, %v420
    %v422 = vpop.f32.mrf.mxu0
    %v423 = vadd.f32 0.0, %v422
    %424 = vmatmul.bf16.gmra.mxu0 %v379
    %v425 = vpop.f32.mrf.mxu0
    %v426 = vadd.f32 0.0, %v425
    %v427 = vpop.f32.mrf.mxu0
    %v428 = vadd.f32 0.0, %v427
    %429 = vdwg.mxu0
    %430 = vmatpush.bf16.msra.mxu0 0
    %431 = vmatpush.bf16.msra.mxu0 0
    %432 = vmatpush.bf16.msra.mxu0 0
    %433 = vmatpush.bf16.msra.mxu0 0
    %434 = vmatpush.bf16.msra.mxu0 %v153
    %435 = vmatpush.bf16.msra.mxu0 %v151
    %436 = vmatpush.bf16.msra.mxu0 %v149
    %437 = vmatpush.bf16.msra.mxu0 %v147
    %438 = vmatmul.bf16.gmra.mxu0 %v358
    %v439 = vpop.f32.mrf.mxu0
    %v440 = vadd.f32 0.0, %v439
    %v441 = vpop.f32.mrf.mxu0
    %v442 = vadd.f32 0.0, %v441
    %443 = vmatmul.bf16.gmra.mxu0 %v361
    %v444 = vpop.f32.mrf.mxu0
    %v445 = vadd.f32 0.0, %v444
    %v446 = vpop.f32.mrf.mxu0
    %v447 = vadd.f32 0.0, %v446
    %448 = vmatmul.bf16.gmra.mxu0 %v364
    %v449 = vpop.f32.mrf.mxu0
    %v450 = vadd.f32 0.0, %v449
    %v451 = vpop.f32.mrf.mxu0
    %v452 = vadd.f32 0.0, %v451
    %453 = vmatmul.bf16.gmra.mxu0 %v367
    %v454 = vpop.f32.mrf.mxu0
    %v455 = vadd.f32 0.0, %v454
    %v456 = vpop.f32.mrf.mxu0
    %v457 = vadd.f32 0.0, %v456
    %458 = vmatmul.bf16.gmra.mxu0 %v370
    %v459 = vpop.f32.mrf.mxu0
    %v460 = vadd.f32 0.0, %v459
    %v461 = vpop.f32.mrf.mxu0
    %v462 = vadd.f32 0.0, %v461
    %463 = vmatmul.bf16.gmra.mxu0 %v373
    %v464 = vpop.f32.mrf.mxu0
    %v465 = vadd.f32 0.0, %v464
    %v466 = vpop.f32.mrf.mxu0
    %v467 = vadd.f32 0.0, %v466
    %468 = vmatmul.bf16.gmra.mxu0 %v376
    %v469 = vpop.f32.mrf.mxu0
    %v470 = vadd.f32 0.0, %v469
    %v471 = vpop.f32.mrf.mxu0
    %v472 = vadd.f32 0.0, %v471
    %473 = vmatmul.bf16.gmra.mxu0 %v379
    %v474 = vpop.f32.mrf.mxu0
    %v475 = vadd.f32 0.0, %v474
    %v476 = vpop.f32.mrf.mxu0
    %v477 = vadd.f32 0.0, %v476
    %478 = vdwg.mxu0
    %v495 = vunpack.c.l.b16 %v66
    %v496 = vunpack.c.l.b16 %v67
    %v497 = vunpack.c.l.b16 %v68
    %v498 = vunpack.c.l.b16 %v69
    %v499 = vunpack.c.l.b16 %v70
    %v500 = vunpack.c.l.b16 %v71
    %v501 = vunpack.c.l.b16 %v72
    %v502 = vunpack.c.l.b16 %v73
    %v503 = vunpack.c.l.b16 %v74
    %v504 = vunpack.c.l.b16 %v75
    %v505 = vunpack.c.l.b16 %v76
    %v506 = vunpack.c.l.b16 %v77
    %v507 = vunpack.c.l.b16 %v78
    %v508 = vunpack.c.l.b16 %v79
    %v509 = vunpack.c.l.b16 %v80
    %v510 = vunpack.c.l.b16 %v81
    %v511 = vpack.c.b16 %v496, %v495
    %v512 = vpack.c.b16 %v498, %v497
    %v513 = vpack.c.b16 %v500, %v499
    %v514 = vpack.c.b16 %v502, %v501
    %v515 = vpack.c.b16 %v504, %v503
    %v516 = vpack.c.b16 %v506, %v505
    %v517 = vpack.c.b16 %v508, %v507
    %v518 = vpack.c.b16 %v510, %v509
    %v520 = vsel %vm194, %v511, 0
    %v523 = vsel %vm194, %v512, 0
    %v526 = vsel %vm194, %v513, 0
    %v529 = vsel %vm194, %v514, 0
    %v532 = vsel %vm194, %v515, 0
    %v535 = vsel %vm194, %v516, 0
    %v538 = vsel %vm194, %v517, 0
    %v541 = vsel %vm194, %v518, 0
    %543 = vmatpush.bf16.msra.mxu0 0
    %544 = vmatpush.bf16.msra.mxu0 0
    %545 = vmatpush.bf16.msra.mxu0 0
    %546 = vmatpush.bf16.msra.mxu0 0
    %547 = vmatpush.bf16.msra.mxu0 %v152
    %548 = vmatpush.bf16.msra.mxu0 %v150
    %549 = vmatpush.bf16.msra.mxu0 %v148
    %550 = vmatpush.bf16.msra.mxu0 %v146
    %551 = vmatmul.bf16.gmra.mxu0 %v520
    %v552 = vpop.f32.mrf.mxu0
    %v553 = vadd.f32 0.0, %v552
    %v554 = vpop.f32.mrf.mxu0
    %v555 = vadd.f32 0.0, %v554
    %556 = vmatmul.bf16.gmra.mxu0 %v523
    %v557 = vpop.f32.mrf.mxu0
    %v558 = vadd.f32 0.0, %v557
    %v559 = vpop.f32.mrf.mxu0
    %v560 = vadd.f32 0.0, %v559
    %561 = vmatmul.bf16.gmra.mxu0 %v526
    %v562 = vpop.f32.mrf.mxu0
    %v563 = vadd.f32 0.0, %v562
    %v564 = vpop.f32.mrf.mxu0
    %v565 = vadd.f32 0.0, %v564
    %566 = vmatmul.bf16.gmra.mxu0 %v529
    %v567 = vpop.f32.mrf.mxu0
    %v568 = vadd.f32 0.0, %v567
    %v569 = vpop.f32.mrf.mxu0
    %v570 = vadd.f32 0.0, %v569
    %571 = vmatmul.bf16.gmra.mxu0 %v532
    %v572 = vpop.f32.mrf.mxu0
    %v573 = vadd.f32 0.0, %v572
    %v574 = vpop.f32.mrf.mxu0
    %v575 = vadd.f32 0.0, %v574
    %576 = vmatmul.bf16.gmra.mxu0 %v535
    %v577 = vpop.f32.mrf.mxu0
    %v578 = vadd.f32 0.0, %v577
    %v579 = vpop.f32.mrf.mxu0
    %v580 = vadd.f32 0.0, %v579
    %581 = vmatmul.bf16.gmra.mxu0 %v538
    %v582 = vpop.f32.mrf.mxu0
    %v583 = vadd.f32 0.0, %v582
    %v584 = vpop.f32.mrf.mxu0
    %v585 = vadd.f32 0.0, %v584
    %586 = vmatmul.bf16.gmra.mxu0 %v541
    %v587 = vpop.f32.mrf.mxu0
    %v588 = vadd.f32 0.0, %v587
    %v589 = vpop.f32.mrf.mxu0
    %v590 = vadd.f32 0.0, %v589
    %591 = vdwg.mxu0
    %592 = vmatpush.bf16.msra.mxu0 0
    %593 = vmatpush.bf16.msra.mxu0 0
    %594 = vmatpush.bf16.msra.mxu0 0
    %595 = vmatpush.bf16.msra.mxu0 0
    %596 = vmatpush.bf16.msra.mxu0 %v153
    %597 = vmatpush.bf16.msra.mxu0 %v151
    %598 = vmatpush.bf16.msra.mxu0 %v149
    %599 = vmatpush.bf16.msra.mxu0 %v147
    %600 = vmatmul.bf16.gmra.mxu0 %v520
    %v601 = vpop.f32.mrf.mxu0
    %v602 = vadd.f32 0.0, %v601
    %v603 = vpop.f32.mrf.mxu0
    %v604 = vadd.f32 0.0, %v603
    %605 = vmatmul.bf16.gmra.mxu0 %v523
    %v606 = vpop.f32.mrf.mxu0
    %v607 = vadd.f32 0.0, %v606
    %v608 = vpop.f32.mrf.mxu0
    %v609 = vadd.f32 0.0, %v608
    %610 = vmatmul.bf16.gmra.mxu0 %v526
    %v611 = vpop.f32.mrf.mxu0
    %v612 = vadd.f32 0.0, %v611
    %v613 = vpop.f32.mrf.mxu0
    %v614 = vadd.f32 0.0, %v613
    %615 = vmatmul.bf16.gmra.mxu0 %v529
    %v616 = vpop.f32.mrf.mxu0
    %v617 = vadd.f32 0.0, %v616
    %v618 = vpop.f32.mrf.mxu0
    %v619 = vadd.f32 0.0, %v618
    %620 = vmatmul.bf16.gmra.mxu0 %v532
    %v621 = vpop.f32.mrf.mxu0
    %v622 = vadd.f32 0.0, %v621
    %v623 = vpop.f32.mrf.mxu0
    %v624 = vadd.f32 0.0, %v623
    %625 = vmatmul.bf16.gmra.mxu0 %v535
    %v626 = vpop.f32.mrf.mxu0
    %v627 = vadd.f32 0.0, %v626
    %v628 = vpop.f32.mrf.mxu0
    %v629 = vadd.f32 0.0, %v628
    %630 = vmatmul.bf16.gmra.mxu0 %v538
    %v631 = vpop.f32.mrf.mxu0
    %v632 = vadd.f32 0.0, %v631
    %v633 = vpop.f32.mrf.mxu0
    %v634 = vadd.f32 0.0, %v633
    %635 = vmatmul.bf16.gmra.mxu0 %v541
    %v636 = vpop.f32.mrf.mxu0
    %v637 = vadd.f32 0.0, %v636
    %v638 = vpop.f32.mrf.mxu0
    %v639 = vadd.f32 0.0, %v638
    %640 = vdwg.mxu0
    %v641 = vmax.f32 %v229, %v231
    %v642 = vmax.f32 %v641, %v234
    %v643 = vmax.f32 %v642, %v236
    %v644 = vrot.slane %v643, 4
    %v645 = vmax.f32 %v643, %v644
    %v646 = vrot.slane %v645, 2
    %v647 = vmax.f32 %v645, %v646
    %v648 = vrot.slane %v647, 1
    %v649 = vmax.f32 %v647, %v648
    %v650 = vmax.f32 %v278, %v280
    %v651 = vmax.f32 %v650, %v283
    %v652 = vmax.f32 %v651, %v285
    %v653 = vrot.slane %v652, 4
    %v654 = vmax.f32 %v652, %v653
    %v655 = vrot.slane %v654, 2
    %v656 = vmax.f32 %v654, %v655
    %v657 = vrot.slane %v656, 1
    %v658 = vmax.f32 %v656, %v657
    %v659 = vmax.f32 %v239, %v241
    %v660 = vmax.f32 %v659, %v244
    %v661 = vmax.f32 %v660, %v246
    %v662 = vrot.slane %v661, 4
    %v663 = vmax.f32 %v661, %v662
    %v664 = vrot.slane %v663, 2
    %v665 = vmax.f32 %v663, %v664
    %v666 = vrot.slane %v665, 1
    %v667 = vmax.f32 %v665, %v666
    %v668 = vmax.f32 %v288, %v290
    %v669 = vmax.f32 %v668, %v293
    %v670 = vmax.f32 %v669, %v295
    %v671 = vrot.slane %v670, 4
    %v672 = vmax.f32 %v670, %v671
    %v673 = vrot.slane %v672, 2
    %v674 = vmax.f32 %v672, %v673
    %v675 = vrot.slane %v674, 1
    %v676 = vmax.f32 %v674, %v675
    %v677 = vmax.f32 %v249, %v251
    %v678 = vmax.f32 %v677, %v254
    %v679 = vmax.f32 %v678, %v256
    %v680 = vrot.slane %v679, 4
    %v681 = vmax.f32 %v679, %v680
    %v682 = vrot.slane %v681, 2
    %v683 = vmax.f32 %v681, %v682
    %v684 = vrot.slane %v683, 1
    %v685 = vmax.f32 %v683, %v684
    %v686 = vmax.f32 %v298, %v300
    %v687 = vmax.f32 %v686, %v303
    %v688 = vmax.f32 %v687, %v305
    %v689 = vrot.slane %v688, 4
    %v690 = vmax.f32 %v688, %v689
    %v691 = vrot.slane %v690, 2
    %v692 = vmax.f32 %v690, %v691
    %v693 = vrot.slane %v692, 1
    %v694 = vmax.f32 %v692, %v693
    %v695 = vmax.f32 %v259, %v261
    %v696 = vmax.f32 %v695, %v264
    %v697 = vmax.f32 %v696, %v266
    %v698 = vrot.slane %v697, 4
    %v699 = vmax.f32 %v697, %v698
    %v700 = vrot.slane %v699, 2
    %v701 = vmax.f32 %v699, %v700
    %v702 = vrot.slane %v701, 1
    %v703 = vmax.f32 %v701, %v702
    %v704 = vmax.f32 %v308, %v310
    %v705 = vmax.f32 %v704, %v313
    %v706 = vmax.f32 %v705, %v315
    %v707 = vrot.slane %v706, 4
    %v708 = vmax.f32 %v706, %v707
    %v709 = vrot.slane %v708, 2
    %v710 = vmax.f32 %v708, %v709
    %v711 = vrot.slane %v710, 1
    %v712 = vmax.f32 %v710, %v711
    %v713 = vsub.f32 %v229, %v649
    %v714 = vsub.f32 %v278, %v658
    %v715 = vsub.f32 %v231, %v649
    %v716 = vsub.f32 %v280, %v658
    %v717 = vsub.f32 %v234, %v649
    %v718 = vsub.f32 %v283, %v658
    %v719 = vsub.f32 %v236, %v649
    %v720 = vsub.f32 %v285, %v658
    %v721 = vsub.f32 %v239, %v667
    %v722 = vsub.f32 %v288, %v676
    %v723 = vsub.f32 %v241, %v667
    %v724 = vsub.f32 %v290, %v676
    %v725 = vsub.f32 %v244, %v667
    %v726 = vsub.f32 %v293, %v676
    %v727 = vsub.f32 %v246, %v667
    %v728 = vsub.f32 %v295, %v676
    %v729 = vsub.f32 %v249, %v685
    %v730 = vsub.f32 %v298, %v694
    %v731 = vsub.f32 %v251, %v685
    %v732 = vsub.f32 %v300, %v694
    %v733 = vsub.f32 %v254, %v685
    %v734 = vsub.f32 %v303, %v694
    %v735 = vsub.f32 %v256, %v685
    %v736 = vsub.f32 %v305, %v694
    %v737 = vsub.f32 %v259, %v703
    %v738 = vsub.f32 %v308, %v712
    %v739 = vsub.f32 %v261, %v703
    %v740 = vsub.f32 %v310, %v712
    %v741 = vsub.f32 %v264, %v703
    %v742 = vsub.f32 %v313, %v712
    %v743 = vsub.f32 %v266, %v703
    %v744 = vsub.f32 %v315, %v712
    %v745 = vmul.f32 %v713, 1.442695
    %v746 = vpow.pop %v745
    %v747 = vmul.f32 %v714, 1.442695
    %v748 = vpow.pop %v747
    %v749 = vmul.f32 %v715, 1.442695
    %v750 = vpow.pop %v749
    %v751 = vmul.f32 %v716, 1.442695
    %v752 = vpow.pop %v751
    %v753 = vmul.f32 %v717, 1.442695
    %v754 = vpow.pop %v753
    %v755 = vmul.f32 %v718, 1.442695
    %v756 = vpow.pop %v755
    %v757 = vmul.f32 %v719, 1.442695
    %v758 = vpow.pop %v757
    %v759 = vmul.f32 %v720, 1.442695
    %v760 = vpow.pop %v759
    %v761 = vmul.f32 %v721, 1.442695
    %v762 = vpow.pop %v761
    %v763 = vmul.f32 %v722, 1.442695
    %v764 = vpow.pop %v763
    %v765 = vmul.f32 %v723, 1.442695
    %v766 = vpow.pop %v765
    %v767 = vmul.f32 %v724, 1.442695
    %v768 = vpow.pop %v767
    %v769 = vmul.f32 %v725, 1.442695
    %v770 = vpow.pop %v769
    %v771 = vmul.f32 %v726, 1.442695
    %v772 = vpow.pop %v771
    %v773 = vmul.f32 %v727, 1.442695
    %v774 = vpow.pop %v773
    %v775 = vmul.f32 %v728, 1.442695
    %v776 = vpow.pop %v775
    %v777 = vmul.f32 %v729, 1.442695
    %v778 = vpow.pop %v777
    %v779 = vmul.f32 %v730, 1.442695
    %v780 = vpow.pop %v779
    %v781 = vmul.f32 %v731, 1.442695
    %v782 = vpow.pop %v781
    %v783 = vmul.f32 %v732, 1.442695
    %v784 = vpow.pop %v783
    %v785 = vmul.f32 %v733, 1.442695
    %v786 = vpow.pop %v785
    %v787 = vmul.f32 %v734, 1.442695
    %v788 = vpow.pop %v787
    %v789 = vmul.f32 %v735, 1.442695
    %v790 = vpow.pop %v789
    %v791 = vmul.f32 %v736, 1.442695
    %v792 = vpow.pop %v791
    %v793 = vmul.f32 %v737, 1.442695
    %v794 = vpow.pop %v793
    %v795 = vmul.f32 %v738, 1.442695
    %v796 = vpow.pop %v795
    %v797 = vmul.f32 %v739, 1.442695
    %v798 = vpow.pop %v797
    %v799 = vmul.f32 %v740, 1.442695
    %v800 = vpow.pop %v799
    %v801 = vmul.f32 %v741, 1.442695
    %v802 = vpow.pop %v801
    %v803 = vmul.f32 %v742, 1.442695
    %v804 = vpow.pop %v803
    %v805 = vmul.f32 %v743, 1.442695
    %v806 = vpow.pop %v805
    %v807 = vmul.f32 %v744, 1.442695
    %v808 = vpow.pop %v807
    %v809 = vadd.f32 %v746, %v750
    %v810 = vadd.f32 %v809, %v754
    %v811 = vadd.f32 %v810, %v758
    %v812 = vrot.slane %v811, 4
    %v813 = vadd.f32 %v811, %v812
    %v814 = vrot.slane %v813, 2
    %v815 = vadd.f32 %v813, %v814
    %v816 = vrot.slane %v815, 1
    %v817 = vadd.f32 %v815, %v816
    %v818 = vadd.f32 %v748, %v752
    %v819 = vadd.f32 %v818, %v756
    %v820 = vadd.f32 %v819, %v760
    %v821 = vrot.slane %v820, 4
    %v822 = vadd.f32 %v820, %v821
    %v823 = vrot.slane %v822, 2
    %v824 = vadd.f32 %v822, %v823
    %v825 = vrot.slane %v824, 1
    %v826 = vadd.f32 %v824, %v825
    %v827 = vadd.f32 %v762, %v766
    %v828 = vadd.f32 %v827, %v770
    %v829 = vadd.f32 %v828, %v774
    %v830 = vrot.slane %v829, 4
    %v831 = vadd.f32 %v829, %v830
    %v832 = vrot.slane %v831, 2
    %v833 = vadd.f32 %v831, %v832
    %v834 = vrot.slane %v833, 1
    %v835 = vadd.f32 %v833, %v834
    %v836 = vadd.f32 %v764, %v768
    %v837 = vadd.f32 %v836, %v772
    %v838 = vadd.f32 %v837, %v776
    %v839 = vrot.slane %v838, 4
    %v840 = vadd.f32 %v838, %v839
    %v841 = vrot.slane %v840, 2
    %v842 = vadd.f32 %v840, %v841
    %v843 = vrot.slane %v842, 1
    %v844 = vadd.f32 %v842, %v843
    %v845 = vadd.f32 %v778, %v782
    %v846 = vadd.f32 %v845, %v786
    %v847 = vadd.f32 %v846, %v790
    %v848 = vrot.slane %v847, 4
    %v849 = vadd.f32 %v847, %v848
    %v850 = vrot.slane %v849, 2
    %v851 = vadd.f32 %v849, %v850
    %v852 = vrot.slane %v851, 1
    %v853 = vadd.f32 %v851, %v852
    %v854 = vadd.f32 %v780, %v784
    %v855 = vadd.f32 %v854, %v788
    %v856 = vadd.f32 %v855, %v792
    %v857 = vrot.slane %v856, 4
    %v858 = vadd.f32 %v856, %v857
    %v859 = vrot.slane %v858, 2
    %v860 = vadd.f32 %v858, %v859
    %v861 = vrot.slane %v860, 1
    %v862 = vadd.f32 %v860, %v861
    %v863 = vadd.f32 %v794, %v798
    %v864 = vadd.f32 %v863, %v802
    %v865 = vadd.f32 %v864, %v806
    %v866 = vrot.slane %v865, 4
    %v867 = vadd.f32 %v865, %v866
    %v868 = vrot.slane %v867, 2
    %v869 = vadd.f32 %v867, %v868
    %v870 = vrot.slane %v869, 1
    %v871 = vadd.f32 %v869, %v870
    %v872 = vadd.f32 %v796, %v800
    %v873 = vadd.f32 %v872, %v804
    %v874 = vadd.f32 %v873, %v808
    %v875 = vrot.slane %v874, 4
    %v876 = vadd.f32 %v874, %v875
    %v877 = vrot.slane %v876, 2
    %v878 = vadd.f32 %v876, %v877
    %v879 = vrot.slane %v878, 1
    %v880 = vadd.f32 %v878, %v879
    %v881 = vmax.f32 %v391, %v440
    %882 = vmax.xlane.f32.xlu0 %v881
    %v883 = vpop.xlane.xlu0 %882
    %v884 = vmax.f32 %v393, %v442
    %885 = vmax.xlane.f32.xlu0 %v884
    %v886 = vpop.xlane.xlu0 %885
    %v887 = vmax.f32 %v396, %v445
    %888 = vmax.xlane.f32.xlu0 %v887
    %v889 = vpop.xlane.xlu0 %888
    %v890 = vmax.f32 %v398, %v447
    %891 = vmax.xlane.f32.xlu0 %v890
    %v892 = vpop.xlane.xlu0 %891
    %v893 = vmax.f32 %v401, %v450
    %894 = vmax.xlane.f32.xlu0 %v893
    %v895 = vpop.xlane.xlu0 %894
    %v896 = vmax.f32 %v403, %v452
    %897 = vmax.xlane.f32.xlu0 %v896
    %v898 = vpop.xlane.xlu0 %897
    %v899 = vmax.f32 %v406, %v455
    %900 = vmax.xlane.f32.xlu0 %v899
    %v901 = vpop.xlane.xlu0 %900
    %v902 = vmax.f32 %v408, %v457
    %903 = vmax.xlane.f32.xlu0 %v902
    %v904 = vpop.xlane.xlu0 %903
    %v905 = vmax.f32 %v411, %v460
    %906 = vmax.xlane.f32.xlu0 %v905
    %v907 = vpop.xlane.xlu0 %906
    %v908 = vmax.f32 %v413, %v462
    %909 = vmax.xlane.f32.xlu0 %v908
    %v910 = vpop.xlane.xlu0 %909
    %v911 = vmax.f32 %v416, %v465
    %912 = vmax.xlane.f32.xlu0 %v911
    %v913 = vpop.xlane.xlu0 %912
    %v914 = vmax.f32 %v418, %v467
    %915 = vmax.xlane.f32.xlu0 %v914
    %v916 = vpop.xlane.xlu0 %915
    %v917 = vmax.f32 %v421, %v470
    %918 = vmax.xlane.f32.xlu0 %v917
    %v919 = vpop.xlane.xlu0 %918
    %v920 = vmax.f32 %v423, %v472
    %921 = vmax.xlane.f32.xlu0 %v920
    %v922 = vpop.xlane.xlu0 %921
    %v923 = vmax.f32 %v426, %v475
    %924 = vmax.xlane.f32.xlu0 %v923
    %v925 = vpop.xlane.xlu0 %924
    %v926 = vmax.f32 %v428, %v477
    %927 = vmax.xlane.f32.xlu0 %v926
    %v928 = vpop.xlane.xlu0 %927
    %v929 = vsub.f32 %v391, %v883
    %v930 = vsub.f32 %v440, %v883
    %v931 = vsub.f32 %v393, %v886
    %v932 = vsub.f32 %v442, %v886
    %v933 = vsub.f32 %v396, %v889
    %v934 = vsub.f32 %v445, %v889
    %v935 = vsub.f32 %v398, %v892
    %v936 = vsub.f32 %v447, %v892
    %v937 = vsub.f32 %v401, %v895
    %v938 = vsub.f32 %v450, %v895
    %v939 = vsub.f32 %v403, %v898
    %v940 = vsub.f32 %v452, %v898
    %v941 = vsub.f32 %v406, %v901
    %v942 = vsub.f32 %v455, %v901
    %v943 = vsub.f32 %v408, %v904
    %v944 = vsub.f32 %v457, %v904
    %v945 = vsub.f32 %v411, %v907
    %v946 = vsub.f32 %v460, %v907
    %v947 = vsub.f32 %v413, %v910
    %v948 = vsub.f32 %v462, %v910
    %v949 = vsub.f32 %v416, %v913
    %v950 = vsub.f32 %v465, %v913
    %v951 = vsub.f32 %v418, %v916
    %v952 = vsub.f32 %v467, %v916
    %v953 = vsub.f32 %v421, %v919
    %v954 = vsub.f32 %v470, %v919
    %v955 = vsub.f32 %v423, %v922
    %v956 = vsub.f32 %v472, %v922
    %v957 = vsub.f32 %v426, %v925
    %v958 = vsub.f32 %v475, %v925
    %v959 = vsub.f32 %v428, %v928
    %v960 = vsub.f32 %v477, %v928
    %v961 = vmul.f32 %v929, 1.442695
    %v962 = vpow.pop %v961
    %v963 = vmul.f32 %v930, 1.442695
    %v964 = vpow.pop %v963
    %v965 = vmul.f32 %v931, 1.442695
    %v966 = vpow.pop %v965
    %v967 = vmul.f32 %v932, 1.442695
    %v968 = vpow.pop %v967
    %v969 = vmul.f32 %v933, 1.442695
    %v970 = vpow.pop %v969
    %v971 = vmul.f32 %v934, 1.442695
    %v972 = vpow.pop %v971
    %v973 = vmul.f32 %v935, 1.442695
    %v974 = vpow.pop %v973
    %v975 = vmul.f32 %v936, 1.442695
    %v976 = vpow.pop %v975
    %v977 = vmul.f32 %v937, 1.442695
    %v978 = vpow.pop %v977
    %v979 = vmul.f32 %v938, 1.442695
    %v980 = vpow.pop %v979
    %v981 = vmul.f32 %v939, 1.442695
    %v982 = vpow.pop %v981
    %v983 = vmul.f32 %v940, 1.442695
    %v984 = vpow.pop %v983
    %v985 = vmul.f32 %v941, 1.442695
    %v986 = vpow.pop %v985
    %v987 = vmul.f32 %v942, 1.442695
    %v988 = vpow.pop %v987
    %v989 = vmul.f32 %v943, 1.442695
    %v990 = vpow.pop %v989
    %v991 = vmul.f32 %v944, 1.442695
    %v992 = vpow.pop %v991
    %v993 = vmul.f32 %v945, 1.442695
    %v994 = vpow.pop %v993
    %v995 = vmul.f32 %v946, 1.442695
    %v996 = vpow.pop %v995
    %v997 = vmul.f32 %v947, 1.442695
    %v998 = vpow.pop %v997
    %v999 = vmul.f32 %v948, 1.442695
    %v1000 = vpow.pop %v999
    %v1001 = vmul.f32 %v949, 1.442695
    %v1002 = vpow.pop %v1001
    %v1003 = vmul.f32 %v950, 1.442695
    %v1004 = vpow.pop %v1003
    %v1005 = vmul.f32 %v951, 1.442695
    %v1006 = vpow.pop %v1005
    %v1007 = vmul.f32 %v952, 1.442695
    %v1008 = vpow.pop %v1007
    %v1009 = vmul.f32 %v953, 1.442695
    %v1010 = vpow.pop %v1009
    %v1011 = vmul.f32 %v954, 1.442695
    %v1012 = vpow.pop %v1011
    %v1013 = vmul.f32 %v955, 1.442695
    %v1014 = vpow.pop %v1013
    %v1015 = vmul.f32 %v956, 1.442695
    %v1016 = vpow.pop %v1015
    %v1017 = vmul.f32 %v957, 1.442695
    %v1018 = vpow.pop %v1017
    %v1019 = vmul.f32 %v958, 1.442695
    %v1020 = vpow.pop %v1019
    %v1021 = vmul.f32 %v959, 1.442695
    %v1022 = vpow.pop %v1021
    %v1023 = vmul.f32 %v960, 1.442695
    %v1024 = vpow.pop %v1023
    %v1025 = vadd.f32 %v962, %v964
    %1026 = vadd.xlane.f32.xlu0 %v1025
    %v1027 = vpop.xlane.xlu0 %1026
    %v1028 = vadd.f32 %v966, %v968
    %1029 = vadd.xlane.f32.xlu0 %v1028
    %v1030 = vpop.xlane.xlu0 %1029
    %v1031 = vadd.f32 %v970, %v972
    %1032 = vadd.xlane.f32.xlu0 %v1031
    %v1033 = vpop.xlane.xlu0 %1032
    %v1034 = vadd.f32 %v974, %v976
    %1035 = vadd.xlane.f32.xlu0 %v1034
    %v1036 = vpop.xlane.xlu0 %1035
    %v1037 = vadd.f32 %v978, %v980
    %1038 = vadd.xlane.f32.xlu0 %v1037
    %v1039 = vpop.xlane.xlu0 %1038
    %v1040 = vadd.f32 %v982, %v984
    %1041 = vadd.xlane.f32.xlu0 %v1040
    %v1042 = vpop.xlane.xlu0 %1041
    %v1043 = vadd.f32 %v986, %v988
    %1044 = vadd.xlane.f32.xlu0 %v1043
    %v1045 = vpop.xlane.xlu0 %1044
    %v1046 = vadd.f32 %v990, %v992
    %1047 = vadd.xlane.f32.xlu0 %v1046
    %v1048 = vpop.xlane.xlu0 %1047
    %v1049 = vadd.f32 %v994, %v996
    %1050 = vadd.xlane.f32.xlu0 %v1049
    %v1051 = vpop.xlane.xlu0 %1050
    %v1052 = vadd.f32 %v998, %v1000
    %1053 = vadd.xlane.f32.xlu0 %v1052
    %v1054 = vpop.xlane.xlu0 %1053
    %v1055 = vadd.f32 %v1002, %v1004
    %1056 = vadd.xlane.f32.xlu0 %v1055
    %v1057 = vpop.xlane.xlu0 %1056
    %v1058 = vadd.f32 %v1006, %v1008
    %1059 = vadd.xlane.f32.xlu0 %v1058
    %v1060 = vpop.xlane.xlu0 %1059
    %v1061 = vadd.f32 %v1010, %v1012
    %1062 = vadd.xlane.f32.xlu0 %v1061
    %v1063 = vpop.xlane.xlu0 %1062
    %v1064 = vadd.f32 %v1014, %v1016
    %1065 = vadd.xlane.f32.xlu0 %v1064
    %v1066 = vpop.xlane.xlu0 %1065
    %v1067 = vadd.f32 %v1018, %v1020
    %1068 = vadd.xlane.f32.xlu0 %v1067
    %v1069 = vpop.xlane.xlu0 %1068
    %v1070 = vadd.f32 %v1022, %v1024
    %1071 = vadd.xlane.f32.xlu0 %v1070
    %v1072 = vpop.xlane.xlu0 %1071
    %v1073 = vrcp.pop %v1027
    %v1074 = vrcp.pop %v1030
    %v1075 = vrcp.pop %v1033
    %v1076 = vrcp.pop %v1036
    %v1077 = vrcp.pop %v1039
    %v1078 = vrcp.pop %v1042
    %v1079 = vrcp.pop %v1045
    %v1080 = vrcp.pop %v1048
    %v1081 = vrcp.pop %v1051
    %v1082 = vrcp.pop %v1054
    %v1083 = vrcp.pop %v1057
    %v1084 = vrcp.pop %v1060
    %v1085 = vrcp.pop %v1063
    %v1086 = vrcp.pop %v1066
    %v1087 = vrcp.pop %v1069
    %v1088 = vrcp.pop %v1072
    %v1089 = vmul.f32 %v962, %v1073
    %v1090 = vmul.f32 %v964, %v1073
    %v1091 = vmul.f32 %v966, %v1074
    %v1092 = vmul.f32 %v968, %v1074
    %v1093 = vmul.f32 %v970, %v1075
    %v1094 = vmul.f32 %v972, %v1075
    %v1095 = vmul.f32 %v974, %v1076
    %v1096 = vmul.f32 %v976, %v1076
    %v1097 = vmul.f32 %v978, %v1077
    %v1098 = vmul.f32 %v980, %v1077
    %v1099 = vmul.f32 %v982, %v1078
    %v1100 = vmul.f32 %v984, %v1078
    %v1101 = vmul.f32 %v986, %v1079
    %v1102 = vmul.f32 %v988, %v1079
    %v1103 = vmul.f32 %v990, %v1080
    %v1104 = vmul.f32 %v992, %v1080
    %v1105 = vmul.f32 %v994, %v1081
    %v1106 = vmul.f32 %v996, %v1081
    %v1107 = vmul.f32 %v998, %v1082
    %v1108 = vmul.f32 %v1000, %v1082
    %v1109 = vmul.f32 %v1002, %v1083
    %v1110 = vmul.f32 %v1004, %v1083
    %v1111 = vmul.f32 %v1006, %v1084
    %v1112 = vmul.f32 %v1008, %v1084
    %v1113 = vmul.f32 %v1010, %v1085
    %v1114 = vmul.f32 %v1012, %v1085
    %v1115 = vmul.f32 %v1014, %v1086
    %v1116 = vmul.f32 %v1016, %v1086
    %v1117 = vmul.f32 %v1018, %v1087
    %v1118 = vmul.f32 %v1020, %v1087
    %v1119 = vmul.f32 %v1022, %v1088
    %v1120 = vmul.f32 %v1024, %v1088
    %v1121 = vpack.c.bf16 %v555, %v553
    %v1122 = vpack.c.bf16 %v604, %v602
    %v1123 = vpack.c.bf16 %v560, %v558
    %v1124 = vpack.c.bf16 %v609, %v607
    %v1125 = vpack.c.bf16 %v565, %v563
    %v1126 = vpack.c.bf16 %v614, %v612
    %v1127 = vpack.c.bf16 %v570, %v568
    %v1128 = vpack.c.bf16 %v619, %v617
    %v1129 = vpack.c.bf16 %v575, %v573
    %v1130 = vpack.c.bf16 %v624, %v622
    %v1131 = vpack.c.bf16 %v580, %v578
    %v1132 = vpack.c.bf16 %v629, %v627
    %v1133 = vpack.c.bf16 %v585, %v583
    %v1134 = vpack.c.bf16 %v634, %v632
    %v1135 = vpack.c.bf16 %v590, %v588
    %v1136 = vpack.c.bf16 %v639, %v637
    %v1137 = vpack.c.bf16 %v1091, %v1089
    %v1138 = vpack.c.bf16 %v1092, %v1090
    %v1139 = vpack.c.bf16 %v1095, %v1093
    %v1140 = vpack.c.bf16 %v1096, %v1094
    %v1141 = vpack.c.bf16 %v1099, %v1097
    %v1142 = vpack.c.bf16 %v1100, %v1098
    %v1143 = vpack.c.bf16 %v1103, %v1101
    %v1144 = vpack.c.bf16 %v1104, %v1102
    %v1145 = vpack.c.bf16 %v1107, %v1105
    %v1146 = vpack.c.bf16 %v1108, %v1106
    %v1147 = vpack.c.bf16 %v1111, %v1109
    %v1148 = vpack.c.bf16 %v1112, %v1110
    %v1149 = vpack.c.bf16 %v1115, %v1113
    %v1150 = vpack.c.bf16 %v1116, %v1114
    %v1151 = vpack.c.bf16 %v1119, %v1117
    %v1152 = vpack.c.bf16 %v1120, %v1118
    %1153 = vmatpush.bf16.xpose.msra.mxu0 %v1151
    %1154 = vmatpush.bf16.xpose.msra.mxu0 %v1149
    %1155 = vmatpush.bf16.xpose.msra.mxu0 %v1147
    %1156 = vmatpush.bf16.xpose.msra.mxu0 %v1145
    %1157 = vmatpush.bf16.xpose.msra.mxu0 %v1143
    %1158 = vmatpush.bf16.xpose.msra.mxu0 %v1141
    %1159 = vmatpush.bf16.xpose.msra.mxu0 %v1139
    %1160 = vmatpush.bf16.xpose.msra.mxu0 %v1137
    %1161 = vmatmul.bf16.gmra.mxu0 %v1121
    %v1162 = vpop.f32.mrf.mxu0
    %v1163 = vadd.f32 0.0, %v1162
    %v1164 = vpop.f32.mrf.mxu0
    %v1165 = vadd.f32 0.0, %v1164
    %1166 = vmatmul.bf16.gmra.mxu0 %v1123
    %v1167 = vpop.f32.mrf.mxu0
    %v1168 = vadd.f32 0.0, %v1167
    %v1169 = vpop.f32.mrf.mxu0
    %v1170 = vadd.f32 0.0, %v1169
    %1171 = vmatmul.bf16.gmra.mxu0 %v1125
    %v1172 = vpop.f32.mrf.mxu0
    %v1173 = vadd.f32 0.0, %v1172
    %v1174 = vpop.f32.mrf.mxu0
    %v1175 = vadd.f32 0.0, %v1174
    %1176 = vmatmul.bf16.gmra.mxu0 %v1127
    %v1177 = vpop.f32.mrf.mxu0
    %v1178 = vadd.f32 0.0, %v1177
    %v1179 = vpop.f32.mrf.mxu0
    %v1180 = vadd.f32 0.0, %v1179
    %1181 = vmatmul.bf16.gmra.mxu0 %v1129
    %v1182 = vpop.f32.mrf.mxu0
    %v1183 = vadd.f32 0.0, %v1182
    %v1184 = vpop.f32.mrf.mxu0
    %v1185 = vadd.f32 0.0, %v1184
    %1186 = vmatmul.bf16.gmra.mxu0 %v1131
    %v1187 = vpop.f32.mrf.mxu0
    %v1188 = vadd.f32 0.0, %v1187
    %v1189 = vpop.f32.mrf.mxu0
    %v1190 = vadd.f32 0.0, %v1189
    %1191 = vmatmul.bf16.gmra.mxu0 %v1133
    %v1192 = vpop.f32.mrf.mxu0
    %v1193 = vadd.f32 0.0, %v1192
    %v1194 = vpop.f32.mrf.mxu0
    %v1195 = vadd.f32 0.0, %v1194
    %1196 = vmatmul.bf16.gmra.mxu0 %v1135
    %v1197 = vpop.f32.mrf.mxu0
    %v1198 = vadd.f32 0.0, %v1197
    %v1199 = vpop.f32.mrf.mxu0
    %v1200 = vadd.f32 0.0, %v1199
    %1201 = vdwg.mxu0
    %1202 = vmatpush.bf16.xpose.msra.mxu0 %v1152
    %1203 = vmatpush.bf16.xpose.msra.mxu0 %v1150
    %1204 = vmatpush.bf16.xpose.msra.mxu0 %v1148
    %1205 = vmatpush.bf16.xpose.msra.mxu0 %v1146
    %1206 = vmatpush.bf16.xpose.msra.mxu0 %v1144
    %1207 = vmatpush.bf16.xpose.msra.mxu0 %v1142
    %1208 = vmatpush.bf16.xpose.msra.mxu0 %v1140
    %1209 = vmatpush.bf16.xpose.msra.mxu0 %v1138
    %1210 = vmatmul.bf16.gmra.mxu0 %v1122
    %v1211 = vpop.f32.mrf.mxu0
    %v1212 = vadd.f32 %v1163, %v1211
    %v1213 = vpop.f32.mrf.mxu0
    %v1214 = vadd.f32 %v1165, %v1213
    %1215 = vmatmul.bf16.gmra.mxu0 %v1124
    %v1216 = vpop.f32.mrf.mxu0
    %v1217 = vadd.f32 %v1168, %v1216
    %v1218 = vpop.f32.mrf.mxu0
    %v1219 = vadd.f32 %v1170, %v1218
    %1220 = vmatmul.bf16.gmra.mxu0 %v1126
    %v1221 = vpop.f32.mrf.mxu0
    %v1222 = vadd.f32 %v1173, %v1221
    %v1223 = vpop.f32.mrf.mxu0
    %v1224 = vadd.f32 %v1175, %v1223
    %1225 = vmatmul.bf16.gmra.mxu0 %v1128
    %v1226 = vpop.f32.mrf.mxu0
    %v1227 = vadd.f32 %v1178, %v1226
    %v1228 = vpop.f32.mrf.mxu0
    %v1229 = vadd.f32 %v1180, %v1228
    %1230 = vmatmul.bf16.gmra.mxu0 %v1130
    %v1231 = vpop.f32.mrf.mxu0
    %v1232 = vadd.f32 %v1183, %v1231
    %v1233 = vpop.f32.mrf.mxu0
    %v1234 = vadd.f32 %v1185, %v1233
    %1235 = vmatmul.bf16.gmra.mxu0 %v1132
    %v1236 = vpop.f32.mrf.mxu0
    %v1237 = vadd.f32 %v1188, %v1236
    %v1238 = vpop.f32.mrf.mxu0
    %v1239 = vadd.f32 %v1190, %v1238
    %1240 = vmatmul.bf16.gmra.mxu0 %v1134
    %v1241 = vpop.f32.mrf.mxu0
    %v1242 = vadd.f32 %v1193, %v1241
    %v1243 = vpop.f32.mrf.mxu0
    %v1244 = vadd.f32 %v1195, %v1243
    %1245 = vmatmul.bf16.gmra.mxu0 %v1136
    %v1246 = vpop.f32.mrf.mxu0
    %v1247 = vadd.f32 %v1198, %v1246
    %v1248 = vpop.f32.mrf.mxu0
    %v1249 = vadd.f32 %v1200, %v1248
    %1250 = vdwg.mxu0
    %v1251 = vmul.f32 %v1212, %v114
    %v1252 = vmul.f32 %v1214, %v115
    %v1253 = vmul.f32 %v1217, %v116
    %v1254 = vmul.f32 %v1219, %v117
    %v1255 = vmul.f32 %v1222, %v118
    %v1256 = vmul.f32 %v1224, %v119
    %v1257 = vmul.f32 %v1227, %v120
    %v1258 = vmul.f32 %v1229, %v121
    %v1259 = vmul.f32 %v1232, %v122
    %v1260 = vmul.f32 %v1234, %v123
    %v1261 = vmul.f32 %v1237, %v124
    %v1262 = vmul.f32 %v1239, %v125
    %v1263 = vmul.f32 %v1242, %v126
    %v1264 = vmul.f32 %v1244, %v127
    %v1265 = vmul.f32 %v1247, %v128
    %v1266 = vmul.f32 %v1249, %v129
    %v1267 = vpack.c.bf16 %v1252, %v1251
    %v1268 = vpack.c.bf16 %v1254, %v1253
    %v1269 = vpack.c.bf16 %v1256, %v1255
    %v1270 = vpack.c.bf16 %v1258, %v1257
    %v1271 = vpack.c.bf16 %v1260, %v1259
    %v1272 = vpack.c.bf16 %v1262, %v1261
    %v1273 = vpack.c.bf16 %v1264, %v1263
    %v1274 = vpack.c.bf16 %v1266, %v1265
    %v1275 = vpack.c.bf16 %v750, %v746
    %v1276 = vpack.c.bf16 %v752, %v748
    %v1277 = vpack.c.bf16 %v758, %v754
    %v1278 = vpack.c.bf16 %v760, %v756
    %v1279 = vpack.c.bf16 %v766, %v762
    %v1280 = vpack.c.bf16 %v768, %v764
    %v1281 = vpack.c.bf16 %v774, %v770
    %v1282 = vpack.c.bf16 %v776, %v772
    %v1283 = vpack.c.bf16 %v782, %v778
    %v1284 = vpack.c.bf16 %v784, %v780
    %v1285 = vpack.c.bf16 %v790, %v786
    %v1286 = vpack.c.bf16 %v792, %v788
    %v1287 = vpack.c.bf16 %v798, %v794
    %v1288 = vpack.c.bf16 %v800, %v796
    %v1289 = vpack.c.bf16 %v806, %v802
    %v1290 = vpack.c.bf16 %v808, %v804
    %1291 = vmatpush.bf16.msra.mxu0 %v1289
    %1292 = vmatpush.bf16.msra.mxu0 %v1287
    %1293 = vmatpush.bf16.msra.mxu0 %v1285
    %1294 = vmatpush.bf16.msra.mxu0 %v1283
    %1295 = vmatpush.bf16.msra.mxu0 %v1281
    %1296 = vmatpush.bf16.msra.mxu0 %v1279
    %1297 = vmatpush.bf16.msra.mxu0 %v1277
    %1298 = vmatpush.bf16.msra.mxu0 %v1275
    %1299 = vmatmul.bf16.gmra.mxu0 %v1267
    %v1300 = vpop.f32.mrf.mxu0
    %v1301 = vadd.f32 0.0, %v1300
    %v1302 = vpop.f32.mrf.mxu0
    %v1303 = vadd.f32 0.0, %v1302
    %1304 = vmatmul.bf16.gmra.mxu0 %v1268
    %v1305 = vpop.f32.mrf.mxu0
    %v1306 = vadd.f32 0.0, %v1305
    %v1307 = vpop.f32.mrf.mxu0
    %v1308 = vadd.f32 0.0, %v1307
    %1309 = vmatmul.bf16.gmra.mxu0 %v1269
    %v1310 = vpop.f32.mrf.mxu0
    %v1311 = vadd.f32 0.0, %v1310
    %v1312 = vpop.f32.mrf.mxu0
    %v1313 = vadd.f32 0.0, %v1312
    %1314 = vmatmul.bf16.gmra.mxu0 %v1270
    %v1315 = vpop.f32.mrf.mxu0
    %v1316 = vadd.f32 0.0, %v1315
    %v1317 = vpop.f32.mrf.mxu0
    %v1318 = vadd.f32 0.0, %v1317
    %1319 = vmatmul.bf16.gmra.mxu0 %v1271
    %v1320 = vpop.f32.mrf.mxu0
    %v1321 = vadd.f32 0.0, %v1320
    %v1322 = vpop.f32.mrf.mxu0
    %v1323 = vadd.f32 0.0, %v1322
    %1324 = vmatmul.bf16.gmra.mxu0 %v1272
    %v1325 = vpop.f32.mrf.mxu0
    %v1326 = vadd.f32 0.0, %v1325
    %v1327 = vpop.f32.mrf.mxu0
    %v1328 = vadd.f32 0.0, %v1327
    %1329 = vmatmul.bf16.gmra.mxu0 %v1273
    %v1330 = vpop.f32.mrf.mxu0
    %v1331 = vadd.f32 0.0, %v1330
    %v1332 = vpop.f32.mrf.mxu0
    %v1333 = vadd.f32 0.0, %v1332
    %1334 = vmatmul.bf16.gmra.mxu0 %v1274
    %v1335 = vpop.f32.mrf.mxu0
    %v1336 = vadd.f32 0.0, %v1335
    %v1337 = vpop.f32.mrf.mxu0
    %v1338 = vadd.f32 0.0, %v1337
    %1339 = vdwg.mxu0
    %1340 = vmatpush.bf16.msra.mxu0 %v1290
    %1341 = vmatpush.bf16.msra.mxu0 %v1288
    %1342 = vmatpush.bf16.msra.mxu0 %v1286
    %1343 = vmatpush.bf16.msra.mxu0 %v1284
    %1344 = vmatpush.bf16.msra.mxu0 %v1282
    %1345 = vmatpush.bf16.msra.mxu0 %v1280
    %1346 = vmatpush.bf16.msra.mxu0 %v1278
    %1347 = vmatpush.bf16.msra.mxu0 %v1276
    %1348 = vmatmul.bf16.gmra.mxu0 %v1267
    %v1349 = vpop.f32.mrf.mxu0
    %v1350 = vadd.f32 0.0, %v1349
    %v1351 = vpop.f32.mrf.mxu0
    %v1352 = vadd.f32 0.0, %v1351
    %1353 = vmatmul.bf16.gmra.mxu0 %v1268
    %v1354 = vpop.f32.mrf.mxu0
    %v1355 = vadd.f32 0.0, %v1354
    %v1356 = vpop.f32.mrf.mxu0
    %v1357 = vadd.f32 0.0, %v1356
    %1358 = vmatmul.bf16.gmra.mxu0 %v1269
    %v1359 = vpop.f32.mrf.mxu0
    %v1360 = vadd.f32 0.0, %v1359
    %v1361 = vpop.f32.mrf.mxu0
    %v1362 = vadd.f32 0.0, %v1361
    %1363 = vmatmul.bf16.gmra.mxu0 %v1270
    %v1364 = vpop.f32.mrf.mxu0
    %v1365 = vadd.f32 0.0, %v1364
    %v1366 = vpop.f32.mrf.mxu0
    %v1367 = vadd.f32 0.0, %v1366
    %1368 = vmatmul.bf16.gmra.mxu0 %v1271
    %v1369 = vpop.f32.mrf.mxu0
    %v1370 = vadd.f32 0.0, %v1369
    %v1371 = vpop.f32.mrf.mxu0
    %v1372 = vadd.f32 0.0, %v1371
    %1373 = vmatmul.bf16.gmra.mxu0 %v1272
    %v1374 = vpop.f32.mrf.mxu0
    %v1375 = vadd.f32 0.0, %v1374
    %v1376 = vpop.f32.mrf.mxu0
    %v1377 = vadd.f32 0.0, %v1376
    %1378 = vmatmul.bf16.gmra.mxu0 %v1273
    %v1379 = vpop.f32.mrf.mxu0
    %v1380 = vadd.f32 0.0, %v1379
    %v1381 = vpop.f32.mrf.mxu0
    %v1382 = vadd.f32 0.0, %v1381
    %1383 = vmatmul.bf16.gmra.mxu0 %v1274
    %v1384 = vpop.f32.mrf.mxu0
    %v1385 = vadd.f32 0.0, %v1384
    %v1386 = vpop.f32.mrf.mxu0
    %v1387 = vadd.f32 0.0, %v1386
    %1388 = vdwg.mxu0
    %v1389 = vrcp.pop %v817
    %v1390 = vrcp.pop %v826
    %v1391 = vrcp.pop %v835
    %v1392 = vrcp.pop %v844
    %v1393 = vrcp.pop %v853
    %v1394 = vrcp.pop %v862
    %v1395 = vrcp.pop %v871
    %v1396 = vrcp.pop %v880
    %v1397 = vmul.f32 %v1301, %v1389
    %v1398 = vmul.f32 %v1350, %v1390
    %v1399 = vmul.f32 %v1303, %v1389
    %v1400 = vmul.f32 %v1352, %v1390
    %v1401 = vmul.f32 %v1306, %v1389
    %v1402 = vmul.f32 %v1355, %v1390
    %v1403 = vmul.f32 %v1308, %v1389
    %v1404 = vmul.f32 %v1357, %v1390
    %v1405 = vmul.f32 %v1311, %v1391
    %v1406 = vmul.f32 %v1360, %v1392
    %v1407 = vmul.f32 %v1313, %v1391
    %v1408 = vmul.f32 %v1362, %v1392
    %v1409 = vmul.f32 %v1316, %v1391
    %v1410 = vmul.f32 %v1365, %v1392
    %v1411 = vmul.f32 %v1318, %v1391
    %v1412 = vmul.f32 %v1367, %v1392
    %v1413 = vmul.f32 %v1321, %v1393
    %v1414 = vmul.f32 %v1370, %v1394
    %v1415 = vmul.f32 %v1323, %v1393
    %v1416 = vmul.f32 %v1372, %v1394
    %v1417 = vmul.f32 %v1326, %v1393
    %v1418 = vmul.f32 %v1375, %v1394
    %v1419 = vmul.f32 %v1328, %v1393
    %v1420 = vmul.f32 %v1377, %v1394
    %v1421 = vmul.f32 %v1331, %v1395
    %v1422 = vmul.f32 %v1380, %v1396
    %v1423 = vmul.f32 %v1333, %v1395
    %v1424 = vmul.f32 %v1382, %v1396
    %v1425 = vmul.f32 %v1336, %v1395
    %v1426 = vmul.f32 %v1385, %v1396
    %v1427 = vmul.f32 %v1338, %v1395
    %v1428 = vmul.f32 %v1387, %v1396
    %v1429 = vpack.c.bf16 %v1399, %v1397
    %v1430 = vpack.c.bf16 %v1400, %v1398
    %v1431 = vpack.c.bf16 %v1403, %v1401
    %v1432 = vpack.c.bf16 %v1404, %v1402
    %v1433 = vpack.c.bf16 %v1407, %v1405
    %v1434 = vpack.c.bf16 %v1408, %v1406
    %v1435 = vpack.c.bf16 %v1411, %v1409
    %v1436 = vpack.c.bf16 %v1412, %v1410
    %v1437 = vpack.c.bf16 %v1415, %v1413
    %v1438 = vpack.c.bf16 %v1416, %v1414
    %v1439 = vpack.c.bf16 %v1419, %v1417
    %v1440 = vpack.c.bf16 %v1420, %v1418
    %v1441 = vpack.c.bf16 %v1423, %v1421
    %v1442 = vpack.c.bf16 %v1424, %v1422
    %v1443 = vpack.c.bf16 %v1427, %v1425
    %v1444 = vpack.c.bf16 %v1428, %v1426
    %1446 = vset.pattern.permute.xlu0 0
    %1447 = vperm.xlu0 %1446, %v90
    %v1448 = vpop.permute.xlu0 %1447
    %1451 = vset.pattern.permute.xlu0 0
    %1452 = vperm.xlu0 %1451, %v91
    %v1453 = vpop.permute.xlu0 %1452
    %1456 = vset.pattern.permute.xlu0 0
    %1457 = vperm.xlu0 %1456, %v92
    %v1458 = vpop.permute.xlu0 %1457
    %1461 = vset.pattern.permute.xlu0 0
    %1462 = vperm.xlu0 %1461, %v93
    %v1463 = vpop.permute.xlu0 %1462
    %1466 = vset.pattern.permute.xlu0 0
    %1467 = vperm.xlu0 %1466, %v94
    %v1468 = vpop.permute.xlu0 %1467
    %1471 = vset.pattern.permute.xlu0 0
    %1472 = vperm.xlu0 %1471, %v95
    %v1473 = vpop.permute.xlu0 %1472
    %1476 = vset.pattern.permute.xlu0 0
    %1477 = vperm.xlu0 %1476, %v96
    %v1478 = vpop.permute.xlu0 %1477
    %1481 = vset.pattern.permute.xlu0 0
    %1482 = vperm.xlu0 %1481, %v97
    %v1483 = vpop.permute.xlu0 %1482
    %v1493 = vunpack.c.l.b16 %v82
    %v1494 = vunpack.c.l.b16 %v83
    %v1495 = vunpack.c.l.b16 %v84
    %v1496 = vunpack.c.l.b16 %v85
    %v1497 = vunpack.c.l.b16 %v86
    %v1498 = vunpack.c.l.b16 %v87
    %v1499 = vunpack.c.l.b16 %v88
    %v1500 = vunpack.c.l.b16 %v89
    %v1501 = vpack.c.b16 %v1494, %v1493
    %v1502 = vpack.c.b16 %v1496, %v1495
    %v1503 = vpack.c.b16 %v1498, %v1497
    %v1504 = vpack.c.b16 %v1500, %v1499
    %1509 = vmatpush.bf16.msra.mxu0 %v1443
    %1510 = vmatpush.bf16.msra.mxu0 %v1441
    %1511 = vmatpush.bf16.msra.mxu0 %v1439
    %1512 = vmatpush.bf16.msra.mxu0 %v1437
    %1513 = vmatpush.bf16.msra.mxu0 %v1435
    %1514 = vmatpush.bf16.msra.mxu0 %v1433
    %1515 = vmatpush.bf16.msra.mxu0 %v1431
    %1516 = vmatpush.bf16.msra.mxu0 %v1429
    %1517 = vmatmul.bf16.gmra.mxu0 %v1501
    %v1518 = vpop.f32.mrf.mxu0
    %v1519 = vadd.f32 %v1448, %v1518
    %v1520 = vpop.f32.mrf.mxu0
    %v1521 = vadd.f32 %v1453, %v1520
    %1522 = vmatmul.bf16.gmra.mxu0 %v1502
    %v1523 = vpop.f32.mrf.mxu0
    %v1524 = vadd.f32 %v1458, %v1523
    %v1525 = vpop.f32.mrf.mxu0
    %v1526 = vadd.f32 %v1463, %v1525
    %1527 = vmatmul.bf16.gmra.mxu0 %v1503
    %v1528 = vpop.f32.mrf.mxu0
    %v1529 = vadd.f32 %v1468, %v1528
    %v1530 = vpop.f32.mrf.mxu0
    %v1531 = vadd.f32 %v1473, %v1530
    %1532 = vmatmul.bf16.gmra.mxu0 %v1504
    %v1533 = vpop.f32.mrf.mxu0
    %v1534 = vadd.f32 %v1478, %v1533
    %v1535 = vpop.f32.mrf.mxu0
    %v1536 = vadd.f32 %v1483, %v1535
    %1537 = vdwg.mxu0
    %1538 = vmatpush.bf16.msra.mxu0 %v1444
    %1539 = vmatpush.bf16.msra.mxu0 %v1442
    %1540 = vmatpush.bf16.msra.mxu0 %v1440
    %1541 = vmatpush.bf16.msra.mxu0 %v1438
    %1542 = vmatpush.bf16.msra.mxu0 %v1436
    %1543 = vmatpush.bf16.msra.mxu0 %v1434
    %1544 = vmatpush.bf16.msra.mxu0 %v1432
    %1545 = vmatpush.bf16.msra.mxu0 %v1430
    %1546 = vmatmul.bf16.gmra.mxu0 %v1501
    %v1547 = vpop.f32.mrf.mxu0
    %v1548 = vadd.f32 %v1448, %v1547
    %v1549 = vpop.f32.mrf.mxu0
    %v1550 = vadd.f32 %v1453, %v1549
    %1551 = vmatmul.bf16.gmra.mxu0 %v1502
    %v1552 = vpop.f32.mrf.mxu0
    %v1553 = vadd.f32 %v1458, %v1552
    %v1554 = vpop.f32.mrf.mxu0
    %v1555 = vadd.f32 %v1463, %v1554
    %1556 = vmatmul.bf16.gmra.mxu0 %v1503
    %v1557 = vpop.f32.mrf.mxu0
    %v1558 = vadd.f32 %v1468, %v1557
    %v1559 = vpop.f32.mrf.mxu0
    %v1560 = vadd.f32 %v1473, %v1559
    %1561 = vmatmul.bf16.gmra.mxu0 %v1504
    %v1562 = vpop.f32.mrf.mxu0
    %v1563 = vadd.f32 %v1478, %v1562
    %v1564 = vpop.f32.mrf.mxu0
    %v1565 = vadd.f32 %v1483, %v1564
    %1566 = vdwg.mxu0
    %v1567 = vadd.f32 %v1519, %v1548
    %v1568 = vadd.f32 %v1567, %v1521
    %v1569 = vadd.f32 %v1568, %v1550
    %v1570 = vadd.f32 %v1569, %v1524
    %v1571 = vadd.f32 %v1570, %v1553
    %v1572 = vadd.f32 %v1571, %v1526
    %v1573 = vadd.f32 %v1572, %v1555
    %v1574 = vadd.f32 %v1573, %v1529
    %v1575 = vadd.f32 %v1574, %v1558
    %v1576 = vadd.f32 %v1575, %v1531
    %v1577 = vadd.f32 %v1576, %v1560
    %v1578 = vadd.f32 %v1577, %v1534
    %v1579 = vadd.f32 %v1578, %v1563
    %v1580 = vadd.f32 %v1579, %v1536
    %v1581 = vadd.f32 %v1580, %v1565
    %1582 = vadd.xlane.f32.xlu0 %v1581
    %v1583 = vpop.xlane.xlu0 %1582
    %v1584 = vrot.slane %v1583, 4
    %v1585 = vadd.f32 %v1583, %v1584
    %v1586 = vrot.slane %v1585, 2
    %v1587 = vadd.f32 %v1585, %v1586
    %v1588 = vrot.slane %v1587, 1
    %v1589 = vadd.f32 %v1587, %v1588
    %s1590 = vtos %v1589
    %v1591 = vrcp.pop 16384.0
    %v1592 = vmul.f32 16384.0, %v1591
    %v1593 = vsub.f32 1.0, %v1592
    %v1594 = vmul.f32 %v1591, %v1593
    %v1595 = vadd.f32 %v1591, %v1594
    %vm1596 = vweird.f32 %v1591
    %v1597 = vsel %vm1596, %v1591, %v1595
    %s1598 = vtos %v1597
    %s1599 = smul.f32 %s1590, %s1598
    %v1600 = vstv %s1599
    %v1601 = vsub.f32 %v1519, %v1600
    %v1602 = vsub.f32 %v1548, %v1600
    %v1603 = vsub.f32 %v1521, %v1600
    %v1604 = vsub.f32 %v1550, %v1600
    %v1605 = vsub.f32 %v1524, %v1600
    %v1606 = vsub.f32 %v1553, %v1600
    %v1607 = vsub.f32 %v1526, %v1600
    %v1608 = vsub.f32 %v1555, %v1600
    %v1609 = vsub.f32 %v1529, %v1600
    %v1610 = vsub.f32 %v1558, %v1600
    %v1611 = vsub.f32 %v1531, %v1600
    %v1612 = vsub.f32 %v1560, %v1600
    %v1613 = vsub.f32 %v1534, %v1600
    %v1614 = vsub.f32 %v1563, %v1600
    %v1615 = vsub.f32 %v1536, %v1600
    %v1616 = vsub.f32 %v1565, %v1600
    %v1617 = vmul.f32 %v1601, %v1601
    %v1618 = vmul.f32 %v1602, %v1602
    %v1619 = vmul.f32 %v1603, %v1603
    %v1620 = vmul.f32 %v1604, %v1604
    %v1621 = vmul.f32 %v1605, %v1605
    %v1622 = vmul.f32 %v1606, %v1606
    %v1623 = vmul.f32 %v1607, %v1607
    %v1624 = vmul.f32 %v1608, %v1608
    %v1625 = vmul.f32 %v1609, %v1609
    %v1626 = vmul.f32 %v1610, %v1610
    %v1627 = vmul.f32 %v1611, %v1611
    %v1628 = vmul.f32 %v1612, %v1612
    %v1629 = vmul.f32 %v1613, %v1613
    %v1630 = vmul.f32 %v1614, %v1614
    %v1631 = vmul.f32 %v1615, %v1615
    %v1632 = vmul.f32 %v1616, %v1616
    %v1633 = vadd.f32 %v1617, %v1618
    %v1634 = vadd.f32 %v1633, %v1619
    %v1635 = vadd.f32 %v1634, %v1620
    %v1636 = vadd.f32 %v1635, %v1621
    %v1637 = vadd.f32 %v1636, %v1622
    %v1638 = vadd.f32 %v1637, %v1623
    %v1639 = vadd.f32 %v1638, %v1624
    %v1640 = vadd.f32 %v1639, %v1625
    %v1641 = vadd.f32 %v1640, %v1626
    %v1642 = vadd.f32 %v1641, %v1627
    %v1643 = vadd.f32 %v1642, %v1628
    %v1644 = vadd.f32 %v1643, %v1629
    %v1645 = vadd.f32 %v1644, %v1630
    %v1646 = vadd.f32 %v1645, %v1631
    %v1647 = vadd.f32 %v1646, %v1632
    %1648 = vadd.xlane.f32.xlu0 %v1647
    %v1649 = vpop.xlane.xlu0 %1648
    %v1650 = vrot.slane %v1649, 4
    %v1651 = vadd.f32 %v1649, %v1650
    %v1652 = vrot.slane %v1651, 2
    %v1653 = vadd.f32 %v1651, %v1652
    %v1654 = vrot.slane %v1653, 1
    %v1655 = vadd.f32 %v1653, %v1654
    %s1656 = vtos %v1655
    %v1657 = vrcp.pop 16384.0
    %v1658 = vmul.f32 16384.0, %v1657
    %v1659 = vsub.f32 1.0, %v1658
    %v1660 = vmul.f32 %v1657, %v1659
    %v1661 = vadd.f32 %v1657, %v1660
    %vm1662 = vweird.f32 %v1657
    %v1663 = vsel %vm1662, %v1657, %v1661
    %s1664 = vtos %v1663
    %s1665 = smul.f32 %s1656, %s1664
    %s1666 = sadd.f32 %s1665, 1e-05
    %v1667 = vstv %s1666
    %v1668 = vrsqrt.pop %v1667
    %v1669 = vmul.f32 %v1668, %v1667
    %v1670 = vmul.f32 %v1669, %v1668
    %v1671 = vmul.f32 0.5, %v1670
    %v1672 = vsub.f32 1.5, %v1671
    %v1673 = vmul.f32 %v1668, %v1672
    %vm1674 = vweird.f32 %v1667
    %vm1675 = vweird.f32 %v1668
    %vm1676 = vmor %vm1674, %vm1675
    %v1677 = vsel %vm1676, %v1668, %v1673
    %s1678 = vtos %v1677
    %v1679 = vstv %s1678
    %v1680 = vmul.f32 %v98, %v1679
    %v1681 = vmul.f32 %v99, %v1679
    %v1682 = vmul.f32 %v100, %v1679
    %v1683 = vmul.f32 %v101, %v1679
    %v1684 = vmul.f32 %v102, %v1679
    %v1685 = vmul.f32 %v103, %v1679
    %v1686 = vmul.f32 %v104, %v1679
    %v1687 = vmul.f32 %v105, %v1679
    %1689 = vset.pattern.permute.xlu0 0
    %1690 = vperm.xlu0 %1689, %v1680
    %v1691 = vpop.permute.xlu0 %1690
    %1694 = vset.pattern.permute.xlu0 0
    %1695 = vperm.xlu0 %1694, %v1681
    %v1696 = vpop.permute.xlu0 %1695
    %1699 = vset.pattern.permute.xlu0 0
    %1700 = vperm.xlu0 %1699, %v1682
    %v1701 = vpop.permute.xlu0 %1700
    %1704 = vset.pattern.permute.xlu0 0
    %1705 = vperm.xlu0 %1704, %v1683
    %v1706 = vpop.permute.xlu0 %1705
    %1709 = vset.pattern.permute.xlu0 0
    %1710 = vperm.xlu0 %1709, %v1684
    %v1711 = vpop.permute.xlu0 %1710
    %1714 = vset.pattern.permute.xlu0 0
    %1715 = vperm.xlu0 %1714, %v1685
    %v1716 = vpop.permute.xlu0 %1715
    %1719 = vset.pattern.permute.xlu0 0
    %1720 = vperm.xlu0 %1719, %v1686
    %v1721 = vpop.permute.xlu0 %1720
    %1724 = vset.pattern.permute.xlu0 0
    %1725 = vperm.xlu0 %1724, %v1687
    %v1726 = vpop.permute.xlu0 %1725
    %v1728 = vmul.f32 %v1601, %v1691
    %v1729 = vmul.f32 %v1602, %v1691
    %v1730 = vmul.f32 %v1603, %v1696
    %v1731 = vmul.f32 %v1604, %v1696
    %v1732 = vmul.f32 %v1605, %v1701
    %v1733 = vmul.f32 %v1606, %v1701
    %v1734 = vmul.f32 %v1607, %v1706
    %v1735 = vmul.f32 %v1608, %v1706
    %v1736 = vmul.f32 %v1609, %v1711
    %v1737 = vmul.f32 %v1610, %v1711
    %v1738 = vmul.f32 %v1611, %v1716
    %v1739 = vmul.f32 %v1612, %v1716
    %v1740 = vmul.f32 %v1613, %v1721
    %v1741 = vmul.f32 %v1614, %v1721
    %v1742 = vmul.f32 %v1615, %v1726
    %v1743 = vmul.f32 %v1616, %v1726
    %1745 = vset.pattern.permute.xlu0 0
    %1746 = vperm.xlu0 %1745, %v106
    %v1747 = vpop.permute.xlu0 %1746
    %1750 = vset.pattern.permute.xlu0 0
    %1751 = vperm.xlu0 %1750, %v107
    %v1752 = vpop.permute.xlu0 %1751
    %1755 = vset.pattern.permute.xlu0 0
    %1756 = vperm.xlu0 %1755, %v108
    %v1757 = vpop.permute.xlu0 %1756
    %1760 = vset.pattern.permute.xlu0 0
    %1761 = vperm.xlu0 %1760, %v109
    %v1762 = vpop.permute.xlu0 %1761
    %1765 = vset.pattern.permute.xlu0 0
    %1766 = vperm.xlu0 %1765, %v110
    %v1767 = vpop.permute.xlu0 %1766
    %1770 = vset.pattern.permute.xlu0 0
    %1771 = vperm.xlu0 %1770, %v111
    %v1772 = vpop.permute.xlu0 %1771
    %1775 = vset.pattern.permute.xlu0 0
    %1776 = vperm.xlu0 %1775, %v112
    %v1777 = vpop.permute.xlu0 %1776
    %1780 = vset.pattern.permute.xlu0 0
    %1781 = vperm.xlu0 %1780, %v113
    %v1782 = vpop.permute.xlu0 %1781
    %v1784 = vadd.f32 %v1728, %v1747
    %v1785 = vadd.f32 %v1729, %v1747
    %v1786 = vadd.f32 %v1730, %v1752
    %v1787 = vadd.f32 %v1731, %v1752
    %v1788 = vadd.f32 %v1732, %v1757
    %v1789 = vadd.f32 %v1733, %v1757
    %v1790 = vadd.f32 %v1734, %v1762
    %v1791 = vadd.f32 %v1735, %v1762
    %v1792 = vadd.f32 %v1736, %v1767
    %v1793 = vadd.f32 %v1737, %v1767
    %v1794 = vadd.f32 %v1738, %v1772
    %v1795 = vadd.f32 %v1739, %v1772
    %v1796 = vadd.f32 %v1740, %v1777
    %v1797 = vadd.f32 %v1741, %v1777
    %v1798 = vadd.f32 %v1742, %v1782
    %v1799 = vadd.f32 %v1743, %v1782
    %1800 = vst [vmem:[#allocation2] sm:$0xff] %v1784
    %1801 = vst [vmem:[#allocation2 + $0x8] sm:$0xff] %v1785
    %1802 = vst [vmem:[#allocation2 + $0x10] sm:$0xff] %v1786
    %1803 = vst [vmem:[#allocation2 + $0x18] sm:$0xff] %v1787
    %1804 = vst [vmem:[#allocation2 + $0x20] sm:$0xff] %v1788
    %1805 = vst [vmem:[#allocation2 + $0x28] sm:$0xff] %v1789
    %1806 = vst [vmem:[#allocation2 + $0x30] sm:$0xff] %v1790
    %1807 = vst [vmem:[#allocation2 + $0x38] sm:$0xff] %v1791
    %1808 = vst [vmem:[#allocation2 + $0x40] sm:$0xff] %v1792
    %1809 = vst [vmem:[#allocation2 + $0x48] sm:$0xff] %v1793
    %1810 = vst [vmem:[#allocation2 + $0x50] sm:$0xff] %v1794
    %1811 = vst [vmem:[#allocation2 + $0x58] sm:$0xff] %v1795
    %1812 = vst [vmem:[#allocation2 + $0x60] sm:$0xff] %v1796
    %1813 = vst [vmem:[#allocation2 + $0x68] sm:$0xff] %v1797
    %1814 = vst [vmem:[#allocation2 + $0x70] sm:$0xff] %v1798
    %1815 = vst [vmem:[#allocation2 + $0x78] sm:$0xff] %v1799
    %s1816 = scalar_lea.vmem %s0, 128
    %v1817 = vld [vmem:[%s1816] sm:$0xff]
    %v1818 = vld [vmem:[%s1816 + $0x8] sm:$0xff]
    %v1819 = vld [vmem:[%s1816 + $0x10] sm:$0xff]
    %v1820 = vld [vmem:[%s1816 + $0x18] sm:$0xff]
    %v1821 = vld [vmem:[%s1816 + $0x20] sm:$0xff]
    %v1822 = vld [vmem:[%s1816 + $0x28] sm:$0xff]
    %v1823 = vld [vmem:[%s1816 + $0x30] sm:$0xff]
    %v1824 = vld [vmem:[%s1816 + $0x38] sm:$0xff]
    %v1825 = vld [vmem:[%s1816 + $0x40] sm:$0xff]
    %v1826 = vld [vmem:[%s1816 + $0x48] sm:$0xff]
    %v1827 = vld [vmem:[%s1816 + $0x50] sm:$0xff]
    %v1828 = vld [vmem:[%s1816 + $0x58] sm:$0xff]
    %v1829 = vld [vmem:[%s1816 + $0x60] sm:$0xff]
    %v1830 = vld [vmem:[%s1816 + $0x68] sm:$0xff]
    %v1831 = vld [vmem:[%s1816 + $0x70] sm:$0xff]
    %v1832 = vld [vmem:[%s1816 + $0x78] sm:$0xff]
    %v1833 = vpack.c.bf16 %v1819, %v1817
    %v1834 = vpack.c.bf16 %v1820, %v1818
    %v1835 = vpack.c.bf16 %v1823, %v1821
    %v1836 = vpack.c.bf16 %v1824, %v1822
    %v1837 = vpack.c.bf16 %v1827, %v1825
    %v1838 = vpack.c.bf16 %v1828, %v1826
    %v1839 = vpack.c.bf16 %v1831, %v1829
    %v1840 = vpack.c.bf16 %v1832, %v1830
    %1841 = vmatpush.bf16.msra.mxu0 0
    %1842 = vmatpush.bf16.msra.mxu0 0
    %1843 = vmatpush.bf16.msra.mxu0 0
    %1844 = vmatpush.bf16.msra.mxu0 0
    %1845 = vmatpush.bf16.msra.mxu0 %v1839
    %1846 = vmatpush.bf16.msra.mxu0 %v1837
    %1847 = vmatpush.bf16.msra.mxu0 %v1835
    %1848 = vmatpush.bf16.msra.mxu0 %v1833
    %1849 = vmatmul.bf16.gmra.mxu0 %v196
    %v1850 = vpop.f32.mrf.mxu0
    %v1851 = vadd.f32 0.0, %v1850
    %v1852 = vpop.f32.mrf.mxu0
    %v1853 = vadd.f32 0.0, %v1852
    %1854 = vmatmul.bf16.gmra.mxu0 %v199
    %v1855 = vpop.f32.mrf.mxu0
    %v1856 = vadd.f32 0.0, %v1855
    %v1857 = vpop.f32.mrf.mxu0
    %v1858 = vadd.f32 0.0, %v1857
    %1859 = vmatmul.bf16.gmra.mxu0 %v202
    %v1860 = vpop.f32.mrf.mxu0
    %v1861 = vadd.f32 0.0, %v1860
    %v1862 = vpop.f32.mrf.mxu0
    %v1863 = vadd.f32 0.0, %v1862
    %1864 = vmatmul.bf16.gmra.mxu0 %v205
    %v1865 = vpop.f32.mrf.mxu0
    %v1866 = vadd.f32 0.0, %v1865
    %v1867 = vpop.f32.mrf.mxu0
    %v1868 = vadd.f32 0.0, %v1867
    %1869 = vmatmul.bf16.gmra.mxu0 %v208
    %v1870 = vpop.f32.mrf.mxu0
    %v1871 = vadd.f32 0.0, %v1870
    %v1872 = vpop.f32.mrf.mxu0
    %v1873 = vadd.f32 0.0, %v1872
    %1874 = vmatmul.bf16.gmra.mxu0 %v211
    %v1875 = vpop.f32.mrf.mxu0
    %v1876 = vadd.f32 0.0, %v1875
    %v1877 = vpop.f32.mrf.mxu0
    %v1878 = vadd.f32 0.0, %v1877
    %1879 = vmatmul.bf16.gmra.mxu0 %v214
    %v1880 = vpop.f32.mrf.mxu0
    %v1881 = vadd.f32 0.0, %v1880
    %v1882 = vpop.f32.mrf.mxu0
    %v1883 = vadd.f32 0.0, %v1882
    %1884 = vmatmul.bf16.gmra.mxu0 %v217
    %v1885 = vpop.f32.mrf.mxu0
    %v1886 = vadd.f32 0.0, %v1885
    %v1887 = vpop.f32.mrf.mxu0
    %v1888 = vadd.f32 0.0, %v1887
    %1889 = vdwg.mxu0
    %1890 = vmatpush.bf16.msra.mxu0 0
    %1891 = vmatpush.bf16.msra.mxu0 0
    %1892 = vmatpush.bf16.msra.mxu0 0
    %1893 = vmatpush.bf16.msra.mxu0 0
    %1894 = vmatpush.bf16.msra.mxu0 %v1840
    %1895 = vmatpush.bf16.msra.mxu0 %v1838
    %1896 = vmatpush.bf16.msra.mxu0 %v1836
    %1897 = vmatpush.bf16.msra.mxu0 %v1834
    %1898 = vmatmul.bf16.gmra.mxu0 %v196
    %v1899 = vpop.f32.mrf.mxu0
    %v1900 = vadd.f32 0.0, %v1899
    %v1901 = vpop.f32.mrf.mxu0
    %v1902 = vadd.f32 0.0, %v1901
    %1903 = vmatmul.bf16.gmra.mxu0 %v199
    %v1904 = vpop.f32.mrf.mxu0
    %v1905 = vadd.f32 0.0, %v1904
    %v1906 = vpop.f32.mrf.mxu0
    %v1907 = vadd.f32 0.0, %v1906
    %1908 = vmatmul.bf16.gmra.mxu0 %v202
    %v1909 = vpop.f32.mrf.mxu0
    %v1910 = vadd.f32 0.0, %v1909
    %v1911 = vpop.f32.mrf.mxu0
    %v1912 = vadd.f32 0.0, %v1911
    %1913 = vmatmul.bf16.gmra.mxu0 %v205
    %v1914 = vpop.f32.mrf.mxu0
    %v1915 = vadd.f32 0.0, %v1914
    %v1916 = vpop.f32.mrf.mxu0
    %v1917 = vadd.f32 0.0, %v1916
    %1918 = vmatmul.bf16.gmra.mxu0 %v208
    %v1919 = vpop.f32.mrf.mxu0
    %v1920 = vadd.f32 0.0, %v1919
    %v1921 = vpop.f32.mrf.mxu0
    %v1922 = vadd.f32 0.0, %v1921
    %1923 = vmatmul.bf16.gmra.mxu0 %v211
    %v1924 = vpop.f32.mrf.mxu0
    %v1925 = vadd.f32 0.0, %v1924
    %v1926 = vpop.f32.mrf.mxu0
    %v1927 = vadd.f32 0.0, %v1926
    %1928 = vmatmul.bf16.gmra.mxu0 %v214
    %v1929 = vpop.f32.mrf.mxu0
    %v1930 = vadd.f32 0.0, %v1929
    %v1931 = vpop.f32.mrf.mxu0
    %v1932 = vadd.f32 0.0, %v1931
    %1933 = vmatmul.bf16.gmra.mxu0 %v217
    %v1934 = vpop.f32.mrf.mxu0
    %v1935 = vadd.f32 0.0, %v1934
    %v1936 = vpop.f32.mrf.mxu0
    %v1937 = vadd.f32 0.0, %v1936
    %1938 = vdwg.mxu0
    %1939 = vmatpush.bf16.msra.mxu0 0
    %1940 = vmatpush.bf16.msra.mxu0 0
    %1941 = vmatpush.bf16.msra.mxu0 0
    %1942 = vmatpush.bf16.msra.mxu0 0
    %1943 = vmatpush.bf16.msra.mxu0 %v1839
    %1944 = vmatpush.bf16.msra.mxu0 %v1837
    %1945 = vmatpush.bf16.msra.mxu0 %v1835
    %1946 = vmatpush.bf16.msra.mxu0 %v1833
    %1947 = vmatmul.bf16.gmra.mxu0 %v358
    %v1948 = vpop.f32.mrf.mxu0
    %v1949 = vadd.f32 0.0, %v1948
    %v1950 = vpop.f32.mrf.mxu0
    %v1951 = vadd.f32 0.0, %v1950
    %1952 = vmatmul.bf16.gmra.mxu0 %v361
    %v1953 = vpop.f32.mrf.mxu0
    %v1954 = vadd.f32 0.0, %v1953
    %v1955 = vpop.f32.mrf.mxu0
    %v1956 = vadd.f32 0.0, %v1955
    %1957 = vmatmul.bf16.gmra.mxu0 %v364
    %v1958 = vpop.f32.mrf.mxu0
    %v1959 = vadd.f32 0.0, %v1958
    %v1960 = vpop.f32.mrf.mxu0
    %v1961 = vadd.f32 0.0, %v1960
    %1962 = vmatmul.bf16.gmra.mxu0 %v367
    %v1963 = vpop.f32.mrf.mxu0
    %v1964 = vadd.f32 0.0, %v1963
    %v1965 = vpop.f32.mrf.mxu0
    %v1966 = vadd.f32 0.0, %v1965
    %1967 = vmatmul.bf16.gmra.mxu0 %v370
    %v1968 = vpop.f32.mrf.mxu0
    %v1969 = vadd.f32 0.0, %v1968
    %v1970 = vpop.f32.mrf.mxu0
    %v1971 = vadd.f32 0.0, %v1970
    %1972 = vmatmul.bf16.gmra.mxu0 %v373
    %v1973 = vpop.f32.mrf.mxu0
    %v1974 = vadd.f32 0.0, %v1973
    %v1975 = vpop.f32.mrf.mxu0
    %v1976 = vadd.f32 0.0, %v1975
    %1977 = vmatmul.bf16.gmra.mxu0 %v376
    %v1978 = vpop.f32.mrf.mxu0
    %v1979 = vadd.f32 0.0, %v1978
    %v1980 = vpop.f32.mrf.mxu0
    %v1981 = vadd.f32 0.0, %v1980
    %1982 = vmatmul.bf16.gmra.mxu0 %v379
    %v1983 = vpop.f32.mrf.mxu0
    %v1984 = vadd.f32 0.0, %v1983
    %v1985 = vpop.f32.mrf.mxu0
    %v1986 = vadd.f32 0.0, %v1985
    %1987 = vdwg.mxu0
    %1988 = vmatpush.bf16.msra.mxu0 0
    %1989 = vmatpush.bf16.msra.mxu0 0
    %1990 = vmatpush.bf16.msra.mxu0 0
    %1991 = vmatpush.bf16.msra.mxu0 0
    %1992 = vmatpush.bf16.msra.mxu0 %v1840
    %1993 = vmatpush.bf16.msra.mxu0 %v1838
    %1994 = vmatpush.bf16.msra.mxu0 %v1836
    %1995 = vmatpush.bf16.msra.mxu0 %v1834
    %1996 = vmatmul.bf16.gmra.mxu0 %v358
    %v1997 = vpop.f32.mrf.mxu0
    %v1998 = vadd.f32 0.0, %v1997
    %v1999 = vpop.f32.mrf.mxu0
    %v2000 = vadd.f32 0.0, %v1999
    %2001 = vmatmul.bf16.gmra.mxu0 %v361
    %v2002 = vpop.f32.mrf.mxu0
    %v2003 = vadd.f32 0.0, %v2002
    %v2004 = vpop.f32.mrf.mxu0
    %v2005 = vadd.f32 0.0, %v2004
    %2006 = vmatmul.bf16.gmra.mxu0 %v364
    %v2007 = vpop.f32.mrf.mxu0
    %v2008 = vadd.f32 0.0, %v2007
    %v2009 = vpop.f32.mrf.mxu0
    %v2010 = vadd.f32 0.0, %v2009
    %2011 = vmatmul.bf16.gmra.mxu0 %v367
    %v2012 = vpop.f32.mrf.mxu0
    %v2013 = vadd.f32 0.0, %v2012
    %v2014 = vpop.f32.mrf.mxu0
    %v2015 = vadd.f32 0.0, %v2014
    %2016 = vmatmul.bf16.gmra.mxu0 %v370
    %v2017 = vpop.f32.mrf.mxu0
    %v2018 = vadd.f32 0.0, %v2017
    %v2019 = vpop.f32.mrf.mxu0
    %v2020 = vadd.f32 0.0, %v2019
    %2021 = vmatmul.bf16.gmra.mxu0 %v373
    %v2022 = vpop.f32.mrf.mxu0
    %v2023 = vadd.f32 0.0, %v2022
    %v2024 = vpop.f32.mrf.mxu0
    %v2025 = vadd.f32 0.0, %v2024
    %2026 = vmatmul.bf16.gmra.mxu0 %v376
    %v2027 = vpop.f32.mrf.mxu0
    %v2028 = vadd.f32 0.0, %v2027
    %v2029 = vpop.f32.mrf.mxu0
    %v2030 = vadd.f32 0.0, %v2029
    %2031 = vmatmul.bf16.gmra.mxu0 %v379
    %v2032 = vpop.f32.mrf.mxu0
    %v2033 = vadd.f32 0.0, %v2032
    %v2034 = vpop.f32.mrf.mxu0
    %v2035 = vadd.f32 0.0, %v2034
    %2036 = vdwg.mxu0
    %2037 = vmatpush.bf16.msra.mxu0 0
    %2038 = vmatpush.bf16.msra.mxu0 0
    %2039 = vmatpush.bf16.msra.mxu0 0
    %2040 = vmatpush.bf16.msra.mxu0 0
    %2041 = vmatpush.bf16.msra.mxu0 %v1839
    %2042 = vmatpush.bf16.msra.mxu0 %v1837
    %2043 = vmatpush.bf16.msra.mxu0 %v1835
    %2044 = vmatpush.bf16.msra.mxu0 %v1833
    %2045 = vmatmul.bf16.gmra.mxu0 %v520
    %v2046 = vpop.f32.mrf.mxu0
    %v2047 = vadd.f32 0.0, %v2046
    %v2048 = vpop.f32.mrf.mxu0
    %v2049 = vadd.f32 0.0, %v2048
    %2050 = vmatmul.bf16.gmra.mxu0 %v523
    %v2051 = vpop.f32.mrf.mxu0
    %v2052 = vadd.f32 0.0, %v2051
    %v2053 = vpop.f32.mrf.mxu0
    %v2054 = vadd.f32 0.0, %v2053
    %2055 = vmatmul.bf16.gmra.mxu0 %v526
    %v2056 = vpop.f32.mrf.mxu0
    %v2057 = vadd.f32 0.0, %v2056
    %v2058 = vpop.f32.mrf.mxu0
    %v2059 = vadd.f32 0.0, %v2058
    %2060 = vmatmul.bf16.gmra.mxu0 %v529
    %v2061 = vpop.f32.mrf.mxu0
    %v2062 = vadd.f32 0.0, %v2061
    %v2063 = vpop.f32.mrf.mxu0
    %v2064 = vadd.f32 0.0, %v2063
    %2065 = vmatmul.bf16.gmra.mxu0 %v532
    %v2066 = vpop.f32.mrf.mxu0
    %v2067 = vadd.f32 0.0, %v2066
    %v2068 = vpop.f32.mrf.mxu0
    %v2069 = vadd.f32 0.0, %v2068
    %2070 = vmatmul.bf16.gmra.mxu0 %v535
    %v2071 = vpop.f32.mrf.mxu0
    %v2072 = vadd.f32 0.0, %v2071
    %v2073 = vpop.f32.mrf.mxu0
    %v2074 = vadd.f32 0.0, %v2073
    %2075 = vmatmul.bf16.gmra.mxu0 %v538
    %v2076 = vpop.f32.mrf.mxu0
    %v2077 = vadd.f32 0.0, %v2076
    %v2078 = vpop.f32.mrf.mxu0
    %v2079 = vadd.f32 0.0, %v2078
    %2080 = vmatmul.bf16.gmra.mxu0 %v541
    %v2081 = vpop.f32.mrf.mxu0
    %v2082 = vadd.f32 0.0, %v2081
    %v2083 = vpop.f32.mrf.mxu0
    %v2084 = vadd.f32 0.0, %v2083
    %2085 = vdwg.mxu0
    %2086 = vmatpush.bf16.msra.mxu0 0
    %2087 = vmatpush.bf16.msra.mxu0 0
    %2088 = vmatpush.bf16.msra.mxu0 0
    %2089 = vmatpush.bf16.msra.mxu0 0
    %2090 = vmatpush.bf16.msra.mxu0 %v1840
    %2091 = vmatpush.bf16.msra.mxu0 %v1838
    %2092 = vmatpush.bf16.msra.mxu0 %v1836
    %2093 = vmatpush.bf16.msra.mxu0 %v1834
    %2094 = vmatmul.bf16.gmra.mxu0 %v520
    %v2095 = vpop.f32.mrf.mxu0
    %v2096 = vadd.f32 0.0, %v2095
    %v2097 = vpop.f32.mrf.mxu0
    %v2098 = vadd.f32 0.0, %v2097
    %2099 = vmatmul.bf16.gmra.mxu0 %v523
    %v2100 = vpop.f32.mrf.mxu0
    %v2101 = vadd.f32 0.0, %v2100
    %v2102 = vpop.f32.mrf.mxu0
    %v2103 = vadd.f32 0.0, %v2102
    %2104 = vmatmul.bf16.gmra.mxu0 %v526
    %v2105 = vpop.f32.mrf.mxu0
    %v2106 = vadd.f32 0.0, %v2105
    %v2107 = vpop.f32.mrf.mxu0
    %v2108 = vadd.f32 0.0, %v2107
    %2109 = vmatmul.bf16.gmra.mxu0 %v529
    %v2110 = vpop.f32.mrf.mxu0
    %v2111 = vadd.f32 0.0, %v2110
    %v2112 = vpop.f32.mrf.mxu0
    %v2113 = vadd.f32 0.0, %v2112
    %2114 = vmatmul.bf16.gmra.mxu0 %v532
    %v2115 = vpop.f32.mrf.mxu0
    %v2116 = vadd.f32 0.0, %v2115
    %v2117 = vpop.f32.mrf.mxu0
    %v2118 = vadd.f32 0.0, %v2117
    %2119 = vmatmul.bf16.gmra.mxu0 %v535
    %v2120 = vpop.f32.mrf.mxu0
    %v2121 = vadd.f32 0.0, %v2120
    %v2122 = vpop.f32.mrf.mxu0
    %v2123 = vadd.f32 0.0, %v2122
    %2124 = vmatmul.bf16.gmra.mxu0 %v538
    %v2125 = vpop.f32.mrf.mxu0
    %v2126 = vadd.f32 0.0, %v2125
    %v2127 = vpop.f32.mrf.mxu0
    %v2128 = vadd.f32 0.0, %v2127
    %2129 = vmatmul.bf16.gmra.mxu0 %v541
    %v2130 = vpop.f32.mrf.mxu0
    %v2131 = vadd.f32 0.0, %v2130
    %v2132 = vpop.f32.mrf.mxu0
    %v2133 = vadd.f32 0.0, %v2132
    %2134 = vdwg.mxu0
    %v2135 = vmax.f32 %v1851, %v1853
    %v2136 = vmax.f32 %v2135, %v1856
    %v2137 = vmax.f32 %v2136, %v1858
    %v2138 = vrot.slane %v2137, 4
    %v2139 = vmax.f32 %v2137, %v2138
    %v2140 = vrot.slane %v2139, 2
    %v2141 = vmax.f32 %v2139, %v2140
    %v2142 = vrot.slane %v2141, 1
    %v2143 = vmax.f32 %v2141, %v2142
    %v2144 = vmax.f32 %v1900, %v1902
    %v2145 = vmax.f32 %v2144, %v1905
    %v2146 = vmax.f32 %v2145, %v1907
    %v2147 = vrot.slane %v2146, 4
    %v2148 = vmax.f32 %v2146, %v2147
    %v2149 = vrot.slane %v2148, 2
    %v2150 = vmax.f32 %v2148, %v2149
    %v2151 = vrot.slane %v2150, 1
    %v2152 = vmax.f32 %v2150, %v2151
    %v2153 = vmax.f32 %v1861, %v1863
    %v2154 = vmax.f32 %v2153, %v1866
    %v2155 = vmax.f32 %v2154, %v1868
    %v2156 = vrot.slane %v2155, 4
    %v2157 = vmax.f32 %v2155, %v2156
    %v2158 = vrot.slane %v2157, 2
    %v2159 = vmax.f32 %v2157, %v2158
    %v2160 = vrot.slane %v2159, 1
    %v2161 = vmax.f32 %v2159, %v2160
    %v2162 = vmax.f32 %v1910, %v1912
    %v2163 = vmax.f32 %v2162, %v1915
    %v2164 = vmax.f32 %v2163, %v1917
    %v2165 = vrot.slane %v2164, 4
    %v2166 = vmax.f32 %v2164, %v2165
    %v2167 = vrot.slane %v2166, 2
    %v2168 = vmax.f32 %v2166, %v2167
    %v2169 = vrot.slane %v2168, 1
    %v2170 = vmax.f32 %v2168, %v2169
    %v2171 = vmax.f32 %v1871, %v1873
    %v2172 = vmax.f32 %v2171, %v1876
    %v2173 = vmax.f32 %v2172, %v1878
    %v2174 = vrot.slane %v2173, 4
    %v2175 = vmax.f32 %v2173, %v2174
    %v2176 = vrot.slane %v2175, 2
    %v2177 = vmax.f32 %v2175, %v2176
    %v2178 = vrot.slane %v2177, 1
    %v2179 = vmax.f32 %v2177, %v2178
    %v2180 = vmax.f32 %v1920, %v1922
    %v2181 = vmax.f32 %v2180, %v1925
    %v2182 = vmax.f32 %v2181, %v1927
    %v2183 = vrot.slane %v2182, 4
    %v2184 = vmax.f32 %v2182, %v2183
    %v2185 = vrot.slane %v2184, 2
    %v2186 = vmax.f32 %v2184, %v2185
    %v2187 = vrot.slane %v2186, 1
    %v2188 = vmax.f32 %v2186, %v2187
    %v2189 = vmax.f32 %v1881, %v1883
    %v2190 = vmax.f32 %v2189, %v1886
    %v2191 = vmax.f32 %v2190, %v1888
    %v2192 = vrot.slane %v2191, 4
    %v2193 = vmax.f32 %v2191, %v2192
    %v2194 = vrot.slane %v2193, 2
    %v2195 = vmax.f32 %v2193, %v2194
    %v2196 = vrot.slane %v2195, 1
    %v2197 = vmax.f32 %v2195, %v2196
    %v2198 = vmax.f32 %v1930, %v1932
    %v2199 = vmax.f32 %v2198, %v1935
    %v2200 = vmax.f32 %v2199, %v1937
    %v2201 = vrot.slane %v2200, 4
    %v2202 = vmax.f32 %v2200, %v2201
    %v2203 = vrot.slane %v2202, 2
    %v2204 = vmax.f32 %v2202, %v2203
    %v2205 = vrot.slane %v2204, 1
    %v2206 = vmax.f32 %v2204, %v2205
    %v2207 = vsub.f32 %v1851, %v2143
    %v2208 = vsub.f32 %v1900, %v2152
    %v2209 = vsub.f32 %v1853, %v2143
    %v2210 = vsub.f32 %v1902, %v2152
    %v2211 = vsub.f32 %v1856, %v2143
    %v2212 = vsub.f32 %v1905, %v2152
    %v2213 = vsub.f32 %v1858, %v2143
    %v2214 = vsub.f32 %v1907, %v2152
    %v2215 = vsub.f32 %v1861, %v2161
    %v2216 = vsub.f32 %v1910, %v2170
    %v2217 = vsub.f32 %v1863, %v2161
    %v2218 = vsub.f32 %v1912, %v2170
    %v2219 = vsub.f32 %v1866, %v2161
    %v2220 = vsub.f32 %v1915, %v2170
    %v2221 = vsub.f32 %v1868, %v2161
    %v2222 = vsub.f32 %v1917, %v2170
    %v2223 = vsub.f32 %v1871, %v2179
    %v2224 = vsub.f32 %v1920, %v2188
    %v2225 = vsub.f32 %v1873, %v2179
    %v2226 = vsub.f32 %v1922, %v2188
    %v2227 = vsub.f32 %v1876, %v2179
    %v2228 = vsub.f32 %v1925, %v2188
    %v2229 = vsub.f32 %v1878, %v2179
    %v2230 = vsub.f32 %v1927, %v2188
    %v2231 = vsub.f32 %v1881, %v2197
    %v2232 = vsub.f32 %v1930, %v2206
    %v2233 = vsub.f32 %v1883, %v2197
    %v2234 = vsub.f32 %v1932, %v2206
    %v2235 = vsub.f32 %v1886, %v2197
    %v2236 = vsub.f32 %v1935, %v2206
    %v2237 = vsub.f32 %v1888, %v2197
    %v2238 = vsub.f32 %v1937, %v2206
    %v2239 = vmul.f32 %v2207, 1.442695
    %v2240 = vpow.pop %v2239
    %v2241 = vmul.f32 %v2208, 1.442695
    %v2242 = vpow.pop %v2241
    %v2243 = vmul.f32 %v2209, 1.442695
    %v2244 = vpow.pop %v2243
    %v2245 = vmul.f32 %v2210, 1.442695
    %v2246 = vpow.pop %v2245
    %v2247 = vmul.f32 %v2211, 1.442695
    %v2248 = vpow.pop %v2247
    %v2249 = vmul.f32 %v2212, 1.442695
    %v2250 = vpow.pop %v2249
    %v2251 = vmul.f32 %v2213, 1.442695
    %v2252 = vpow.pop %v2251
    %v2253 = vmul.f32 %v2214, 1.442695
    %v2254 = vpow.pop %v2253
    %v2255 = vmul.f32 %v2215, 1.442695
    %v2256 = vpow.pop %v2255
    %v2257 = vmul.f32 %v2216, 1.442695
    %v2258 = vpow.pop %v2257
    %v2259 = vmul.f32 %v2217, 1.442695
    %v2260 = vpow.pop %v2259
    %v2261 = vmul.f32 %v2218, 1.442695
    %v2262 = vpow.pop %v2261
    %v2263 = vmul.f32 %v2219, 1.442695
    %v2264 = vpow.pop %v2263
    %v2265 = vmul.f32 %v2220, 1.442695
    %v2266 = vpow.pop %v2265
    %v2267 = vmul.f32 %v2221, 1.442695
    %v2268 = vpow.pop %v2267
    %v2269 = vmul.f32 %v2222, 1.442695
    %v2270 = vpow.pop %v2269
    %v2271 = vmul.f32 %v2223, 1.442695
    %v2272 = vpow.pop %v2271
    %v2273 = vmul.f32 %v2224, 1.442695
    %v2274 = vpow.pop %v2273
    %v2275 = vmul.f32 %v2225, 1.442695
    %v2276 = vpow.pop %v2275
    %v2277 = vmul.f32 %v2226, 1.442695
    %v2278 = vpow.pop %v2277
    %v2279 = vmul.f32 %v2227, 1.442695
    %v2280 = vpow.pop %v2279
    %v2281 = vmul.f32 %v2228, 1.442695
    %v2282 = vpow.pop %v2281
    %v2283 = vmul.f32 %v2229, 1.442695
    %v2284 = vpow.pop %v2283
    %v2285 = vmul.f32 %v2230, 1.442695
    %v2286 = vpow.pop %v2285
    %v2287 = vmul.f32 %v2231, 1.442695
    %v2288 = vpow.pop %v2287
    %v2289 = vmul.f32 %v2232, 1.442695
    %v2290 = vpow.pop %v2289
    %v2291 = vmul.f32 %v2233, 1.442695
    %v2292 = vpow.pop %v2291
    %v2293 = vmul.f32 %v2234, 1.442695
    %v2294 = vpow.pop %v2293
    %v2295 = vmul.f32 %v2235, 1.442695
    %v2296 = vpow.pop %v2295
    %v2297 = vmul.f32 %v2236, 1.442695
    %v2298 = vpow.pop %v2297
    %v2299 = vmul.f32 %v2237, 1.442695
    %v2300 = vpow.pop %v2299
    %v2301 = vmul.f32 %v2238, 1.442695
    %v2302 = vpow.pop %v2301
    %v2303 = vadd.f32 %v2240, %v2244
    %v2304 = vadd.f32 %v2303, %v2248
    %v2305 = vadd.f32 %v2304, %v2252
    %v2306 = vrot.slane %v2305, 4
    %v2307 = vadd.f32 %v2305, %v2306
    %v2308 = vrot.slane %v2307, 2
    %v2309 = vadd.f32 %v2307, %v2308
    %v2310 = vrot.slane %v2309, 1
    %v2311 = vadd.f32 %v2309, %v2310
    %v2312 = vadd.f32 %v2242, %v2246
    %v2313 = vadd.f32 %v2312, %v2250
    %v2314 = vadd.f32 %v2313, %v2254
    %v2315 = vrot.slane %v2314, 4
    %v2316 = vadd.f32 %v2314, %v2315
    %v2317 = vrot.slane %v2316, 2
    %v2318 = vadd.f32 %v2316, %v2317
    %v2319 = vrot.slane %v2318, 1
    %v2320 = vadd.f32 %v2318, %v2319
    %v2321 = vadd.f32 %v2256, %v2260
    %v2322 = vadd.f32 %v2321, %v2264
    %v2323 = vadd.f32 %v2322, %v2268
    %v2324 = vrot.slane %v2323, 4
    %v2325 = vadd.f32 %v2323, %v2324
    %v2326 = vrot.slane %v2325, 2
    %v2327 = vadd.f32 %v2325, %v2326
    %v2328 = vrot.slane %v2327, 1
    %v2329 = vadd.f32 %v2327, %v2328
    %v2330 = vadd.f32 %v2258, %v2262
    %v2331 = vadd.f32 %v2330, %v2266
    %v2332 = vadd.f32 %v2331, %v2270
    %v2333 = vrot.slane %v2332, 4
    %v2334 = vadd.f32 %v2332, %v2333
    %v2335 = vrot.slane %v2334, 2
    %v2336 = vadd.f32 %v2334, %v2335
    %v2337 = vrot.slane %v2336, 1
    %v2338 = vadd.f32 %v2336, %v2337
    %v2339 = vadd.f32 %v2272, %v2276
    %v2340 = vadd.f32 %v2339, %v2280
    %v2341 = vadd.f32 %v2340, %v2284
    %v2342 = vrot.slane %v2341, 4
    %v2343 = vadd.f32 %v2341, %v2342
    %v2344 = vrot.slane %v2343, 2
    %v2345 = vadd.f32 %v2343, %v2344
    %v2346 = vrot.slane %v2345, 1
    %v2347 = vadd.f32 %v2345, %v2346
    %v2348 = vadd.f32 %v2274, %v2278
    %v2349 = vadd.f32 %v2348, %v2282
    %v2350 = vadd.f32 %v2349, %v2286
    %v2351 = vrot.slane %v2350, 4
    %v2352 = vadd.f32 %v2350, %v2351
    %v2353 = vrot.slane %v2352, 2
    %v2354 = vadd.f32 %v2352, %v2353
    %v2355 = vrot.slane %v2354, 1
    %v2356 = vadd.f32 %v2354, %v2355
    %v2357 = vadd.f32 %v2288, %v2292
    %v2358 = vadd.f32 %v2357, %v2296
    %v2359 = vadd.f32 %v2358, %v2300
    %v2360 = vrot.slane %v2359, 4
    %v2361 = vadd.f32 %v2359, %v2360
    %v2362 = vrot.slane %v2361, 2
    %v2363 = vadd.f32 %v2361, %v2362
    %v2364 = vrot.slane %v2363, 1
    %v2365 = vadd.f32 %v2363, %v2364
    %v2366 = vadd.f32 %v2290, %v2294
    %v2367 = vadd.f32 %v2366, %v2298
    %v2368 = vadd.f32 %v2367, %v2302
    %v2369 = vrot.slane %v2368, 4
    %v2370 = vadd.f32 %v2368, %v2369
    %v2371 = vrot.slane %v2370, 2
    %v2372 = vadd.f32 %v2370, %v2371
    %v2373 = vrot.slane %v2372, 1
    %v2374 = vadd.f32 %v2372, %v2373
    %v2375 = vmax.f32 %v1949, %v1998
    %2376 = vmax.xlane.f32.xlu0 %v2375
    %v2377 = vpop.xlane.xlu0 %2376
    %v2378 = vmax.f32 %v1951, %v2000
    %2379 = vmax.xlane.f32.xlu0 %v2378
    %v2380 = vpop.xlane.xlu0 %2379
    %v2381 = vmax.f32 %v1954, %v2003
    %2382 = vmax.xlane.f32.xlu0 %v2381
    %v2383 = vpop.xlane.xlu0 %2382
    %v2384 = vmax.f32 %v1956, %v2005
    %2385 = vmax.xlane.f32.xlu0 %v2384
    %v2386 = vpop.xlane.xlu0 %2385
    %v2387 = vmax.f32 %v1959, %v2008
    %2388 = vmax.xlane.f32.xlu0 %v2387
    %v2389 = vpop.xlane.xlu0 %2388
    %v2390 = vmax.f32 %v1961, %v2010
    %2391 = vmax.xlane.f32.xlu0 %v2390
    %v2392 = vpop.xlane.xlu0 %2391
    %v2393 = vmax.f32 %v1964, %v2013
    %2394 = vmax.xlane.f32.xlu0 %v2393
    %v2395 = vpop.xlane.xlu0 %2394
    %v2396 = vmax.f32 %v1966, %v2015
    %2397 = vmax.xlane.f32.xlu0 %v2396
    %v2398 = vpop.xlane.xlu0 %2397
    %v2399 = vmax.f32 %v1969, %v2018
    %2400 = vmax.xlane.f32.xlu0 %v2399
    %v2401 = vpop.xlane.xlu0 %2400
    %v2402 = vmax.f32 %v1971, %v2020
    %2403 = vmax.xlane.f32.xlu0 %v2402
    %v2404 = vpop.xlane.xlu0 %2403
    %v2405 = vmax.f32 %v1974, %v2023
    %2406 = vmax.xlane.f32.xlu0 %v2405
    %v2407 = vpop.xlane.xlu0 %2406
    %v2408 = vmax.f32 %v1976, %v2025
    %2409 = vmax.xlane.f32.xlu0 %v2408
    %v2410 = vpop.xlane.xlu0 %2409
    %v2411 = vmax.f32 %v1979, %v2028
    %2412 = vmax.xlane.f32.xlu0 %v2411
    %v2413 = vpop.xlane.xlu0 %2412
    %v2414 = vmax.f32 %v1981, %v2030
    %2415 = vmax.xlane.f32.xlu0 %v2414
    %v2416 = vpop.xlane.xlu0 %2415
    %v2417 = vmax.f32 %v1984, %v2033
    %2418 = vmax.xlane.f32.xlu0 %v2417
    %v2419 = vpop.xlane.xlu0 %2418
    %v2420 = vmax.f32 %v1986, %v2035
    %2421 = vmax.xlane.f32.xlu0 %v2420
    %v2422 = vpop.xlane.xlu0 %2421
    %v2423 = vsub.f32 %v1949, %v2377
    %v2424 = vsub.f32 %v1998, %v2377
    %v2425 = vsub.f32 %v1951, %v2380
    %v2426 = vsub.f32 %v2000, %v2380
    %v2427 = vsub.f32 %v1954, %v2383
    %v2428 = vsub.f32 %v2003, %v2383
    %v2429 = vsub.f32 %v1956, %v2386
    %v2430 = vsub.f32 %v2005, %v2386
    %v2431 = vsub.f32 %v1959, %v2389
    %v2432 = vsub.f32 %v2008, %v2389
    %v2433 = vsub.f32 %v1961, %v2392
    %v2434 = vsub.f32 %v2010, %v2392
    %v2435 = vsub.f32 %v1964, %v2395
    %v2436 = vsub.f32 %v2013, %v2395
    %v2437 = vsub.f32 %v1966, %v2398
    %v2438 = vsub.f32 %v2015, %v2398
    %v2439 = vsub.f32 %v1969, %v2401
    %v2440 = vsub.f32 %v2018, %v2401
    %v2441 = vsub.f32 %v1971, %v2404
    %v2442 = vsub.f32 %v2020, %v2404
    %v2443 = vsub.f32 %v1974, %v2407
    %v2444 = vsub.f32 %v2023, %v2407
    %v2445 = vsub.f32 %v1976, %v2410
    %v2446 = vsub.f32 %v2025, %v2410
    %v2447 = vsub.f32 %v1979, %v2413
    %v2448 = vsub.f32 %v2028, %v2413
    %v2449 = vsub.f32 %v1981, %v2416
    %v2450 = vsub.f32 %v2030, %v2416
    %v2451 = vsub.f32 %v1984, %v2419
    %v2452 = vsub.f32 %v2033, %v2419
    %v2453 = vsub.f32 %v1986, %v2422
    %v2454 = vsub.f32 %v2035, %v2422
    %v2455 = vmul.f32 %v2423, 1.442695
    %v2456 = vpow.pop %v2455
    %v2457 = vmul.f32 %v2424, 1.442695
    %v2458 = vpow.pop %v2457
    %v2459 = vmul.f32 %v2425, 1.442695
    %v2460 = vpow.pop %v2459
    %v2461 = vmul.f32 %v2426, 1.442695
    %v2462 = vpow.pop %v2461
    %v2463 = vmul.f32 %v2427, 1.442695
    %v2464 = vpow.pop %v2463
    %v2465 = vmul.f32 %v2428, 1.442695
    %v2466 = vpow.pop %v2465
    %v2467 = vmul.f32 %v2429, 1.442695
    %v2468 = vpow.pop %v2467
    %v2469 = vmul.f32 %v2430, 1.442695
    %v2470 = vpow.pop %v2469
    %v2471 = vmul.f32 %v2431, 1.442695
    %v2472 = vpow.pop %v2471
    %v2473 = vmul.f32 %v2432, 1.442695
    %v2474 = vpow.pop %v2473
    %v2475 = vmul.f32 %v2433, 1.442695
    %v2476 = vpow.pop %v2475
    %v2477 = vmul.f32 %v2434, 1.442695
    %v2478 = vpow.pop %v2477
    %v2479 = vmul.f32 %v2435, 1.442695
    %v2480 = vpow.pop %v2479
    %v2481 = vmul.f32 %v2436, 1.442695
    %v2482 = vpow.pop %v2481
    %v2483 = vmul.f32 %v2437, 1.442695
    %v2484 = vpow.pop %v2483
    %v2485 = vmul.f32 %v2438, 1.442695
    %v2486 = vpow.pop %v2485
    %v2487 = vmul.f32 %v2439, 1.442695
    %v2488 = vpow.pop %v2487
    %v2489 = vmul.f32 %v2440, 1.442695
    %v2490 = vpow.pop %v2489
    %v2491 = vmul.f32 %v2441, 1.442695
    %v2492 = vpow.pop %v2491
    %v2493 = vmul.f32 %v2442, 1.442695
    %v2494 = vpow.pop %v2493
    %v2495 = vmul.f32 %v2443, 1.442695
    %v2496 = vpow.pop %v2495
    %v2497 = vmul.f32 %v2444, 1.442695
    %v2498 = vpow.pop %v2497
    %v2499 = vmul.f32 %v2445, 1.442695
    %v2500 = vpow.pop %v2499
    %v2501 = vmul.f32 %v2446, 1.442695
    %v2502 = vpow.pop %v2501
    %v2503 = vmul.f32 %v2447, 1.442695
    %v2504 = vpow.pop %v2503
    %v2505 = vmul.f32 %v2448, 1.442695
    %v2506 = vpow.pop %v2505
    %v2507 = vmul.f32 %v2449, 1.442695
    %v2508 = vpow.pop %v2507
    %v2509 = vmul.f32 %v2450, 1.442695
    %v2510 = vpow.pop %v2509
    %v2511 = vmul.f32 %v2451, 1.442695
    %v2512 = vpow.pop %v2511
    %v2513 = vmul.f32 %v2452, 1.442695
    %v2514 = vpow.pop %v2513
    %v2515 = vmul.f32 %v2453, 1.442695
    %v2516 = vpow.pop %v2515
    %v2517 = vmul.f32 %v2454, 1.442695
    %v2518 = vpow.pop %v2517
    %v2519 = vadd.f32 %v2456, %v2458
    %2520 = vadd.xlane.f32.xlu0 %v2519
    %v2521 = vpop.xlane.xlu0 %2520
    %v2522 = vadd.f32 %v2460, %v2462
    %2523 = vadd.xlane.f32.xlu0 %v2522
    %v2524 = vpop.xlane.xlu0 %2523
    %v2525 = vadd.f32 %v2464, %v2466
    %2526 = vadd.xlane.f32.xlu0 %v2525
    %v2527 = vpop.xlane.xlu0 %2526
    %v2528 = vadd.f32 %v2468, %v2470
    %2529 = vadd.xlane.f32.xlu0 %v2528
    %v2530 = vpop.xlane.xlu0 %2529
    %v2531 = vadd.f32 %v2472, %v2474
    %2532 = vadd.xlane.f32.xlu0 %v2531
    %v2533 = vpop.xlane.xlu0 %2532
    %v2534 = vadd.f32 %v2476, %v2478
    %2535 = vadd.xlane.f32.xlu0 %v2534
    %v2536 = vpop.xlane.xlu0 %2535
    %v2537 = vadd.f32 %v2480, %v2482
    %2538 = vadd.xlane.f32.xlu0 %v2537
    %v2539 = vpop.xlane.xlu0 %2538
    %v2540 = vadd.f32 %v2484, %v2486
    %2541 = vadd.xlane.f32.xlu0 %v2540
    %v2542 = vpop.xlane.xlu0 %2541
    %v2543 = vadd.f32 %v2488, %v2490
    %2544 = vadd.xlane.f32.xlu0 %v2543
    %v2545 = vpop.xlane.xlu0 %2544
    %v2546 = vadd.f32 %v2492, %v2494
    %2547 = vadd.xlane.f32.xlu0 %v2546
    %v2548 = vpop.xlane.xlu0 %2547
    %v2549 = vadd.f32 %v2496, %v2498
    %2550 = vadd.xlane.f32.xlu0 %v2549
    %v2551 = vpop.xlane.xlu0 %2550
    %v2552 = vadd.f32 %v2500, %v2502
    %2553 = vadd.xlane.f32.xlu0 %v2552
    %v2554 = vpop.xlane.xlu0 %2553
    %v2555 = vadd.f32 %v2504, %v2506
    %2556 = vadd.xlane.f32.xlu0 %v2555
    %v2557 = vpop.xlane.xlu0 %2556
    %v2558 = vadd.f32 %v2508, %v2510
    %2559 = vadd.xlane.f32.xlu0 %v2558
    %v2560 = vpop.xlane.xlu0 %2559
    %v2561 = vadd.f32 %v2512, %v2514
    %2562 = vadd.xlane.f32.xlu0 %v2561
    %v2563 = vpop.xlane.xlu0 %2562
    %v2564 = vadd.f32 %v2516, %v2518
    %2565 = vadd.xlane.f32.xlu0 %v2564
    %v2566 = vpop.xlane.xlu0 %2565
    %v2567 = vrcp.pop %v2521
    %v2568 = vrcp.pop %v2524
    %v2569 = vrcp.pop %v2527
    %v2570 = vrcp.pop %v2530
    %v2571 = vrcp.pop %v2533
    %v2572 = vrcp.pop %v2536
    %v2573 = vrcp.pop %v2539
    %v2574 = vrcp.pop %v2542
    %v2575 = vrcp.pop %v2545
    %v2576 = vrcp.pop %v2548
    %v2577 = vrcp.pop %v2551
    %v2578 = vrcp.pop %v2554
    %v2579 = vrcp.pop %v2557
    %v2580 = vrcp.pop %v2560
    %v2581 = vrcp.pop %v2563
    %v2582 = vrcp.pop %v2566
    %v2583 = vmul.f32 %v2456, %v2567
    %v2584 = vmul.f32 %v2458, %v2567
    %v2585 = vmul.f32 %v2460, %v2568
    %v2586 = vmul.f32 %v2462, %v2568
    %v2587 = vmul.f32 %v2464, %v2569
    %v2588 = vmul.f32 %v2466, %v2569
    %v2589 = vmul.f32 %v2468, %v2570
    %v2590 = vmul.f32 %v2470, %v2570
    %v2591 = vmul.f32 %v2472, %v2571
    %v2592 = vmul.f32 %v2474, %v2571
    %v2593 = vmul.f32 %v2476, %v2572
    %v2594 = vmul.f32 %v2478, %v2572
    %v2595 = vmul.f32 %v2480, %v2573
    %v2596 = vmul.f32 %v2482, %v2573
    %v2597 = vmul.f32 %v2484, %v2574
    %v2598 = vmul.f32 %v2486, %v2574
    %v2599 = vmul.f32 %v2488, %v2575
    %v2600 = vmul.f32 %v2490, %v2575
    %v2601 = vmul.f32 %v2492, %v2576
    %v2602 = vmul.f32 %v2494, %v2576
    %v2603 = vmul.f32 %v2496, %v2577
    %v2604 = vmul.f32 %v2498, %v2577
    %v2605 = vmul.f32 %v2500, %v2578
    %v2606 = vmul.f32 %v2502, %v2578
    %v2607 = vmul.f32 %v2504, %v2579
    %v2608 = vmul.f32 %v2506, %v2579
    %v2609 = vmul.f32 %v2508, %v2580
    %v2610 = vmul.f32 %v2510, %v2580
    %v2611 = vmul.f32 %v2512, %v2581
    %v2612 = vmul.f32 %v2514, %v2581
    %v2613 = vmul.f32 %v2516, %v2582
    %v2614 = vmul.f32 %v2518, %v2582
    %v2615 = vpack.c.bf16 %v2049, %v2047
    %v2616 = vpack.c.bf16 %v2098, %v2096
    %v2617 = vpack.c.bf16 %v2054, %v2052
    %v2618 = vpack.c.bf16 %v2103, %v2101
    %v2619 = vpack.c.bf16 %v2059, %v2057
    %v2620 = vpack.c.bf16 %v2108, %v2106
    %v2621 = vpack.c.bf16 %v2064, %v2062
    %v2622 = vpack.c.bf16 %v2113, %v2111
    %v2623 = vpack.c.bf16 %v2069, %v2067
    %v2624 = vpack.c.bf16 %v2118, %v2116
    %v2625 = vpack.c.bf16 %v2074, %v2072
    %v2626 = vpack.c.bf16 %v2123, %v2121
    %v2627 = vpack.c.bf16 %v2079, %v2077
    %v2628 = vpack.c.bf16 %v2128, %v2126
    %v2629 = vpack.c.bf16 %v2084, %v2082
    %v2630 = vpack.c.bf16 %v2133, %v2131
    %v2631 = vpack.c.bf16 %v2585, %v2583
    %v2632 = vpack.c.bf16 %v2586, %v2584
    %v2633 = vpack.c.bf16 %v2589, %v2587
    %v2634 = vpack.c.bf16 %v2590, %v2588
    %v2635 = vpack.c.bf16 %v2593, %v2591
    %v2636 = vpack.c.bf16 %v2594, %v2592
    %v2637 = vpack.c.bf16 %v2597, %v2595
    %v2638 = vpack.c.bf16 %v2598, %v2596
    %v2639 = vpack.c.bf16 %v2601, %v2599
    %v2640 = vpack.c.bf16 %v2602, %v2600
    %v2641 = vpack.c.bf16 %v2605, %v2603
    %v2642 = vpack.c.bf16 %v2606, %v2604
    %v2643 = vpack.c.bf16 %v2609, %v2607
    %v2644 = vpack.c.bf16 %v2610, %v2608
    %v2645 = vpack.c.bf16 %v2613, %v2611
    %v2646 = vpack.c.bf16 %v2614, %v2612
    %2647 = vmatpush.bf16.xpose.msra.mxu0 %v2645
    %2648 = vmatpush.bf16.xpose.msra.mxu0 %v2643
    %2649 = vmatpush.bf16.xpose.msra.mxu0 %v2641
    %2650 = vmatpush.bf16.xpose.msra.mxu0 %v2639
    %2651 = vmatpush.bf16.xpose.msra.mxu0 %v2637
    %2652 = vmatpush.bf16.xpose.msra.mxu0 %v2635
    %2653 = vmatpush.bf16.xpose.msra.mxu0 %v2633
    %2654 = vmatpush.bf16.xpose.msra.mxu0 %v2631
    %2655 = vmatmul.bf16.gmra.mxu0 %v2615
    %v2656 = vpop.f32.mrf.mxu0
    %v2657 = vadd.f32 0.0, %v2656
    %v2658 = vpop.f32.mrf.mxu0
    %v2659 = vadd.f32 0.0, %v2658
    %2660 = vmatmul.bf16.gmra.mxu0 %v2617
    %v2661 = vpop.f32.mrf.mxu0
    %v2662 = vadd.f32 0.0, %v2661
    %v2663 = vpop.f32.mrf.mxu0
    %v2664 = vadd.f32 0.0, %v2663
    %2665 = vmatmul.bf16.gmra.mxu0 %v2619
    %v2666 = vpop.f32.mrf.mxu0
    %v2667 = vadd.f32 0.0, %v2666
    %v2668 = vpop.f32.mrf.mxu0
    %v2669 = vadd.f32 0.0, %v2668
    %2670 = vmatmul.bf16.gmra.mxu0 %v2621
    %v2671 = vpop.f32.mrf.mxu0
    %v2672 = vadd.f32 0.0, %v2671
    %v2673 = vpop.f32.mrf.mxu0
    %v2674 = vadd.f32 0.0, %v2673
    %2675 = vmatmul.bf16.gmra.mxu0 %v2623
    %v2676 = vpop.f32.mrf.mxu0
    %v2677 = vadd.f32 0.0, %v2676
    %v2678 = vpop.f32.mrf.mxu0
    %v2679 = vadd.f32 0.0, %v2678
    %2680 = vmatmul.bf16.gmra.mxu0 %v2625
    %v2681 = vpop.f32.mrf.mxu0
    %v2682 = vadd.f32 0.0, %v2681
    %v2683 = vpop.f32.mrf.mxu0
    %v2684 = vadd.f32 0.0, %v2683
    %2685 = vmatmul.bf16.gmra.mxu0 %v2627
    %v2686 = vpop.f32.mrf.mxu0
    %v2687 = vadd.f32 0.0, %v2686
    %v2688 = vpop.f32.mrf.mxu0
    %v2689 = vadd.f32 0.0, %v2688
    %2690 = vmatmul.bf16.gmra.mxu0 %v2629
    %v2691 = vpop.f32.mrf.mxu0
    %v2692 = vadd.f32 0.0, %v2691
    %v2693 = vpop.f32.mrf.mxu0
    %v2694 = vadd.f32 0.0, %v2693
    %2695 = vdwg.mxu0
    %2696 = vmatpush.bf16.xpose.msra.mxu0 %v2646
    %2697 = vmatpush.bf16.xpose.msra.mxu0 %v2644
    %2698 = vmatpush.bf16.xpose.msra.mxu0 %v2642
    %2699 = vmatpush.bf16.xpose.msra.mxu0 %v2640
    %2700 = vmatpush.bf16.xpose.msra.mxu0 %v2638
    %2701 = vmatpush.bf16.xpose.msra.mxu0 %v2636
    %2702 = vmatpush.bf16.xpose.msra.mxu0 %v2634
    %2703 = vmatpush.bf16.xpose.msra.mxu0 %v2632
    %2704 = vmatmul.bf16.gmra.mxu0 %v2616
    %v2705 = vpop.f32.mrf.mxu0
    %v2706 = vadd.f32 %v2657, %v2705
    %v2707 = vpop.f32.mrf.mxu0
    %v2708 = vadd.f32 %v2659, %v2707
    %2709 = vmatmul.bf16.gmra.mxu0 %v2618
    %v2710 = vpop.f32.mrf.mxu0
    %v2711 = vadd.f32 %v2662, %v2710
    %v2712 = vpop.f32.mrf.mxu0
    %v2713 = vadd.f32 %v2664, %v2712
    %2714 = vmatmul.bf16.gmra.mxu0 %v2620
    %v2715 = vpop.f32.mrf.mxu0
    %v2716 = vadd.f32 %v2667, %v2715
    %v2717 = vpop.f32.mrf.mxu0
    %v2718 = vadd.f32 %v2669, %v2717
    %2719 = vmatmul.bf16.gmra.mxu0 %v2622
    %v2720 = vpop.f32.mrf.mxu0
    %v2721 = vadd.f32 %v2672, %v2720
    %v2722 = vpop.f32.mrf.mxu0
    %v2723 = vadd.f32 %v2674, %v2722
    %2724 = vmatmul.bf16.gmra.mxu0 %v2624
    %v2725 = vpop.f32.mrf.mxu0
    %v2726 = vadd.f32 %v2677, %v2725
    %v2727 = vpop.f32.mrf.mxu0
    %v2728 = vadd.f32 %v2679, %v2727
    %2729 = vmatmul.bf16.gmra.mxu0 %v2626
    %v2730 = vpop.f32.mrf.mxu0
    %v2731 = vadd.f32 %v2682, %v2730
    %v2732 = vpop.f32.mrf.mxu0
    %v2733 = vadd.f32 %v2684, %v2732
    %2734 = vmatmul.bf16.gmra.mxu0 %v2628
    %v2735 = vpop.f32.mrf.mxu0
    %v2736 = vadd.f32 %v2687, %v2735
    %v2737 = vpop.f32.mrf.mxu0
    %v2738 = vadd.f32 %v2689, %v2737
    %2739 = vmatmul.bf16.gmra.mxu0 %v2630
    %v2740 = vpop.f32.mrf.mxu0
    %v2741 = vadd.f32 %v2692, %v2740
    %v2742 = vpop.f32.mrf.mxu0
    %v2743 = vadd.f32 %v2694, %v2742
    %2744 = vdwg.mxu0
    %v2745 = vmul.f32 %v2706, %v114
    %v2746 = vmul.f32 %v2708, %v115
    %v2747 = vmul.f32 %v2711, %v116
    %v2748 = vmul.f32 %v2713, %v117
    %v2749 = vmul.f32 %v2716, %v118
    %v2750 = vmul.f32 %v2718, %v119
    %v2751 = vmul.f32 %v2721, %v120
    %v2752 = vmul.f32 %v2723, %v121
    %v2753 = vmul.f32 %v2726, %v122
    %v2754 = vmul.f32 %v2728, %v123
    %v2755 = vmul.f32 %v2731, %v124
    %v2756 = vmul.f32 %v2733, %v125
    %v2757 = vmul.f32 %v2736, %v126
    %v2758 = vmul.f32 %v2738, %v127
    %v2759 = vmul.f32 %v2741, %v128
    %v2760 = vmul.f32 %v2743, %v129
    %v2761 = vpack.c.bf16 %v2746, %v2745
    %v2762 = vpack.c.bf16 %v2748, %v2747
    %v2763 = vpack.c.bf16 %v2750, %v2749
    %v2764 = vpack.c.bf16 %v2752, %v2751
    %v2765 = vpack.c.bf16 %v2754, %v2753
    %v2766 = vpack.c.bf16 %v2756, %v2755
    %v2767 = vpack.c.bf16 %v2758, %v2757
    %v2768 = vpack.c.bf16 %v2760, %v2759
    %v2769 = vpack.c.bf16 %v2244, %v2240
    %v2770 = vpack.c.bf16 %v2246, %v2242
    %v2771 = vpack.c.bf16 %v2252, %v2248
    %v2772 = vpack.c.bf16 %v2254, %v2250
    %v2773 = vpack.c.bf16 %v2260, %v2256
    %v2774 = vpack.c.bf16 %v2262, %v2258
    %v2775 = vpack.c.bf16 %v2268, %v2264
    %v2776 = vpack.c.bf16 %v2270, %v2266
    %v2777 = vpack.c.bf16 %v2276, %v2272
    %v2778 = vpack.c.bf16 %v2278, %v2274
    %v2779 = vpack.c.bf16 %v2284, %v2280
    %v2780 = vpack.c.bf16 %v2286, %v2282
    %v2781 = vpack.c.bf16 %v2292, %v2288
    %v2782 = vpack.c.bf16 %v2294, %v2290
    %v2783 = vpack.c.bf16 %v2300, %v2296
    %v2784 = vpack.c.bf16 %v2302, %v2298
    %2785 = vmatpush.bf16.msra.mxu0 %v2783
    %2786 = vmatpush.bf16.msra.mxu0 %v2781
    %2787 = vmatpush.bf16.msra.mxu0 %v2779
    %2788 = vmatpush.bf16.msra.mxu0 %v2777
    %2789 = vmatpush.bf16.msra.mxu0 %v2775
    %2790 = vmatpush.bf16.msra.mxu0 %v2773
    %2791 = vmatpush.bf16.msra.mxu0 %v2771
    %2792 = vmatpush.bf16.msra.mxu0 %v2769
    %2793 = vmatmul.bf16.gmra.mxu0 %v2761
    %v2794 = vpop.f32.mrf.mxu0
    %v2795 = vadd.f32 0.0, %v2794
    %v2796 = vpop.f32.mrf.mxu0
    %v2797 = vadd.f32 0.0, %v2796
    %2798 = vmatmul.bf16.gmra.mxu0 %v2762
    %v2799 = vpop.f32.mrf.mxu0
    %v2800 = vadd.f32 0.0, %v2799
    %v2801 = vpop.f32.mrf.mxu0
    %v2802 = vadd.f32 0.0, %v2801
    %2803 = vmatmul.bf16.gmra.mxu0 %v2763
    %v2804 = vpop.f32.mrf.mxu0
    %v2805 = vadd.f32 0.0, %v2804
    %v2806 = vpop.f32.mrf.mxu0
    %v2807 = vadd.f32 0.0, %v2806
    %2808 = vmatmul.bf16.gmra.mxu0 %v2764
    %v2809 = vpop.f32.mrf.mxu0
    %v2810 = vadd.f32 0.0, %v2809
    %v2811 = vpop.f32.mrf.mxu0
    %v2812 = vadd.f32 0.0, %v2811
    %2813 = vmatmul.bf16.gmra.mxu0 %v2765
    %v2814 = vpop.f32.mrf.mxu0
    %v2815 = vadd.f32 0.0, %v2814
    %v2816 = vpop.f32.mrf.mxu0
    %v2817 = vadd.f32 0.0, %v2816
    %2818 = vmatmul.bf16.gmra.mxu0 %v2766
    %v2819 = vpop.f32.mrf.mxu0
    %v2820 = vadd.f32 0.0, %v2819
    %v2821 = vpop.f32.mrf.mxu0
    %v2822 = vadd.f32 0.0, %v2821
    %2823 = vmatmul.bf16.gmra.mxu0 %v2767
    %v2824 = vpop.f32.mrf.mxu0
    %v2825 = vadd.f32 0.0, %v2824
    %v2826 = vpop.f32.mrf.mxu0
    %v2827 = vadd.f32 0.0, %v2826
    %2828 = vmatmul.bf16.gmra.mxu0 %v2768
    %v2829 = vpop.f32.mrf.mxu0
    %v2830 = vadd.f32 0.0, %v2829
    %v2831 = vpop.f32.mrf.mxu0
    %v2832 = vadd.f32 0.0, %v2831
    %2833 = vdwg.mxu0
    %2834 = vmatpush.bf16.msra.mxu0 %v2784
    %2835 = vmatpush.bf16.msra.mxu0 %v2782
    %2836 = vmatpush.bf16.msra.mxu0 %v2780
    %2837 = vmatpush.bf16.msra.mxu0 %v2778
    %2838 = vmatpush.bf16.msra.mxu0 %v2776
    %2839 = vmatpush.bf16.msra.mxu0 %v2774
    %2840 = vmatpush.bf16.msra.mxu0 %v2772
    %2841 = vmatpush.bf16.msra.mxu0 %v2770
    %2842 = vmatmul.bf16.gmra.mxu0 %v2761
    %v2843 = vpop.f32.mrf.mxu0
    %v2844 = vadd.f32 0.0, %v2843
    %v2845 = vpop.f32.mrf.mxu0
    %v2846 = vadd.f32 0.0, %v2845
    %2847 = vmatmul.bf16.gmra.mxu0 %v2762
    %v2848 = vpop.f32.mrf.mxu0
    %v2849 = vadd.f32 0.0, %v2848
    %v2850 = vpop.f32.mrf.mxu0
    %v2851 = vadd.f32 0.0, %v2850
    %2852 = vmatmul.bf16.gmra.mxu0 %v2763
    %v2853 = vpop.f32.mrf.mxu0
    %v2854 = vadd.f32 0.0, %v2853
    %v2855 = vpop.f32.mrf.mxu0
    %v2856 = vadd.f32 0.0, %v2855
    %2857 = vmatmul.bf16.gmra.mxu0 %v2764
    %v2858 = vpop.f32.mrf.mxu0
    %v2859 = vadd.f32 0.0, %v2858
    %v2860 = vpop.f32.mrf.mxu0
    %v2861 = vadd.f32 0.0, %v2860
    %2862 = vmatmul.bf16.gmra.mxu0 %v2765
    %v2863 = vpop.f32.mrf.mxu0
    %v2864 = vadd.f32 0.0, %v2863
    %v2865 = vpop.f32.mrf.mxu0
    %v2866 = vadd.f32 0.0, %v2865
    %2867 = vmatmul.bf16.gmra.mxu0 %v2766
    %v2868 = vpop.f32.mrf.mxu0
    %v2869 = vadd.f32 0.0, %v2868
    %v2870 = vpop.f32.mrf.mxu0
    %v2871 = vadd.f32 0.0, %v2870
    %2872 = vmatmul.bf16.gmra.mxu0 %v2767
    %v2873 = vpop.f32.mrf.mxu0
    %v2874 = vadd.f32 0.0, %v2873
    %v2875 = vpop.f32.mrf.mxu0
    %v2876 = vadd.f32 0.0, %v2875
    %2877 = vmatmul.bf16.gmra.mxu0 %v2768
    %v2878 = vpop.f32.mrf.mxu0
    %v2879 = vadd.f32 0.0, %v2878
    %v2880 = vpop.f32.mrf.mxu0
    %v2881 = vadd.f32 0.0, %v2880
    %2882 = vdwg.mxu0
    %v2883 = vrcp.pop %v2311
    %v2884 = vrcp.pop %v2320
    %v2885 = vrcp.pop %v2329
    %v2886 = vrcp.pop %v2338
    %v2887 = vrcp.pop %v2347
    %v2888 = vrcp.pop %v2356
    %v2889 = vrcp.pop %v2365
    %v2890 = vrcp.pop %v2374
    %v2891 = vmul.f32 %v2795, %v2883
    %v2892 = vmul.f32 %v2844, %v2884
    %v2893 = vmul.f32 %v2797, %v2883
    %v2894 = vmul.f32 %v2846, %v2884
    %v2895 = vmul.f32 %v2800, %v2883
    %v2896 = vmul.f32 %v2849, %v2884
    %v2897 = vmul.f32 %v2802, %v2883
    %v2898 = vmul.f32 %v2851, %v2884
    %v2899 = vmul.f32 %v2805, %v2885
    %v2900 = vmul.f32 %v2854, %v2886
    %v2901 = vmul.f32 %v2807, %v2885
    %v2902 = vmul.f32 %v2856, %v2886
    %v2903 = vmul.f32 %v2810, %v2885
    %v2904 = vmul.f32 %v2859, %v2886
    %v2905 = vmul.f32 %v2812, %v2885
    %v2906 = vmul.f32 %v2861, %v2886
    %v2907 = vmul.f32 %v2815, %v2887
    %v2908 = vmul.f32 %v2864, %v2888
    %v2909 = vmul.f32 %v2817, %v2887
    %v2910 = vmul.f32 %v2866, %v2888
    %v2911 = vmul.f32 %v2820, %v2887
    %v2912 = vmul.f32 %v2869, %v2888
    %v2913 = vmul.f32 %v2822, %v2887
    %v2914 = vmul.f32 %v2871, %v2888
    %v2915 = vmul.f32 %v2825, %v2889
    %v2916 = vmul.f32 %v2874, %v2890
    %v2917 = vmul.f32 %v2827, %v2889
    %v2918 = vmul.f32 %v2876, %v2890
    %v2919 = vmul.f32 %v2830, %v2889
    %v2920 = vmul.f32 %v2879, %v2890
    %v2921 = vmul.f32 %v2832, %v2889
    %v2922 = vmul.f32 %v2881, %v2890
    %v2923 = vpack.c.bf16 %v2893, %v2891
    %v2924 = vpack.c.bf16 %v2894, %v2892
    %v2925 = vpack.c.bf16 %v2897, %v2895
    %v2926 = vpack.c.bf16 %v2898, %v2896
    %v2927 = vpack.c.bf16 %v2901, %v2899
    %v2928 = vpack.c.bf16 %v2902, %v2900
    %v2929 = vpack.c.bf16 %v2905, %v2903
    %v2930 = vpack.c.bf16 %v2906, %v2904
    %v2931 = vpack.c.bf16 %v2909, %v2907
    %v2932 = vpack.c.bf16 %v2910, %v2908
    %v2933 = vpack.c.bf16 %v2913, %v2911
    %v2934 = vpack.c.bf16 %v2914, %v2912
    %v2935 = vpack.c.bf16 %v2917, %v2915
    %v2936 = vpack.c.bf16 %v2918, %v2916
    %v2937 = vpack.c.bf16 %v2921, %v2919
    %v2938 = vpack.c.bf16 %v2922, %v2920
    %2939 = vmatpush.bf16.msra.mxu0 %v2937
    %2940 = vmatpush.bf16.msra.mxu0 %v2935
    %2941 = vmatpush.bf16.msra.mxu0 %v2933
    %2942 = vmatpush.bf16.msra.mxu0 %v2931
    %2943 = vmatpush.bf16.msra.mxu0 %v2929
    %2944 = vmatpush.bf16.msra.mxu0 %v2927
    %2945 = vmatpush.bf16.msra.mxu0 %v2925
    %2946 = vmatpush.bf16.msra.mxu0 %v2923
    %2947 = vmatmul.bf16.gmra.mxu0 %v1501
    %v2948 = vpop.f32.mrf.mxu0
    %v2949 = vadd.f32 %v1448, %v2948
    %v2950 = vpop.f32.mrf.mxu0
    %v2951 = vadd.f32 %v1453, %v2950
    %2952 = vmatmul.bf16.gmra.mxu0 %v1502
    %v2953 = vpop.f32.mrf.mxu0
    %v2954 = vadd.f32 %v1458, %v2953
    %v2955 = vpop.f32.mrf.mxu0
    %v2956 = vadd.f32 %v1463, %v2955
    %2957 = vmatmul.bf16.gmra.mxu0 %v1503
    %v2958 = vpop.f32.mrf.mxu0
    %v2959 = vadd.f32 %v1468, %v2958
    %v2960 = vpop.f32.mrf.mxu0
    %v2961 = vadd.f32 %v1473, %v2960
    %2962 = vmatmul.bf16.gmra.mxu0 %v1504
    %v2963 = vpop.f32.mrf.mxu0
    %v2964 = vadd.f32 %v1478, %v2963
    %v2965 = vpop.f32.mrf.mxu0
    %v2966 = vadd.f32 %v1483, %v2965
    %2967 = vdwg.mxu0
    %2968 = vmatpush.bf16.msra.mxu0 %v2938
    %2969 = vmatpush.bf16.msra.mxu0 %v2936
    %2970 = vmatpush.bf16.msra.mxu0 %v2934
    %2971 = vmatpush.bf16.msra.mxu0 %v2932
    %2972 = vmatpush.bf16.msra.mxu0 %v2930
    %2973 = vmatpush.bf16.msra.mxu0 %v2928
    %2974 = vmatpush.bf16.msra.mxu0 %v2926
    %2975 = vmatpush.bf16.msra.mxu0 %v2924
    %2976 = vmatmul.bf16.gmra.mxu0 %v1501
    %v2977 = vpop.f32.mrf.mxu0
    %v2978 = vadd.f32 %v1448, %v2977
    %v2979 = vpop.f32.mrf.mxu0
    %v2980 = vadd.f32 %v1453, %v2979
    %2981 = vmatmul.bf16.gmra.mxu0 %v1502
    %v2982 = vpop.f32.mrf.mxu0
    %v2983 = vadd.f32 %v1458, %v2982
    %v2984 = vpop.f32.mrf.mxu0
    %v2985 = vadd.f32 %v1463, %v2984
    %2986 = vmatmul.bf16.gmra.mxu0 %v1503
    %v2987 = vpop.f32.mrf.mxu0
    %v2988 = vadd.f32 %v1468, %v2987
    %v2989 = vpop.f32.mrf.mxu0
    %v2990 = vadd.f32 %v1473, %v2989
    %2991 = vmatmul.bf16.gmra.mxu0 %v1504
    %v2992 = vpop.f32.mrf.mxu0
    %v2993 = vadd.f32 %v1478, %v2992
    %v2994 = vpop.f32.mrf.mxu0
    %v2995 = vadd.f32 %v1483, %v2994
    %2996 = vdwg.mxu0
    %v2997 = vadd.f32 %v2949, %v2978
    %v2998 = vadd.f32 %v2997, %v2951
    %v2999 = vadd.f32 %v2998, %v2980
    %v3000 = vadd.f32 %v2999, %v2954
    %v3001 = vadd.f32 %v3000, %v2983
    %v3002 = vadd.f32 %v3001, %v2956
    %v3003 = vadd.f32 %v3002, %v2985
    %v3004 = vadd.f32 %v3003, %v2959
    %v3005 = vadd.f32 %v3004, %v2988
    %v3006 = vadd.f32 %v3005, %v2961
    %v3007 = vadd.f32 %v3006, %v2990
    %v3008 = vadd.f32 %v3007, %v2964
    %v3009 = vadd.f32 %v3008, %v2993
    %v3010 = vadd.f32 %v3009, %v2966
    %v3011 = vadd.f32 %v3010, %v2995
    %3012 = vadd.xlane.f32.xlu0 %v3011
    %v3013 = vpop.xlane.xlu0 %3012
    %v3014 = vrot.slane %v3013, 4
    %v3015 = vadd.f32 %v3013, %v3014
    %v3016 = vrot.slane %v3015, 2
    %v3017 = vadd.f32 %v3015, %v3016
    %v3018 = vrot.slane %v3017, 1
    %v3019 = vadd.f32 %v3017, %v3018
    %s3020 = vtos %v3019
    %v3021 = vrcp.pop 16384.0
    %v3022 = vmul.f32 16384.0, %v3021
    %v3023 = vsub.f32 1.0, %v3022
    %v3024 = vmul.f32 %v3021, %v3023
    %v3025 = vadd.f32 %v3021, %v3024
    %vm3026 = vweird.f32 %v3021
    %v3027 = vsel %vm3026, %v3021, %v3025
    %s3028 = vtos %v3027
    %s3029 = smul.f32 %s3020, %s3028
    %v3030 = vstv %s3029
    %v3031 = vsub.f32 %v2949, %v3030
    %v3032 = vsub.f32 %v2978, %v3030
    %v3033 = vsub.f32 %v2951, %v3030
    %v3034 = vsub.f32 %v2980, %v3030
    %v3035 = vsub.f32 %v2954, %v3030
    %v3036 = vsub.f32 %v2983, %v3030
    %v3037 = vsub.f32 %v2956, %v3030
    %v3038 = vsub.f32 %v2985, %v3030
    %v3039 = vsub.f32 %v2959, %v3030
    %v3040 = vsub.f32 %v2988, %v3030
    %v3041 = vsub.f32 %v2961, %v3030
    %v3042 = vsub.f32 %v2990, %v3030
    %v3043 = vsub.f32 %v2964, %v3030
    %v3044 = vsub.f32 %v2993, %v3030
    %v3045 = vsub.f32 %v2966, %v3030
    %v3046 = vsub.f32 %v2995, %v3030
    %v3047 = vmul.f32 %v3031, %v3031
    %v3048 = vmul.f32 %v3032, %v3032
    %v3049 = vmul.f32 %v3033, %v3033
    %v3050 = vmul.f32 %v3034, %v3034
    %v3051 = vmul.f32 %v3035, %v3035
    %v3052 = vmul.f32 %v3036, %v3036
    %v3053 = vmul.f32 %v3037, %v3037
    %v3054 = vmul.f32 %v3038, %v3038
    %v3055 = vmul.f32 %v3039, %v3039
    %v3056 = vmul.f32 %v3040, %v3040
    %v3057 = vmul.f32 %v3041, %v3041
    %v3058 = vmul.f32 %v3042, %v3042
    %v3059 = vmul.f32 %v3043, %v3043
    %v3060 = vmul.f32 %v3044, %v3044
    %v3061 = vmul.f32 %v3045, %v3045
    %v3062 = vmul.f32 %v3046, %v3046
    %v3063 = vadd.f32 %v3047, %v3048
    %v3064 = vadd.f32 %v3063, %v3049
    %v3065 = vadd.f32 %v3064, %v3050
    %v3066 = vadd.f32 %v3065, %v3051
    %v3067 = vadd.f32 %v3066, %v3052
    %v3068 = vadd.f32 %v3067, %v3053
    %v3069 = vadd.f32 %v3068, %v3054
    %v3070 = vadd.f32 %v3069, %v3055
    %v3071 = vadd.f32 %v3070, %v3056
    %v3072 = vadd.f32 %v3071, %v3057
    %v3073 = vadd.f32 %v3072, %v3058
    %v3074 = vadd.f32 %v3073, %v3059
    %v3075 = vadd.f32 %v3074, %v3060
    %v3076 = vadd.f32 %v3075, %v3061
    %v3077 = vadd.f32 %v3076, %v3062
    %3078 = vadd.xlane.f32.xlu0 %v3077
    %v3079 = vpop.xlane.xlu0 %3078
    %v3080 = vrot.slane %v3079, 4
    %v3081 = vadd.f32 %v3079, %v3080
    %v3082 = vrot.slane %v3081, 2
    %v3083 = vadd.f32 %v3081, %v3082
    %v3084 = vrot.slane %v3083, 1
    %v3085 = vadd.f32 %v3083, %v3084
    %s3086 = vtos %v3085
    %v3087 = vrcp.pop 16384.0
    %v3088 = vmul.f32 16384.0, %v3087
    %v3089 = vsub.f32 1.0, %v3088
    %v3090 = vmul.f32 %v3087, %v3089
    %v3091 = vadd.f32 %v3087, %v3090
    %vm3092 = vweird.f32 %v3087
    %v3093 = vsel %vm3092, %v3087, %v3091
    %s3094 = vtos %v3093
    %s3095 = smul.f32 %s3086, %s3094
    %s3096 = sadd.f32 %s3095, 1e-05
    %v3097 = vstv %s3096
    %v3098 = vrsqrt.pop %v3097
    %v3099 = vmul.f32 %v3098, %v3097
    %v3100 = vmul.f32 %v3099, %v3098
    %v3101 = vmul.f32 0.5, %v3100
    %v3102 = vsub.f32 1.5, %v3101
    %v3103 = vmul.f32 %v3098, %v3102
    %vm3104 = vweird.f32 %v3097
    %vm3105 = vweird.f32 %v3098
    %vm3106 = vmor %vm3104, %vm3105
    %v3107 = vsel %vm3106, %v3098, %v3103
    %s3108 = vtos %v3107
    %v3109 = vstv %s3108
    %v3110 = vmul.f32 %v98, %v3109
    %v3111 = vmul.f32 %v99, %v3109
    %v3112 = vmul.f32 %v100, %v3109
    %v3113 = vmul.f32 %v101, %v3109
    %v3114 = vmul.f32 %v102, %v3109
    %v3115 = vmul.f32 %v103, %v3109
    %v3116 = vmul.f32 %v104, %v3109
    %v3117 = vmul.f32 %v105, %v3109
    %3119 = vset.pattern.permute.xlu0 0
    %3120 = vperm.xlu0 %3119, %v3110
    %v3121 = vpop.permute.xlu0 %3120
    %3124 = vset.pattern.permute.xlu0 0
    %3125 = vperm.xlu0 %3124, %v3111
    %v3126 = vpop.permute.xlu0 %3125
    %3129 = vset.pattern.permute.xlu0 0
    %3130 = vperm.xlu0 %3129, %v3112
    %v3131 = vpop.permute.xlu0 %3130
    %3134 = vset.pattern.permute.xlu0 0
    %3135 = vperm.xlu0 %3134, %v3113
    %v3136 = vpop.permute.xlu0 %3135
    %3139 = vset.pattern.permute.xlu0 0
    %3140 = vperm.xlu0 %3139, %v3114
    %v3141 = vpop.permute.xlu0 %3140
    %3144 = vset.pattern.permute.xlu0 0
    %3145 = vperm.xlu0 %3144, %v3115
    %v3146 = vpop.permute.xlu0 %3145
    %3149 = vset.pattern.permute.xlu0 0
    %3150 = vperm.xlu0 %3149, %v3116
    %v3151 = vpop.permute.xlu0 %3150
    %3154 = vset.pattern.permute.xlu0 0
    %3155 = vperm.xlu0 %3154, %v3117
    %v3156 = vpop.permute.xlu0 %3155
    %v3158 = vmul.f32 %v3031, %v3121
    %v3159 = vmul.f32 %v3032, %v3121
    %v3160 = vmul.f32 %v3033, %v3126
    %v3161 = vmul.f32 %v3034, %v3126
    %v3162 = vmul.f32 %v3035, %v3131
    %v3163 = vmul.f32 %v3036, %v3131
    %v3164 = vmul.f32 %v3037, %v3136
    %v3165 = vmul.f32 %v3038, %v3136
    %v3166 = vmul.f32 %v3039, %v3141
    %v3167 = vmul.f32 %v3040, %v3141
    %v3168 = vmul.f32 %v3041, %v3146
    %v3169 = vmul.f32 %v3042, %v3146
    %v3170 = vmul.f32 %v3043, %v3151
    %v3171 = vmul.f32 %v3044, %v3151
    %v3172 = vmul.f32 %v3045, %v3156
    %v3173 = vmul.f32 %v3046, %v3156
    %v3174 = vadd.f32 %v3158, %v1747
    %v3175 = vadd.f32 %v3159, %v1747
    %v3176 = vadd.f32 %v3160, %v1752
    %v3177 = vadd.f32 %v3161, %v1752
    %v3178 = vadd.f32 %v3162, %v1757
    %v3179 = vadd.f32 %v3163, %v1757
    %v3180 = vadd.f32 %v3164, %v1762
    %v3181 = vadd.f32 %v3165, %v1762
    %v3182 = vadd.f32 %v3166, %v1767
    %v3183 = vadd.f32 %v3167, %v1767
    %v3184 = vadd.f32 %v3168, %v1772
    %v3185 = vadd.f32 %v3169, %v1772
    %v3186 = vadd.f32 %v3170, %v1777
    %v3187 = vadd.f32 %v3171, %v1777
    %v3188 = vadd.f32 %v3172, %v1782
    %v3189 = vadd.f32 %v3173, %v1782
    %s3190 = scalar_lea.vmem [#allocation2], 128
    %3191 = vst [vmem:[%s3190] sm:$0xff] %v3174
    %3192 = vst [vmem:[%s3190 + $0x8] sm:$0xff] %v3175
    %3193 = vst [vmem:[%s3190 + $0x10] sm:$0xff] %v3176
    %3194 = vst [vmem:[%s3190 + $0x18] sm:$0xff] %v3177
    %3195 = vst [vmem:[%s3190 + $0x20] sm:$0xff] %v3178
    %3196 = vst [vmem:[%s3190 + $0x28] sm:$0xff] %v3179
    %3197 = vst [vmem:[%s3190 + $0x30] sm:$0xff] %v3180
    %3198 = vst [vmem:[%s3190 + $0x38] sm:$0xff] %v3181
    %3199 = vst [vmem:[%s3190 + $0x40] sm:$0xff] %v3182
    %3200 = vst [vmem:[%s3190 + $0x48] sm:$0xff] %v3183
    %3201 = vst [vmem:[%s3190 + $0x50] sm:$0xff] %v3184
    %3202 = vst [vmem:[%s3190 + $0x58] sm:$0xff] %v3185
    %3203 = vst [vmem:[%s3190 + $0x60] sm:$0xff] %v3186
    %3204 = vst [vmem:[%s3190 + $0x68] sm:$0xff] %v3187
    %3205 = vst [vmem:[%s3190 + $0x70] sm:$0xff] %v3188
    %3206 = vst [vmem:[%s3190 + $0x78] sm:$0xff] %v3189
    // Predicated region
    $region38: #{tpu_custom_call.1} parent=1 // pred_check
      _
    $region39: #{tpu_custom_call.1} parent=1 // pred_check_branch
      %3208 = sbr.rel (0) target = $region41
    $region40: #{tpu_custom_call.1} parent=1 // pred_region
      %3210 = vsyncadd [#allocation3], 0
      %s3211 = sshll.u32 [#allocation2], 4
      %s3212 = int_to_ptr.vmem [resolvable:$true] %s3211
      %s3213 = sshll.u32 %s9, 4
      %s3214 = int_to_ptr.hbm [resolvable:$true] %s3213
      %3219 = dma.vmem_to_hbm [thread:$0]  %s3212, 4096, %s3214, [#allocation3], 256, 256, 16
    $region41: #{tpu_custom_call.1} parent=1 // pred_fallthru
      _
    // Predicated region
    $region42: #{tpu_custom_call.1} parent=1 // pred_check
      _
    $region43: #{tpu_custom_call.1} parent=1 // pred_check_branch
      %3221 = sbr.rel (0) target = $region45
    $region44: #{tpu_custom_call.1} parent=1 // pred_region
      %3223 = dma.done [#allocation3], 4096
    $region45: #{tpu_custom_call.1} parent=1 // pred_fallthru
      _
    %3224 = vsyncpa [#allocation3], 1

</llo_original>
